<compile_context>
chip_gen: v6e
topology: v6e:2x2x1
jax: 0.10.0
libtpu: 0.0.40
codegen_flags: <defaults>
</compile_context>

<pallas_src>
import jax
import jax.numpy as jnp
from jax import lax
from jax.experimental import pallas as pl
from jax.experimental.pallas import tpu as pltpu

IN_FEATURES = 10
OUT_FEATURES = 1
GROUP = 128                    # rows packed per lane group (TPU lane width)
TB_MAX = 256                   # row-groups per tile -> up to 32768 rows/tile
VMEM_LIMIT_BYTES = 32 * 1024 * 1024


def _round_up(n, m):
    return ((n + m - 1) // m) * m


def _linear_kernel(x_ref, w2_ref, b_ref, o_ref):
    # x_ref : [tb, GROUP*IN_FEATURES]  lane-dense packed rows
    # w2_ref: [GROUP*IN_FEATURES, GROUP] block-diagonal replication of w
    # b_ref : [1] scalar bias in SMEM
    # o_ref : [tb, GROUP] lane-dense output; row b*GROUP+l lives at (b, l)
    acc = jnp.dot(
        x_ref[...],
        w2_ref[...],
        preferred_element_type=jnp.float32,
        precision=lax.Precision.HIGHEST,
    )
    o_ref[...] = acc + b_ref[0]


def pallas_linear(x, weight, bias):
    """x: [..., IN_FEATURES]; weight: [OUT_FEATURES, IN_FEATURES]; bias: [OUT_FEATURES]."""
    x = x.astype(jnp.float32)
    weight = weight.astype(jnp.float32)
    bias = bias.astype(jnp.float32)

    lead = x.shape[:-1]
    x2d = x.reshape(-1, IN_FEATURES)
    B = x2d.shape[0]

    # Pad only to a multiple of 128 rows (needed for the lane-group packing).
    Bp = _round_up(max(B, 1), GROUP)
    if Bp != B:
        x2d = jnp.pad(x2d, ((0, Bp - B), (0, 0)))
    R = Bp // GROUP
    # Free contiguous reshape: row-group r holds rows r*128 .. r*128+127.
    xg = x2d.reshape(R, GROUP * IN_FEATURES)

    # Block-diagonal weight slab: w2[l*IN_FEATURES + f, l] = w[f].
    w_row = weight.reshape(IN_FEATURES)
    eye = jnp.eye(GROUP, dtype=jnp.float32)
    w2 = (eye[:, None, :] * w_row[None, :, None]).reshape(
        GROUP * IN_FEATURES, GROUP
    )

    # Tile selection: big tiles to amortize per-step overhead, >=2 grid steps
    # when possible (v7x megacore), tb multiple of 8 unless it spans the
    # full extent.
    if R <= 8:
        tb = R
    elif R <= 2 * TB_MAX:
        tb = _round_up(pl.cdiv(R, 2), 8)
    else:
        tb = TB_MAX
    grid = pl.cdiv(R, tb)
    Rp = grid * tb  # output padded so output writes are never OOB

    out = pl.pallas_call(
        _linear_kernel,
        out_shape=jax.ShapeDtypeStruct((Rp, GROUP), jnp.float32),
        grid=(grid,),
        in_specs=[
            pl.BlockSpec((tb, GROUP * IN_FEATURES), lambda i: (i, 0)),
            pl.BlockSpec((GROUP * IN_FEATURES, GROUP), lambda i: (0, 0)),
            pl.BlockSpec(memory_space=pltpu.MemorySpace.SMEM),
        ],
        out_specs=pl.BlockSpec((tb, GROUP), lambda i: (i, 0)),
        compiler_params=pltpu.CompilerParams(
            dimension_semantics=("parallel",),
            vmem_limit_bytes=VMEM_LIMIT_BYTES,
        ),
    )(xg, w2, bias)

    y = out.reshape(Rp * GROUP)[:B]
    return y.reshape(*lead, OUT_FEATURES)


def simple_model_forward(params, inputs):
    """Mirrors SimpleModel.forward: {'data': x} -> {'output': linear(x)}."""
    x = inputs["data"]
    return {"output": pallas_linear(x, params["weight"], params["bias"])}


def init_params(key):
    # torch.nn.Linear default init: U(-1/sqrt(in), 1/sqrt(in)).
    kw, kb = jax.random.split(key)
    bound = 1.0 / jnp.sqrt(jnp.float32(IN_FEATURES))
    weight = jax.random.uniform(
        kw, (OUT_FEATURES, IN_FEATURES), jnp.float32, -bound, bound
    )
    bias = jax.random.uniform(kb, (OUT_FEATURES,), jnp.float32, -bound, bound)
    return {"weight": weight, "bias": bias}


if __name__ == "__main__":
    key = jax.random.PRNGKey(0)
    k_param, k_small, k_big = jax.random.split(key, 3)

    params = init_params(k_param)

    def ref(x):
        return x @ params["weight"].T + params["bias"]

    # Tiny batch: single block, exercises the pad-to-128 path.
    x_small = jax.random.normal(k_small, (8, IN_FEATURES), jnp.float32)
    y_small = jax.block_until_ready(
        simple_model_forward(params, {"data": x_small})["output"]
    )
    assert y_small.shape == (8, OUT_FEATURES), y_small.shape
    assert jnp.allclose(y_small, ref(x_small), atol=1e-5, rtol=1e-5)

    # Larger batch (still small): non-multiple of 128, 2-step grid with a
    # ragged last block.
    x_big = jax.random.normal(k_big, (1100, IN_FEATURES), jnp.float32)
    y_big = jax.block_until_ready(
        simple_model_forward(params, {"data": x_big})["output"]
    )
    assert y_big.shape == (1100, OUT_FEATURES), y_big.shape
    assert jnp.allclose(y_big, ref(x_big), atol=1e-5, rtol=1e-5)

    print("KERNEL_OK")
</pallas_src>

<mosaic_0001>
module attributes {stable_mosaic.version = 11 : i64} {
  func.func @_linear_kernel(%arg0: i32, %arg1: memref<1x1280xf32, #tpu.memory_space<vmem>>, %arg2: memref<1280x128xf32, #tpu.memory_space<vmem>>, %arg3: memref<1xf32, #tpu.memory_space<smem>>, %arg4: memref<1x128xf32, #tpu.memory_space<vmem>>) attributes {dimension_semantics = [#tpu.dimension_semantics<parallel>], iteration_bounds = array<i64: 1>, scalar_prefetch = 0 : i64, scratch_operands = 0 : i64, tpu.core_type = #tpu.core_type<tc>, window_params = [{transform_indices = @transform_0, window_bounds = array<i64: 1, 1280>}, {pipeline_mode = #tpu.pipeline_mode<synchronous>, transform_indices = @transform_1, window_bounds = array<i64: 1280, 128>}, {transform_indices = @transform_2, window_bounds = array<i64: 1>}, {transform_indices = @transform_3, window_bounds = array<i64: 1, 128>}]} {
    %c0 = arith.constant 0 : index
    %c0_0 = arith.constant 0 : index
    %0 = vector.load %arg1[%c0, %c0_0] : memref<1x1280xf32, #tpu.memory_space<vmem>>, vector<1x1280xf32>
    %c0_1 = arith.constant 0 : index
    %c0_2 = arith.constant 0 : index
    %1 = vector.load %arg2[%c0_1, %c0_2] : memref<1280x128xf32, #tpu.memory_space<vmem>>, vector<1280x128xf32>
    %cst = arith.constant dense<0.000000e+00> : vector<1x128xf32>
    %2 = tpu.matmul %0, %1, %cst {dimension_numbers = #tpu.dot_dimension_numbers<[1], [0], [0], [1], [0, 0, 1, 1], [], []>, precision = #tpu.contract_precision<fp32>} : vector<1x1280xf32>, vector<1280x128xf32>, vector<1x128xf32> -> vector<1x128xf32>
    %c0_3 = arith.constant 0 : index
    %3 = memref.load %arg3[%c0_3] : memref<1xf32, #tpu.memory_space<smem>>
    %4 = vector.broadcast %3 : f32 to vector<1x128xf32>
    %5 = arith.addf %2, %4 : vector<1x128xf32>
    %c0_4 = arith.constant 0 : index
    %c0_5 = arith.constant 0 : index
    %6 = vector.load %arg4[%c0_4, %c0_5] : memref<1x128xf32, #tpu.memory_space<vmem>>, vector<1x128xf32>
    tpu.vector_store %arg4[%c0_4, %c0_5], %5 {strides = array<i32>} : memref<1x128xf32, #tpu.memory_space<vmem>>, vector<1x128xf32>,
    return
  }
  func.func @transform_0(%arg0: i32) -> (i32, i32) {
    %c0_i32 = arith.constant 0 : i32
    %c0_i32_0 = arith.constant 0 : i32
    return %arg0, %c0_i32 : i32, i32
  }
  func.func @transform_1(%arg0: i32) -> (i32, i32) {
    %c0_i32 = arith.constant 0 : i32
    %c0_i32_0 = arith.constant 0 : i32
    %c0_i32_1 = arith.constant 0 : i32
    return %c0_i32, %c0_i32_0 : i32, i32
  }
  func.func @transform_2(%arg0: i32) -> i32 {
    %c0_i32 = arith.constant 0 : i32
    %c0_i32_0 = arith.constant 0 : i32
    return %c0_i32 : i32
  }
  func.func @transform_3(%arg0: i32) -> (i32, i32) {
    %c0_i32 = arith.constant 0 : i32
    %c0_i32_0 = arith.constant 0 : i32
    return %arg0, %c0_i32 : i32, i32
  }
}

</mosaic_0001>

<llo_original>
// kernel: tpu_custom_call.1
$region0: #{tpu_custom_call.1}
  #allocation0 [shape = 'u32[]', space=smem, size = 0x4, offset = 0x4, fixed_abs, tag = 'smem constant byte address 0x4 - core index']
  #allocation1 [shape = 'u32[144,128]{1,0:T(1,128)}', space=vmem, size = 0x12000, scoped, tag = 'internal scratch']
  #allocation2 [shape = 'f32[1]{0:T(128)S(6)}', space=smem, size = 0x200, scoped, tag = 'scoped memory for tpu_custom_call.1']
  %s0 = inlined_call_operand.hbm [shape: f32[1,1280], index: 0, kind: input, shape index: {}]
  %s1 = inlined_call_operand.hbm [shape: f32[1280,128], index: 1, kind: input, shape index: {}]
  %s2 = inlined_call_operand.<no memory space> [shape: f32[1], index: 2, kind: input, shape index: {}]
  %s3 = inlined_call_operand.hbm [shape: f32[1,128], index: 3, kind: output, shape index: {}]
  %s4 = sld [smem:[#allocation0]]
  $region30: #{tpu_custom_call.1} parent=0
    _
  %s6 = ssub.s32 1, %s4
  %s7 = scalar_select 0, %s6, %s4
  %8 = sst [smem:[#allocation2]] %s2
  $region1: #{tpu_custom_call.1} parent=0
    #allocation3 [shape = 'u8[5120]{0}', space=vmem, size = 0x1400, scoped, tag = 'input window, operand 0, single buffered']
    #allocation4 [shape = 's32[1]{0}', space=sflag, size = 0x4, scoped, tag = 'scoped memory for tpu_custom_call.1']
    #allocation5 [shape = 's32[1]{0}', space=sflag, size = 0x4, scoped, tag = 'scoped memory for tpu_custom_call.1']
    #allocation6 [shape = 'u8[655360]{0}', space=vmem, size = 0xa0000, scoped, tag = 'input window, operand 1, single buffered']
    #allocation7 [shape = 's32[1]{0}', space=sflag, size = 0x4, scoped, tag = 'scoped memory for tpu_custom_call.1']
    #allocation8 [shape = 'u8[512]{0}', space=vmem, size = 0x400, scoped, tag = 'output window, operand 0, single buffered']
    %9 = vsyncpa [#allocation4], 0
    %10 = vsyncpa [#allocation7], 0
    %11 = vsyncpa [#allocation5], 0
    // Predicated region
    $region2: #{tpu_custom_call.1} parent=1 // pred_check
      _
    $region3: #{tpu_custom_call.1} parent=1 // pred_check_branch
      %13 = sbr.rel (0) target = $region5
    $region4: #{tpu_custom_call.1} parent=1 // pred_region
      %s15 = ssub.s32 160, 160
      %16 = vsyncadd [#allocation4], %s15
      %s18 = sshll.u32 [#allocation3], 4
      %s19 = int_to_ptr.vmem [resolvable:$true] %s18
      %21 = dma.hbm_to_vmem [thread:$0]  %s0, 160, %s19, [#allocation4]
    $region5: #{tpu_custom_call.1} parent=1 // pred_fallthru
      _
    // Predicated region
    $region6: #{tpu_custom_call.1} parent=1 // pred_check
      _
    $region7: #{tpu_custom_call.1} parent=1 // pred_check_branch
      %23 = sbr.rel (0) target = $region9
    $region8: #{tpu_custom_call.1} parent=1 // pred_region
      %s25 = ssub.s32 20480, 20480
      %26 = vsyncadd [#allocation7], %s25
      %s27 = sshll.u32 [#allocation6], 4
      %s28 = int_to_ptr.vmem [resolvable:$true] %s27
      %33 = dma.hbm_to_vmem [thread:$0]  %s1, 20480, %s28, [#allocation7], 128, 128, 8
    $region9: #{tpu_custom_call.1} parent=1 // pred_fallthru
      _
    // Predicated region
    $region10: #{tpu_custom_call.1} parent=1 // pred_check
      _
    $region11: #{tpu_custom_call.1} parent=1 // pred_check_branch
      %35 = sbr.rel (0) target = $region13
    $region12: #{tpu_custom_call.1} parent=1 // pred_region
      _
    $region13: #{tpu_custom_call.1} parent=1 // pred_fallthru
      _
    // Predicated region
    $region14: #{tpu_custom_call.1} parent=1 // pred_check
      _
    $region15: #{tpu_custom_call.1} parent=1 // pred_check_branch
      %37 = sbr.rel (0) target = $region17
    $region16: #{tpu_custom_call.1} parent=1 // pred_region
      %38 = dma.done [#allocation4], 160
    $region17: #{tpu_custom_call.1} parent=1 // pred_fallthru
      _
    // Predicated region
    $region18: #{tpu_custom_call.1} parent=1 // pred_check
      _
    $region19: #{tpu_custom_call.1} parent=1 // pred_check_branch
      %40 = sbr.rel (0) target = $region21
    $region20: #{tpu_custom_call.1} parent=1 // pred_region
      %41 = dma.done [#allocation7], 20480
    $region21: #{tpu_custom_call.1} parent=1 // pred_fallthru
      _
    %v42 = vld [vmem:[#allocation3] sm:$0xff]
    %v43 = vld [vmem:[#allocation3 + $0x8] sm:$0x3]
    %v44 = vld [vmem:[#allocation6] sm:$0xff]
    %v45 = vld [vmem:[#allocation6 + $0x8] sm:$0xff]
    %v46 = vld [vmem:[#allocation6 + $0x10] sm:$0xff]
    %v47 = vld [vmem:[#allocation6 + $0x18] sm:$0xff]
    %v48 = vld [vmem:[#allocation6 + $0x20] sm:$0xff]
    %v49 = vld [vmem:[#allocation6 + $0x28] sm:$0xff]
    %v50 = vld [vmem:[#allocation6 + $0x30] sm:$0xff]
    %v51 = vld [vmem:[#allocation6 + $0x38] sm:$0xff]
    %v52 = vld [vmem:[#allocation6 + $0x40] sm:$0xff]
    %v53 = vld [vmem:[#allocation6 + $0x48] sm:$0xff]
    %v54 = vld [vmem:[#allocation6 + $0x50] sm:$0xff]
    %v55 = vld [vmem:[#allocation6 + $0x58] sm:$0xff]
    %v56 = vld [vmem:[#allocation6 + $0x60] sm:$0xff]
    %v57 = vld [vmem:[#allocation6 + $0x68] sm:$0xff]
    %v58 = vld [vmem:[#allocation6 + $0x70] sm:$0xff]
    %v59 = vld [vmem:[#allocation6 + $0x78] sm:$0xff]
    %v60 = vld [vmem:[#allocation6 + $0x80] sm:$0xff]
    %v61 = vld [vmem:[#allocation6 + $0x88] sm:$0xff]
    %v62 = vld [vmem:[#allocation6 + $0x90] sm:$0xff]
    %v63 = vld [vmem:[#allocation6 + $0x98] sm:$0xff]
    %v64 = vld [vmem:[#allocation6 + $0xa0] sm:$0xff]
    %v65 = vld [vmem:[#allocation6 + $0xa8] sm:$0xff]
    %v66 = vld [vmem:[#allocation6 + $0xb0] sm:$0xff]
    %v67 = vld [vmem:[#allocation6 + $0xb8] sm:$0xff]
    %v68 = vld [vmem:[#allocation6 + $0xc0] sm:$0xff]
    %v69 = vld [vmem:[#allocation6 + $0xc8] sm:$0xff]
    %v70 = vld [vmem:[#allocation6 + $0xd0] sm:$0xff]
    %v71 = vld [vmem:[#allocation6 + $0xd8] sm:$0xff]
    %v72 = vld [vmem:[#allocation6 + $0xe0] sm:$0xff]
    %v73 = vld [vmem:[#allocation6 + $0xe8] sm:$0xff]
    %v74 = vld [vmem:[#allocation6 + $0xf0] sm:$0xff]
    %v75 = vld [vmem:[#allocation6 + $0xf8] sm:$0xff]
    %v76 = vld [vmem:[#allocation6 + $0x100] sm:$0xff]
    %v77 = vld [vmem:[#allocation6 + $0x108] sm:$0xff]
    %v78 = vld [vmem:[#allocation6 + $0x110] sm:$0xff]
    %v79 = vld [vmem:[#allocation6 + $0x118] sm:$0xff]
    %v80 = vld [vmem:[#allocation6 + $0x120] sm:$0xff]
    %v81 = vld [vmem:[#allocation6 + $0x128] sm:$0xff]
    %v82 = vld [vmem:[#allocation6 + $0x130] sm:$0xff]
    %v83 = vld [vmem:[#allocation6 + $0x138] sm:$0xff]
    %v84 = vld [vmem:[#allocation6 + $0x140] sm:$0xff]
    %v85 = vld [vmem:[#allocation6 + $0x148] sm:$0xff]
    %v86 = vld [vmem:[#allocation6 + $0x150] sm:$0xff]
    %v87 = vld [vmem:[#allocation6 + $0x158] sm:$0xff]
    %v88 = vld [vmem:[#allocation6 + $0x160] sm:$0xff]
    %v89 = vld [vmem:[#allocation6 + $0x168] sm:$0xff]
    %v90 = vld [vmem:[#allocation6 + $0x170] sm:$0xff]
    %v91 = vld [vmem:[#allocation6 + $0x178] sm:$0xff]
    %v92 = vld [vmem:[#allocation6 + $0x180] sm:$0xff]
    %v93 = vld [vmem:[#allocation6 + $0x188] sm:$0xff]
    %v94 = vld [vmem:[#allocation6 + $0x190] sm:$0xff]
    %v95 = vld [vmem:[#allocation6 + $0x198] sm:$0xff]
    %v96 = vld [vmem:[#allocation6 + $0x1a0] sm:$0xff]
    %v97 = vld [vmem:[#allocation6 + $0x1a8] sm:$0xff]
    %v98 = vld [vmem:[#allocation6 + $0x1b0] sm:$0xff]
    %v99 = vld [vmem:[#allocation6 + $0x1b8] sm:$0xff]
    %v100 = vld [vmem:[#allocation6 + $0x1c0] sm:$0xff]
    %v101 = vld [vmem:[#allocation6 + $0x1c8] sm:$0xff]
    %v102 = vld [vmem:[#allocation6 + $0x1d0] sm:$0xff]
    %v103 = vld [vmem:[#allocation6 + $0x1d8] sm:$0xff]
    %v104 = vld [vmem:[#allocation6 + $0x1e0] sm:$0xff]
    %v105 = vld [vmem:[#allocation6 + $0x1e8] sm:$0xff]
    %v106 = vld [vmem:[#allocation6 + $0x1f0] sm:$0xff]
    %v107 = vld [vmem:[#allocation6 + $0x1f8] sm:$0xff]
    %v108 = vld [vmem:[#allocation6 + $0x200] sm:$0xff]
    %v109 = vld [vmem:[#allocation6 + $0x208] sm:$0xff]
    %v110 = vld [vmem:[#allocation6 + $0x210] sm:$0xff]
    %v111 = vld [vmem:[#allocation6 + $0x218] sm:$0xff]
    %v112 = vld [vmem:[#allocation6 + $0x220] sm:$0xff]
    %v113 = vld [vmem:[#allocation6 + $0x228] sm:$0xff]
    %v114 = vld [vmem:[#allocation6 + $0x230] sm:$0xff]
    %v115 = vld [vmem:[#allocation6 + $0x238] sm:$0xff]
    %v116 = vld [vmem:[#allocation6 + $0x240] sm:$0xff]
    %v117 = vld [vmem:[#allocation6 + $0x248] sm:$0xff]
    %v118 = vld [vmem:[#allocation6 + $0x250] sm:$0xff]
    %v119 = vld [vmem:[#allocation6 + $0x258] sm:$0xff]
    %v120 = vld [vmem:[#allocation6 + $0x260] sm:$0xff]
    %v121 = vld [vmem:[#allocation6 + $0x268] sm:$0xff]
    %v122 = vld [vmem:[#allocation6 + $0x270] sm:$0xff]
    %v123 = vld [vmem:[#allocation6 + $0x278] sm:$0xff]
    %v124 = vld [vmem:[#allocation6 + $0x280] sm:$0xff]
    %v125 = vld [vmem:[#allocation6 + $0x288] sm:$0xff]
    %v126 = vld [vmem:[#allocation6 + $0x290] sm:$0xff]
    %v127 = vld [vmem:[#allocation6 + $0x298] sm:$0xff]
    %v128 = vld [vmem:[#allocation6 + $0x2a0] sm:$0xff]
    %v129 = vld [vmem:[#allocation6 + $0x2a8] sm:$0xff]
    %v130 = vld [vmem:[#allocation6 + $0x2b0] sm:$0xff]
    %v131 = vld [vmem:[#allocation6 + $0x2b8] sm:$0xff]
    %v132 = vld [vmem:[#allocation6 + $0x2c0] sm:$0xff]
    %v133 = vld [vmem:[#allocation6 + $0x2c8] sm:$0xff]
    %v134 = vld [vmem:[#allocation6 + $0x2d0] sm:$0xff]
    %v135 = vld [vmem:[#allocation6 + $0x2d8] sm:$0xff]
    %v136 = vld [vmem:[#allocation6 + $0x2e0] sm:$0xff]
    %v137 = vld [vmem:[#allocation6 + $0x2e8] sm:$0xff]
    %v138 = vld [vmem:[#allocation6 + $0x2f0] sm:$0xff]
    %v139 = vld [vmem:[#allocation6 + $0x2f8] sm:$0xff]
    %v140 = vld [vmem:[#allocation6 + $0x300] sm:$0xff]
    %v141 = vld [vmem:[#allocation6 + $0x308] sm:$0xff]
    %v142 = vld [vmem:[#allocation6 + $0x310] sm:$0xff]
    %v143 = vld [vmem:[#allocation6 + $0x318] sm:$0xff]
    %v144 = vld [vmem:[#allocation6 + $0x320] sm:$0xff]
    %v145 = vld [vmem:[#allocation6 + $0x328] sm:$0xff]
    %v146 = vld [vmem:[#allocation6 + $0x330] sm:$0xff]
    %v147 = vld [vmem:[#allocation6 + $0x338] sm:$0xff]
    %v148 = vld [vmem:[#allocation6 + $0x340] sm:$0xff]
    %v149 = vld [vmem:[#allocation6 + $0x348] sm:$0xff]
    %v150 = vld [vmem:[#allocation6 + $0x350] sm:$0xff]
    %v151 = vld [vmem:[#allocation6 + $0x358] sm:$0xff]
    %v152 = vld [vmem:[#allocation6 + $0x360] sm:$0xff]
    %v153 = vld [vmem:[#allocation6 + $0x368] sm:$0xff]
    %v154 = vld [vmem:[#allocation6 + $0x370] sm:$0xff]
    %v155 = vld [vmem:[#allocation6 + $0x378] sm:$0xff]
    %v156 = vld [vmem:[#allocation6 + $0x380] sm:$0xff]
    %v157 = vld [vmem:[#allocation6 + $0x388] sm:$0xff]
    %v158 = vld [vmem:[#allocation6 + $0x390] sm:$0xff]
    %v159 = vld [vmem:[#allocation6 + $0x398] sm:$0xff]
    %v160 = vld [vmem:[#allocation6 + $0x3a0] sm:$0xff]
    %v161 = vld [vmem:[#allocation6 + $0x3a8] sm:$0xff]
    %v162 = vld [vmem:[#allocation6 + $0x3b0] sm:$0xff]
    %v163 = vld [vmem:[#allocation6 + $0x3b8] sm:$0xff]
    %v164 = vld [vmem:[#allocation6 + $0x3c0] sm:$0xff]
    %v165 = vld [vmem:[#allocation6 + $0x3c8] sm:$0xff]
    %v166 = vld [vmem:[#allocation6 + $0x3d0] sm:$0xff]
    %v167 = vld [vmem:[#allocation6 + $0x3d8] sm:$0xff]
    %v168 = vld [vmem:[#allocation6 + $0x3e0] sm:$0xff]
    %v169 = vld [vmem:[#allocation6 + $0x3e8] sm:$0xff]
    %v170 = vld [vmem:[#allocation6 + $0x3f0] sm:$0xff]
    %v171 = vld [vmem:[#allocation6 + $0x3f8] sm:$0xff]
    %v172 = vld [vmem:[#allocation6 + $0x400] sm:$0xff]
    %v173 = vld [vmem:[#allocation6 + $0x408] sm:$0xff]
    %v174 = vld [vmem:[#allocation6 + $0x410] sm:$0xff]
    %v175 = vld [vmem:[#allocation6 + $0x418] sm:$0xff]
    %v176 = vld [vmem:[#allocation6 + $0x420] sm:$0xff]
    %v177 = vld [vmem:[#allocation6 + $0x428] sm:$0xff]
    %v178 = vld [vmem:[#allocation6 + $0x430] sm:$0xff]
    %v179 = vld [vmem:[#allocation6 + $0x438] sm:$0xff]
    %v180 = vld [vmem:[#allocation6 + $0x440] sm:$0xff]
    %v181 = vld [vmem:[#allocation6 + $0x448] sm:$0xff]
    %v182 = vld [vmem:[#allocation6 + $0x450] sm:$0xff]
    %v183 = vld [vmem:[#allocation6 + $0x458] sm:$0xff]
    %v184 = vld [vmem:[#allocation6 + $0x460] sm:$0xff]
    %v185 = vld [vmem:[#allocation6 + $0x468] sm:$0xff]
    %v186 = vld [vmem:[#allocation6 + $0x470] sm:$0xff]
    %v187 = vld [vmem:[#allocation6 + $0x478] sm:$0xff]
    %v188 = vld [vmem:[#allocation6 + $0x480] sm:$0xff]
    %v189 = vld [vmem:[#allocation6 + $0x488] sm:$0xff]
    %v190 = vld [vmem:[#allocation6 + $0x490] sm:$0xff]
    %v191 = vld [vmem:[#allocation6 + $0x498] sm:$0xff]
    %v192 = vld [vmem:[#allocation6 + $0x4a0] sm:$0xff]
    %v193 = vld [vmem:[#allocation6 + $0x4a8] sm:$0xff]
    %v194 = vld [vmem:[#allocation6 + $0x4b0] sm:$0xff]
    %v195 = vld [vmem:[#allocation6 + $0x4b8] sm:$0xff]
    %v196 = vld [vmem:[#allocation6 + $0x4c0] sm:$0xff]
    %v197 = vld [vmem:[#allocation6 + $0x4c8] sm:$0xff]
    %v198 = vld [vmem:[#allocation6 + $0x4d0] sm:$0xff]
    %v199 = vld [vmem:[#allocation6 + $0x4d8] sm:$0xff]
    %v200 = vld [vmem:[#allocation6 + $0x4e0] sm:$0xff]
    %v201 = vld [vmem:[#allocation6 + $0x4e8] sm:$0xff]
    %v202 = vld [vmem:[#allocation6 + $0x4f0] sm:$0xff]
    %v203 = vld [vmem:[#allocation6 + $0x4f8] sm:$0xff]
    %s204 = sld [smem:[#allocation2]]
    %v205 = vstv %s204
    %v208 = vlaneseq
    %v209 = vshrl.u32 %v208, 7
    %v210 = vsub.s32 0, %v209
    %v211 = vrot.slane %v42, %v210
    %v212 = vlaneseq
    %v213 = vshrl.u32 %v212, 7
    %v214 = vsub.s32 1, %v213
    %v215 = vrot.slane %v42, %v214
    %v216 = vlaneseq
    %v217 = vshrl.u32 %v216, 7
    %v218 = vsub.s32 2, %v217
    %v219 = vrot.slane %v42, %v218
    %v220 = vlaneseq
    %v221 = vshrl.u32 %v220, 7
    %v222 = vsub.s32 3, %v221
    %v223 = vrot.slane %v42, %v222
    %v224 = vlaneseq
    %v225 = vshrl.u32 %v224, 7
    %v226 = vsub.s32 4, %v225
    %v227 = vrot.slane %v42, %v226
    %v228 = vlaneseq
    %v229 = vshrl.u32 %v228, 7
    %v230 = vsub.s32 5, %v229
    %v231 = vrot.slane %v42, %v230
    %v232 = vlaneseq
    %v233 = vshrl.u32 %v232, 7
    %v234 = vsub.s32 6, %v233
    %v235 = vrot.slane %v42, %v234
    %v236 = vlaneseq
    %v237 = vshrl.u32 %v236, 7
    %v238 = vsub.s32 7, %v237
    %v239 = vrot.slane %v42, %v238
    %v240 = vlaneseq
    %v241 = vshrl.u32 %v240, 7
    %v242 = vsub.s32 0, %v241
    %v243 = vrot.slane %v43, %v242
    %v244 = vlaneseq
    %v245 = vshrl.u32 %v244, 7
    %v246 = vsub.s32 1, %v245
    %v247 = vrot.slane %v43, %v246
    %258 = vmatprep.subr.mxu0 0.0
    %v259 = vand.u32 %v59, 4294901760
    %260 = vmatpush1.msra.mxu0 %v259
    %261 = vmatprep.subr.mxu0 0.0
    %v262 = vand.u32 %v58, 4294901760
    %263 = vmatpush1.msra.mxu0 %v262
    %264 = vmatprep.subr.mxu0 0.0
    %v265 = vand.u32 %v57, 4294901760
    %266 = vmatpush1.msra.mxu0 %v265
    %267 = vmatprep.subr.mxu0 0.0
    %v268 = vand.u32 %v56, 4294901760
    %269 = vmatpush1.msra.mxu0 %v268
    %270 = vmatprep.subr.mxu0 0.0
    %v271 = vand.u32 %v55, 4294901760
    %272 = vmatpush1.msra.mxu0 %v271
    %273 = vmatprep.subr.mxu0 0.0
    %v274 = vand.u32 %v54, 4294901760
    %275 = vmatpush1.msra.mxu0 %v274
    %276 = vmatprep.subr.mxu0 0.0
    %v277 = vand.u32 %v53, 4294901760
    %278 = vmatpush1.msra.mxu0 %v277
    %279 = vmatprep.subr.mxu0 0.0
    %v280 = vand.u32 %v52, 4294901760
    %281 = vmatpush1.msra.mxu0 %v280
    %282 = vmatprep.subr.mxu0 0.0
    %v283 = vand.u32 %v51, 4294901760
    %284 = vmatpush1.msra.mxu0 %v283
    %285 = vmatprep.subr.mxu0 0.0
    %v286 = vand.u32 %v50, 4294901760
    %287 = vmatpush1.msra.mxu0 %v286
    %288 = vmatprep.subr.mxu0 0.0
    %v289 = vand.u32 %v49, 4294901760
    %290 = vmatpush1.msra.mxu0 %v289
    %291 = vmatprep.subr.mxu0 0.0
    %v292 = vand.u32 %v48, 4294901760
    %293 = vmatpush1.msra.mxu0 %v292
    %294 = vmatprep.subr.mxu0 0.0
    %v295 = vand.u32 %v47, 4294901760
    %296 = vmatpush1.msra.mxu0 %v295
    %297 = vmatprep.subr.mxu0 0.0
    %v298 = vand.u32 %v46, 4294901760
    %299 = vmatpush1.msra.mxu0 %v298
    %300 = vmatprep.subr.mxu0 0.0
    %v301 = vand.u32 %v45, 4294901760
    %302 = vmatpush1.msra.mxu0 %v301
    %303 = vmatprep.subr.mxu0 0.0
    %v304 = vand.u32 %v44, 4294901760
    %305 = vmatpush1.msra.mxu0 %v304
    %306 = vmatprep.subr.mxu0 0.0
    %v307 = vand.u32 %v75, 4294901760
    %308 = vmatpush2.msra.mxu0 %v307
    %309 = vmatprep.subr.mxu0 0.0
    %v310 = vand.u32 %v74, 4294901760
    %311 = vmatpush2.msra.mxu0 %v310
    %312 = vmatprep.subr.mxu0 0.0
    %v313 = vand.u32 %v73, 4294901760
    %314 = vmatpush2.msra.mxu0 %v313
    %315 = vmatprep.subr.mxu0 0.0
    %v316 = vand.u32 %v72, 4294901760
    %317 = vmatpush2.msra.mxu0 %v316
    %318 = vmatprep.subr.mxu0 0.0
    %v319 = vand.u32 %v71, 4294901760
    %320 = vmatpush2.msra.mxu0 %v319
    %321 = vmatprep.subr.mxu0 0.0
    %v322 = vand.u32 %v70, 4294901760
    %323 = vmatpush2.msra.mxu0 %v322
    %324 = vmatprep.subr.mxu0 0.0
    %v325 = vand.u32 %v69, 4294901760
    %326 = vmatpush2.msra.mxu0 %v325
    %327 = vmatprep.subr.mxu0 0.0
    %v328 = vand.u32 %v68, 4294901760
    %329 = vmatpush2.msra.mxu0 %v328
    %330 = vmatprep.subr.mxu0 0.0
    %v331 = vand.u32 %v67, 4294901760
    %332 = vmatpush2.msra.mxu0 %v331
    %333 = vmatprep.subr.mxu0 0.0
    %v334 = vand.u32 %v66, 4294901760
    %335 = vmatpush2.msra.mxu0 %v334
    %336 = vmatprep.subr.mxu0 0.0
    %v337 = vand.u32 %v65, 4294901760
    %338 = vmatpush2.msra.mxu0 %v337
    %339 = vmatprep.subr.mxu0 0.0
    %v340 = vand.u32 %v64, 4294901760
    %341 = vmatpush2.msra.mxu0 %v340
    %342 = vmatprep.subr.mxu0 0.0
    %v343 = vand.u32 %v63, 4294901760
    %344 = vmatpush2.msra.mxu0 %v343
    %345 = vmatprep.subr.mxu0 0.0
    %v346 = vand.u32 %v62, 4294901760
    %347 = vmatpush2.msra.mxu0 %v346
    %348 = vmatprep.subr.mxu0 0.0
    %v349 = vand.u32 %v61, 4294901760
    %350 = vmatpush2.msra.mxu0 %v349
    %351 = vmatprep.subr.mxu0 0.0
    %v352 = vand.u32 %v60, 4294901760
    %353 = vmatpush2.msra.mxu0 %v352
    %v354 = vand.u32 %v215, 4294901760
    %v355 = vsub.f32 %v215, %v354
    %v356 = vand.u32 %v355, 4294901760
    %v357 = vsub.f32 %v355, %v356
    %v358 = vand.u32 %v357, 4294901760
    %359 = vmatprep.mubr.f32.mxu0 %v358
    %v360 = vand.u32 %v211, 4294901760
    %v361 = vsub.f32 %v211, %v360
    %v362 = vand.u32 %v361, 4294901760
    %v363 = vsub.f32 %v361, %v362
    %v364 = vand.u32 %v363, 4294901760
    %365 = vmatmul.mubr.f32.gmra.mxu0 %v364
    %v366 = vpop.f32.mrf.mxu0
    %v367 = vadd.f32 %v205, %v366
    %v368 = vpop.f32.mrf.mxu0
    %369 = vdwg.mxu0
    %370 = vmatprep.subr.mxu0 0.0
    %v371 = vand.u32 %v59, 4294901760
    %v372 = vsub.f32 %v59, %v371
    %v373 = vand.u32 %v372, 4294901760
    %v374 = vsub.f32 %v372, %v373
    %v375 = vand.u32 %v374, 4294901760
    %376 = vmatpush1.msra.mxu0 %v375
    %377 = vmatprep.subr.mxu0 0.0
    %v378 = vand.u32 %v58, 4294901760
    %v379 = vsub.f32 %v58, %v378
    %v380 = vand.u32 %v379, 4294901760
    %v381 = vsub.f32 %v379, %v380
    %v382 = vand.u32 %v381, 4294901760
    %383 = vmatpush1.msra.mxu0 %v382
    %384 = vmatprep.subr.mxu0 0.0
    %v385 = vand.u32 %v57, 4294901760
    %v386 = vsub.f32 %v57, %v385
    %v387 = vand.u32 %v386, 4294901760
    %v388 = vsub.f32 %v386, %v387
    %v389 = vand.u32 %v388, 4294901760
    %390 = vmatpush1.msra.mxu0 %v389
    %391 = vmatprep.subr.mxu0 0.0
    %v392 = vand.u32 %v56, 4294901760
    %v393 = vsub.f32 %v56, %v392
    %v394 = vand.u32 %v393, 4294901760
    %v395 = vsub.f32 %v393, %v394
    %v396 = vand.u32 %v395, 4294901760
    %397 = vmatpush1.msra.mxu0 %v396
    %398 = vmatprep.subr.mxu0 0.0
    %v399 = vand.u32 %v55, 4294901760
    %v400 = vsub.f32 %v55, %v399
    %v401 = vand.u32 %v400, 4294901760
    %v402 = vsub.f32 %v400, %v401
    %v403 = vand.u32 %v402, 4294901760
    %404 = vmatpush1.msra.mxu0 %v403
    %405 = vmatprep.subr.mxu0 0.0
    %v406 = vand.u32 %v54, 4294901760
    %v407 = vsub.f32 %v54, %v406
    %v408 = vand.u32 %v407, 4294901760
    %v409 = vsub.f32 %v407, %v408
    %v410 = vand.u32 %v409, 4294901760
    %411 = vmatpush1.msra.mxu0 %v410
    %412 = vmatprep.subr.mxu0 0.0
    %v413 = vand.u32 %v53, 4294901760
    %v414 = vsub.f32 %v53, %v413
    %v415 = vand.u32 %v414, 4294901760
    %v416 = vsub.f32 %v414, %v415
    %v417 = vand.u32 %v416, 4294901760
    %418 = vmatpush1.msra.mxu0 %v417
    %419 = vmatprep.subr.mxu0 0.0
    %v420 = vand.u32 %v52, 4294901760
    %v421 = vsub.f32 %v52, %v420
    %v422 = vand.u32 %v421, 4294901760
    %v423 = vsub.f32 %v421, %v422
    %v424 = vand.u32 %v423, 4294901760
    %425 = vmatpush1.msra.mxu0 %v424
    %426 = vmatprep.subr.mxu0 0.0
    %v427 = vand.u32 %v51, 4294901760
    %v428 = vsub.f32 %v51, %v427
    %v429 = vand.u32 %v428, 4294901760
    %v430 = vsub.f32 %v428, %v429
    %v431 = vand.u32 %v430, 4294901760
    %432 = vmatpush1.msra.mxu0 %v431
    %433 = vmatprep.subr.mxu0 0.0
    %v434 = vand.u32 %v50, 4294901760
    %v435 = vsub.f32 %v50, %v434
    %v436 = vand.u32 %v435, 4294901760
    %v437 = vsub.f32 %v435, %v436
    %v438 = vand.u32 %v437, 4294901760
    %439 = vmatpush1.msra.mxu0 %v438
    %440 = vmatprep.subr.mxu0 0.0
    %v441 = vand.u32 %v49, 4294901760
    %v442 = vsub.f32 %v49, %v441
    %v443 = vand.u32 %v442, 4294901760
    %v444 = vsub.f32 %v442, %v443
    %v445 = vand.u32 %v444, 4294901760
    %446 = vmatpush1.msra.mxu0 %v445
    %447 = vmatprep.subr.mxu0 0.0
    %v448 = vand.u32 %v48, 4294901760
    %v449 = vsub.f32 %v48, %v448
    %v450 = vand.u32 %v449, 4294901760
    %v451 = vsub.f32 %v449, %v450
    %v452 = vand.u32 %v451, 4294901760
    %453 = vmatpush1.msra.mxu0 %v452
    %454 = vmatprep.subr.mxu0 0.0
    %v455 = vand.u32 %v47, 4294901760
    %v456 = vsub.f32 %v47, %v455
    %v457 = vand.u32 %v456, 4294901760
    %v458 = vsub.f32 %v456, %v457
    %v459 = vand.u32 %v458, 4294901760
    %460 = vmatpush1.msra.mxu0 %v459
    %461 = vmatprep.subr.mxu0 0.0
    %v462 = vand.u32 %v46, 4294901760
    %v463 = vsub.f32 %v46, %v462
    %v464 = vand.u32 %v463, 4294901760
    %v465 = vsub.f32 %v463, %v464
    %v466 = vand.u32 %v465, 4294901760
    %467 = vmatpush1.msra.mxu0 %v466
    %468 = vmatprep.subr.mxu0 0.0
    %v469 = vand.u32 %v45, 4294901760
    %v470 = vsub.f32 %v45, %v469
    %v471 = vand.u32 %v470, 4294901760
    %v472 = vsub.f32 %v470, %v471
    %v473 = vand.u32 %v472, 4294901760
    %474 = vmatpush1.msra.mxu0 %v473
    %475 = vmatprep.subr.mxu0 0.0
    %v476 = vand.u32 %v44, 4294901760
    %v477 = vsub.f32 %v44, %v476
    %v478 = vand.u32 %v477, 4294901760
    %v479 = vsub.f32 %v477, %v478
    %v480 = vand.u32 %v479, 4294901760
    %481 = vmatpush1.msra.mxu0 %v480
    %482 = vmatprep.subr.mxu0 0.0
    %v483 = vand.u32 %v75, 4294901760
    %v484 = vsub.f32 %v75, %v483
    %v485 = vand.u32 %v484, 4294901760
    %v486 = vsub.f32 %v484, %v485
    %v487 = vand.u32 %v486, 4294901760
    %488 = vmatpush2.msra.mxu0 %v487
    %489 = vmatprep.subr.mxu0 0.0
    %v490 = vand.u32 %v74, 4294901760
    %v491 = vsub.f32 %v74, %v490
    %v492 = vand.u32 %v491, 4294901760
    %v493 = vsub.f32 %v491, %v492
    %v494 = vand.u32 %v493, 4294901760
    %495 = vmatpush2.msra.mxu0 %v494
    %496 = vmatprep.subr.mxu0 0.0
    %v497 = vand.u32 %v73, 4294901760
    %v498 = vsub.f32 %v73, %v497
    %v499 = vand.u32 %v498, 4294901760
    %v500 = vsub.f32 %v498, %v499
    %v501 = vand.u32 %v500, 4294901760
    %502 = vmatpush2.msra.mxu0 %v501
    %503 = vmatprep.subr.mxu0 0.0
    %v504 = vand.u32 %v72, 4294901760
    %v505 = vsub.f32 %v72, %v504
    %v506 = vand.u32 %v505, 4294901760
    %v507 = vsub.f32 %v505, %v506
    %v508 = vand.u32 %v507, 4294901760
    %509 = vmatpush2.msra.mxu0 %v508
    %510 = vmatprep.subr.mxu0 0.0
    %v511 = vand.u32 %v71, 4294901760
    %v512 = vsub.f32 %v71, %v511
    %v513 = vand.u32 %v512, 4294901760
    %v514 = vsub.f32 %v512, %v513
    %v515 = vand.u32 %v514, 4294901760
    %516 = vmatpush2.msra.mxu0 %v515
    %517 = vmatprep.subr.mxu0 0.0
    %v518 = vand.u32 %v70, 4294901760
    %v519 = vsub.f32 %v70, %v518
    %v520 = vand.u32 %v519, 4294901760
    %v521 = vsub.f32 %v519, %v520
    %v522 = vand.u32 %v521, 4294901760
    %523 = vmatpush2.msra.mxu0 %v522
    %524 = vmatprep.subr.mxu0 0.0
    %v525 = vand.u32 %v69, 4294901760
    %v526 = vsub.f32 %v69, %v525
    %v527 = vand.u32 %v526, 4294901760
    %v528 = vsub.f32 %v526, %v527
    %v529 = vand.u32 %v528, 4294901760
    %530 = vmatpush2.msra.mxu0 %v529
    %531 = vmatprep.subr.mxu0 0.0
    %v532 = vand.u32 %v68, 4294901760
    %v533 = vsub.f32 %v68, %v532
    %v534 = vand.u32 %v533, 4294901760
    %v535 = vsub.f32 %v533, %v534
    %v536 = vand.u32 %v535, 4294901760
    %537 = vmatpush2.msra.mxu0 %v536
    %538 = vmatprep.subr.mxu0 0.0
    %v539 = vand.u32 %v67, 4294901760
    %v540 = vsub.f32 %v67, %v539
    %v541 = vand.u32 %v540, 4294901760
    %v542 = vsub.f32 %v540, %v541
    %v543 = vand.u32 %v542, 4294901760
    %544 = vmatpush2.msra.mxu0 %v543
    %545 = vmatprep.subr.mxu0 0.0
    %v546 = vand.u32 %v66, 4294901760
    %v547 = vsub.f32 %v66, %v546
    %v548 = vand.u32 %v547, 4294901760
    %v549 = vsub.f32 %v547, %v548
    %v550 = vand.u32 %v549, 4294901760
    %551 = vmatpush2.msra.mxu0 %v550
    %552 = vmatprep.subr.mxu0 0.0
    %v553 = vand.u32 %v65, 4294901760
    %v554 = vsub.f32 %v65, %v553
    %v555 = vand.u32 %v554, 4294901760
    %v556 = vsub.f32 %v554, %v555
    %v557 = vand.u32 %v556, 4294901760
    %558 = vmatpush2.msra.mxu0 %v557
    %559 = vmatprep.subr.mxu0 0.0
    %v560 = vand.u32 %v64, 4294901760
    %v561 = vsub.f32 %v64, %v560
    %v562 = vand.u32 %v561, 4294901760
    %v563 = vsub.f32 %v561, %v562
    %v564 = vand.u32 %v563, 4294901760
    %565 = vmatpush2.msra.mxu0 %v564
    %566 = vmatprep.subr.mxu0 0.0
    %v567 = vand.u32 %v63, 4294901760
    %v568 = vsub.f32 %v63, %v567
    %v569 = vand.u32 %v568, 4294901760
    %v570 = vsub.f32 %v568, %v569
    %v571 = vand.u32 %v570, 4294901760
    %572 = vmatpush2.msra.mxu0 %v571
    %573 = vmatprep.subr.mxu0 0.0
    %v574 = vand.u32 %v62, 4294901760
    %v575 = vsub.f32 %v62, %v574
    %v576 = vand.u32 %v575, 4294901760
    %v577 = vsub.f32 %v575, %v576
    %v578 = vand.u32 %v577, 4294901760
    %579 = vmatpush2.msra.mxu0 %v578
    %580 = vmatprep.subr.mxu0 0.0
    %v581 = vand.u32 %v61, 4294901760
    %v582 = vsub.f32 %v61, %v581
    %v583 = vand.u32 %v582, 4294901760
    %v584 = vsub.f32 %v582, %v583
    %v585 = vand.u32 %v584, 4294901760
    %586 = vmatpush2.msra.mxu0 %v585
    %587 = vmatprep.subr.mxu0 0.0
    %v588 = vand.u32 %v60, 4294901760
    %v589 = vsub.f32 %v60, %v588
    %v590 = vand.u32 %v589, 4294901760
    %v591 = vsub.f32 %v589, %v590
    %v592 = vand.u32 %v591, 4294901760
    %593 = vmatpush2.msra.mxu0 %v592
    %v594 = vand.u32 %v215, 4294901760
    %595 = vmatprep.mubr.f32.mxu0 %v594
    %v596 = vand.u32 %v211, 4294901760
    %597 = vmatmul.mubr.f32.gmra.mxu0 %v596
    %v598 = vpop.f32.mrf.mxu0
    %v599 = vadd.f32 %v367, %v598
    %v600 = vpop.f32.mrf.mxu0
    %601 = vdwg.mxu0
    %602 = vmatprep.subr.mxu0 0.0
    %v603 = vand.u32 %v59, 4294901760
    %v604 = vsub.f32 %v59, %v603
    %605 = vmatpush1.msra.mxu0 %v604
    %606 = vmatprep.subr.mxu0 0.0
    %v607 = vand.u32 %v58, 4294901760
    %v608 = vsub.f32 %v58, %v607
    %609 = vmatpush1.msra.mxu0 %v608
    %610 = vmatprep.subr.mxu0 0.0
    %v611 = vand.u32 %v57, 4294901760
    %v612 = vsub.f32 %v57, %v611
    %613 = vmatpush1.msra.mxu0 %v612
    %614 = vmatprep.subr.mxu0 0.0
    %v615 = vand.u32 %v56, 4294901760
    %v616 = vsub.f32 %v56, %v615
    %617 = vmatpush1.msra.mxu0 %v616
    %618 = vmatprep.subr.mxu0 0.0
    %v619 = vand.u32 %v55, 4294901760
    %v620 = vsub.f32 %v55, %v619
    %621 = vmatpush1.msra.mxu0 %v620
    %622 = vmatprep.subr.mxu0 0.0
    %v623 = vand.u32 %v54, 4294901760
    %v624 = vsub.f32 %v54, %v623
    %625 = vmatpush1.msra.mxu0 %v624
    %626 = vmatprep.subr.mxu0 0.0
    %v627 = vand.u32 %v53, 4294901760
    %v628 = vsub.f32 %v53, %v627
    %629 = vmatpush1.msra.mxu0 %v628
    %630 = vmatprep.subr.mxu0 0.0
    %v631 = vand.u32 %v52, 4294901760
    %v632 = vsub.f32 %v52, %v631
    %633 = vmatpush1.msra.mxu0 %v632
    %634 = vmatprep.subr.mxu0 0.0
    %v635 = vand.u32 %v51, 4294901760
    %v636 = vsub.f32 %v51, %v635
    %637 = vmatpush1.msra.mxu0 %v636
    %638 = vmatprep.subr.mxu0 0.0
    %v639 = vand.u32 %v50, 4294901760
    %v640 = vsub.f32 %v50, %v639
    %641 = vmatpush1.msra.mxu0 %v640
    %642 = vmatprep.subr.mxu0 0.0
    %v643 = vand.u32 %v49, 4294901760
    %v644 = vsub.f32 %v49, %v643
    %645 = vmatpush1.msra.mxu0 %v644
    %646 = vmatprep.subr.mxu0 0.0
    %v647 = vand.u32 %v48, 4294901760
    %v648 = vsub.f32 %v48, %v647
    %649 = vmatpush1.msra.mxu0 %v648
    %650 = vmatprep.subr.mxu0 0.0
    %v651 = vand.u32 %v47, 4294901760
    %v652 = vsub.f32 %v47, %v651
    %653 = vmatpush1.msra.mxu0 %v652
    %654 = vmatprep.subr.mxu0 0.0
    %v655 = vand.u32 %v46, 4294901760
    %v656 = vsub.f32 %v46, %v655
    %657 = vmatpush1.msra.mxu0 %v656
    %658 = vmatprep.subr.mxu0 0.0
    %v659 = vand.u32 %v45, 4294901760
    %v660 = vsub.f32 %v45, %v659
    %661 = vmatpush1.msra.mxu0 %v660
    %662 = vmatprep.subr.mxu0 0.0
    %v663 = vand.u32 %v44, 4294901760
    %v664 = vsub.f32 %v44, %v663
    %665 = vmatpush1.msra.mxu0 %v664
    %666 = vmatprep.subr.mxu0 0.0
    %v667 = vand.u32 %v75, 4294901760
    %v668 = vsub.f32 %v75, %v667
    %669 = vmatpush2.msra.mxu0 %v668
    %670 = vmatprep.subr.mxu0 0.0
    %v671 = vand.u32 %v74, 4294901760
    %v672 = vsub.f32 %v74, %v671
    %673 = vmatpush2.msra.mxu0 %v672
    %674 = vmatprep.subr.mxu0 0.0
    %v675 = vand.u32 %v73, 4294901760
    %v676 = vsub.f32 %v73, %v675
    %677 = vmatpush2.msra.mxu0 %v676
    %678 = vmatprep.subr.mxu0 0.0
    %v679 = vand.u32 %v72, 4294901760
    %v680 = vsub.f32 %v72, %v679
    %681 = vmatpush2.msra.mxu0 %v680
    %682 = vmatprep.subr.mxu0 0.0
    %v683 = vand.u32 %v71, 4294901760
    %v684 = vsub.f32 %v71, %v683
    %685 = vmatpush2.msra.mxu0 %v684
    %686 = vmatprep.subr.mxu0 0.0
    %v687 = vand.u32 %v70, 4294901760
    %v688 = vsub.f32 %v70, %v687
    %689 = vmatpush2.msra.mxu0 %v688
    %690 = vmatprep.subr.mxu0 0.0
    %v691 = vand.u32 %v69, 4294901760
    %v692 = vsub.f32 %v69, %v691
    %693 = vmatpush2.msra.mxu0 %v692
    %694 = vmatprep.subr.mxu0 0.0
    %v695 = vand.u32 %v68, 4294901760
    %v696 = vsub.f32 %v68, %v695
    %697 = vmatpush2.msra.mxu0 %v696
    %698 = vmatprep.subr.mxu0 0.0
    %v699 = vand.u32 %v67, 4294901760
    %v700 = vsub.f32 %v67, %v699
    %701 = vmatpush2.msra.mxu0 %v700
    %702 = vmatprep.subr.mxu0 0.0
    %v703 = vand.u32 %v66, 4294901760
    %v704 = vsub.f32 %v66, %v703
    %705 = vmatpush2.msra.mxu0 %v704
    %706 = vmatprep.subr.mxu0 0.0
    %v707 = vand.u32 %v65, 4294901760
    %v708 = vsub.f32 %v65, %v707
    %709 = vmatpush2.msra.mxu0 %v708
    %710 = vmatprep.subr.mxu0 0.0
    %v711 = vand.u32 %v64, 4294901760
    %v712 = vsub.f32 %v64, %v711
    %713 = vmatpush2.msra.mxu0 %v712
    %714 = vmatprep.subr.mxu0 0.0
    %v715 = vand.u32 %v63, 4294901760
    %v716 = vsub.f32 %v63, %v715
    %717 = vmatpush2.msra.mxu0 %v716
    %718 = vmatprep.subr.mxu0 0.0
    %v719 = vand.u32 %v62, 4294901760
    %v720 = vsub.f32 %v62, %v719
    %721 = vmatpush2.msra.mxu0 %v720
    %722 = vmatprep.subr.mxu0 0.0
    %v723 = vand.u32 %v61, 4294901760
    %v724 = vsub.f32 %v61, %v723
    %725 = vmatpush2.msra.mxu0 %v724
    %726 = vmatprep.subr.mxu0 0.0
    %v727 = vand.u32 %v60, 4294901760
    %v728 = vsub.f32 %v60, %v727
    %729 = vmatpush2.msra.mxu0 %v728
    %v730 = vand.u32 %v215, 4294901760
    %v731 = vsub.f32 %v215, %v730
    %732 = vmatprep.mubr.f32.mxu0 %v731
    %v733 = vand.u32 %v211, 4294901760
    %v734 = vsub.f32 %v211, %v733
    %735 = vmatmul.mubr.f32.gmra.mxu0 %v734
    %v736 = vpop.f32.mrf.mxu0
    %v737 = vadd.f32 %v599, %v736
    %v738 = vpop.f32.mrf.mxu0
    %739 = vdwg.mxu0
    %740 = vmatprep.subr.mxu0 0.0
    %v741 = vand.u32 %v59, 4294901760
    %742 = vmatpush1.msra.mxu0 %v741
    %743 = vmatprep.subr.mxu0 0.0
    %v744 = vand.u32 %v58, 4294901760
    %745 = vmatpush1.msra.mxu0 %v744
    %746 = vmatprep.subr.mxu0 0.0
    %v747 = vand.u32 %v57, 4294901760
    %748 = vmatpush1.msra.mxu0 %v747
    %749 = vmatprep.subr.mxu0 0.0
    %v750 = vand.u32 %v56, 4294901760
    %751 = vmatpush1.msra.mxu0 %v750
    %752 = vmatprep.subr.mxu0 0.0
    %v753 = vand.u32 %v55, 4294901760
    %754 = vmatpush1.msra.mxu0 %v753
    %755 = vmatprep.subr.mxu0 0.0
    %v756 = vand.u32 %v54, 4294901760
    %757 = vmatpush1.msra.mxu0 %v756
    %758 = vmatprep.subr.mxu0 0.0
    %v759 = vand.u32 %v53, 4294901760
    %760 = vmatpush1.msra.mxu0 %v759
    %761 = vmatprep.subr.mxu0 0.0
    %v762 = vand.u32 %v52, 4294901760
    %763 = vmatpush1.msra.mxu0 %v762
    %764 = vmatprep.subr.mxu0 0.0
    %v765 = vand.u32 %v51, 4294901760
    %766 = vmatpush1.msra.mxu0 %v765
    %767 = vmatprep.subr.mxu0 0.0
    %v768 = vand.u32 %v50, 4294901760
    %769 = vmatpush1.msra.mxu0 %v768
    %770 = vmatprep.subr.mxu0 0.0
    %v771 = vand.u32 %v49, 4294901760
    %772 = vmatpush1.msra.mxu0 %v771
    %773 = vmatprep.subr.mxu0 0.0
    %v774 = vand.u32 %v48, 4294901760
    %775 = vmatpush1.msra.mxu0 %v774
    %776 = vmatprep.subr.mxu0 0.0
    %v777 = vand.u32 %v47, 4294901760
    %778 = vmatpush1.msra.mxu0 %v777
    %779 = vmatprep.subr.mxu0 0.0
    %v780 = vand.u32 %v46, 4294901760
    %781 = vmatpush1.msra.mxu0 %v780
    %782 = vmatprep.subr.mxu0 0.0
    %v783 = vand.u32 %v45, 4294901760
    %784 = vmatpush1.msra.mxu0 %v783
    %785 = vmatprep.subr.mxu0 0.0
    %v786 = vand.u32 %v44, 4294901760
    %787 = vmatpush1.msra.mxu0 %v786
    %788 = vmatprep.subr.mxu0 0.0
    %v789 = vand.u32 %v75, 4294901760
    %790 = vmatpush2.msra.mxu0 %v789
    %791 = vmatprep.subr.mxu0 0.0
    %v792 = vand.u32 %v74, 4294901760
    %793 = vmatpush2.msra.mxu0 %v792
    %794 = vmatprep.subr.mxu0 0.0
    %v795 = vand.u32 %v73, 4294901760
    %796 = vmatpush2.msra.mxu0 %v795
    %797 = vmatprep.subr.mxu0 0.0
    %v798 = vand.u32 %v72, 4294901760
    %799 = vmatpush2.msra.mxu0 %v798
    %800 = vmatprep.subr.mxu0 0.0
    %v801 = vand.u32 %v71, 4294901760
    %802 = vmatpush2.msra.mxu0 %v801
    %803 = vmatprep.subr.mxu0 0.0
    %v804 = vand.u32 %v70, 4294901760
    %805 = vmatpush2.msra.mxu0 %v804
    %806 = vmatprep.subr.mxu0 0.0
    %v807 = vand.u32 %v69, 4294901760
    %808 = vmatpush2.msra.mxu0 %v807
    %809 = vmatprep.subr.mxu0 0.0
    %v810 = vand.u32 %v68, 4294901760
    %811 = vmatpush2.msra.mxu0 %v810
    %812 = vmatprep.subr.mxu0 0.0
    %v813 = vand.u32 %v67, 4294901760
    %814 = vmatpush2.msra.mxu0 %v813
    %815 = vmatprep.subr.mxu0 0.0
    %v816 = vand.u32 %v66, 4294901760
    %817 = vmatpush2.msra.mxu0 %v816
    %818 = vmatprep.subr.mxu0 0.0
    %v819 = vand.u32 %v65, 4294901760
    %820 = vmatpush2.msra.mxu0 %v819
    %821 = vmatprep.subr.mxu0 0.0
    %v822 = vand.u32 %v64, 4294901760
    %823 = vmatpush2.msra.mxu0 %v822
    %824 = vmatprep.subr.mxu0 0.0
    %v825 = vand.u32 %v63, 4294901760
    %826 = vmatpush2.msra.mxu0 %v825
    %827 = vmatprep.subr.mxu0 0.0
    %v828 = vand.u32 %v62, 4294901760
    %829 = vmatpush2.msra.mxu0 %v828
    %830 = vmatprep.subr.mxu0 0.0
    %v831 = vand.u32 %v61, 4294901760
    %832 = vmatpush2.msra.mxu0 %v831
    %833 = vmatprep.subr.mxu0 0.0
    %v834 = vand.u32 %v60, 4294901760
    %835 = vmatpush2.msra.mxu0 %v834
    %v836 = vand.u32 %v215, 4294901760
    %v837 = vsub.f32 %v215, %v836
    %v838 = vand.u32 %v837, 4294901760
    %839 = vmatprep.mubr.f32.mxu0 %v838
    %v840 = vand.u32 %v211, 4294901760
    %v841 = vsub.f32 %v211, %v840
    %v842 = vand.u32 %v841, 4294901760
    %843 = vmatmul.mubr.f32.gmra.mxu0 %v842
    %v844 = vpop.f32.mrf.mxu0
    %v845 = vadd.f32 %v737, %v844
    %v846 = vpop.f32.mrf.mxu0
    %847 = vdwg.mxu0
    %848 = vmatprep.subr.mxu0 0.0
    %v849 = vand.u32 %v59, 4294901760
    %v850 = vsub.f32 %v59, %v849
    %v851 = vand.u32 %v850, 4294901760
    %852 = vmatpush1.msra.mxu0 %v851
    %853 = vmatprep.subr.mxu0 0.0
    %v854 = vand.u32 %v58, 4294901760
    %v855 = vsub.f32 %v58, %v854
    %v856 = vand.u32 %v855, 4294901760
    %857 = vmatpush1.msra.mxu0 %v856
    %858 = vmatprep.subr.mxu0 0.0
    %v859 = vand.u32 %v57, 4294901760
    %v860 = vsub.f32 %v57, %v859
    %v861 = vand.u32 %v860, 4294901760
    %862 = vmatpush1.msra.mxu0 %v861
    %863 = vmatprep.subr.mxu0 0.0
    %v864 = vand.u32 %v56, 4294901760
    %v865 = vsub.f32 %v56, %v864
    %v866 = vand.u32 %v865, 4294901760
    %867 = vmatpush1.msra.mxu0 %v866
    %868 = vmatprep.subr.mxu0 0.0
    %v869 = vand.u32 %v55, 4294901760
    %v870 = vsub.f32 %v55, %v869
    %v871 = vand.u32 %v870, 4294901760
    %872 = vmatpush1.msra.mxu0 %v871
    %873 = vmatprep.subr.mxu0 0.0
    %v874 = vand.u32 %v54, 4294901760
    %v875 = vsub.f32 %v54, %v874
    %v876 = vand.u32 %v875, 4294901760
    %877 = vmatpush1.msra.mxu0 %v876
    %878 = vmatprep.subr.mxu0 0.0
    %v879 = vand.u32 %v53, 4294901760
    %v880 = vsub.f32 %v53, %v879
    %v881 = vand.u32 %v880, 4294901760
    %882 = vmatpush1.msra.mxu0 %v881
    %883 = vmatprep.subr.mxu0 0.0
    %v884 = vand.u32 %v52, 4294901760
    %v885 = vsub.f32 %v52, %v884
    %v886 = vand.u32 %v885, 4294901760
    %887 = vmatpush1.msra.mxu0 %v886
    %888 = vmatprep.subr.mxu0 0.0
    %v889 = vand.u32 %v51, 4294901760
    %v890 = vsub.f32 %v51, %v889
    %v891 = vand.u32 %v890, 4294901760
    %892 = vmatpush1.msra.mxu0 %v891
    %893 = vmatprep.subr.mxu0 0.0
    %v894 = vand.u32 %v50, 4294901760
    %v895 = vsub.f32 %v50, %v894
    %v896 = vand.u32 %v895, 4294901760
    %897 = vmatpush1.msra.mxu0 %v896
    %898 = vmatprep.subr.mxu0 0.0
    %v899 = vand.u32 %v49, 4294901760
    %v900 = vsub.f32 %v49, %v899
    %v901 = vand.u32 %v900, 4294901760
    %902 = vmatpush1.msra.mxu0 %v901
    %903 = vmatprep.subr.mxu0 0.0
    %v904 = vand.u32 %v48, 4294901760
    %v905 = vsub.f32 %v48, %v904
    %v906 = vand.u32 %v905, 4294901760
    %907 = vmatpush1.msra.mxu0 %v906
    %908 = vmatprep.subr.mxu0 0.0
    %v909 = vand.u32 %v47, 4294901760
    %v910 = vsub.f32 %v47, %v909
    %v911 = vand.u32 %v910, 4294901760
    %912 = vmatpush1.msra.mxu0 %v911
    %913 = vmatprep.subr.mxu0 0.0
    %v914 = vand.u32 %v46, 4294901760
    %v915 = vsub.f32 %v46, %v914
    %v916 = vand.u32 %v915, 4294901760
    %917 = vmatpush1.msra.mxu0 %v916
    %918 = vmatprep.subr.mxu0 0.0
    %v919 = vand.u32 %v45, 4294901760
    %v920 = vsub.f32 %v45, %v919
    %v921 = vand.u32 %v920, 4294901760
    %922 = vmatpush1.msra.mxu0 %v921
    %923 = vmatprep.subr.mxu0 0.0
    %v924 = vand.u32 %v44, 4294901760
    %v925 = vsub.f32 %v44, %v924
    %v926 = vand.u32 %v925, 4294901760
    %927 = vmatpush1.msra.mxu0 %v926
    %928 = vmatprep.subr.mxu0 0.0
    %v929 = vand.u32 %v75, 4294901760
    %v930 = vsub.f32 %v75, %v929
    %v931 = vand.u32 %v930, 4294901760
    %932 = vmatpush2.msra.mxu0 %v931
    %933 = vmatprep.subr.mxu0 0.0
    %v934 = vand.u32 %v74, 4294901760
    %v935 = vsub.f32 %v74, %v934
    %v936 = vand.u32 %v935, 4294901760
    %937 = vmatpush2.msra.mxu0 %v936
    %938 = vmatprep.subr.mxu0 0.0
    %v939 = vand.u32 %v73, 4294901760
    %v940 = vsub.f32 %v73, %v939
    %v941 = vand.u32 %v940, 4294901760
    %942 = vmatpush2.msra.mxu0 %v941
    %943 = vmatprep.subr.mxu0 0.0
    %v944 = vand.u32 %v72, 4294901760
    %v945 = vsub.f32 %v72, %v944
    %v946 = vand.u32 %v945, 4294901760
    %947 = vmatpush2.msra.mxu0 %v946
    %948 = vmatprep.subr.mxu0 0.0
    %v949 = vand.u32 %v71, 4294901760
    %v950 = vsub.f32 %v71, %v949
    %v951 = vand.u32 %v950, 4294901760
    %952 = vmatpush2.msra.mxu0 %v951
    %953 = vmatprep.subr.mxu0 0.0
    %v954 = vand.u32 %v70, 4294901760
    %v955 = vsub.f32 %v70, %v954
    %v956 = vand.u32 %v955, 4294901760
    %957 = vmatpush2.msra.mxu0 %v956
    %958 = vmatprep.subr.mxu0 0.0
    %v959 = vand.u32 %v69, 4294901760
    %v960 = vsub.f32 %v69, %v959
    %v961 = vand.u32 %v960, 4294901760
    %962 = vmatpush2.msra.mxu0 %v961
    %963 = vmatprep.subr.mxu0 0.0
    %v964 = vand.u32 %v68, 4294901760
    %v965 = vsub.f32 %v68, %v964
    %v966 = vand.u32 %v965, 4294901760
    %967 = vmatpush2.msra.mxu0 %v966
    %968 = vmatprep.subr.mxu0 0.0
    %v969 = vand.u32 %v67, 4294901760
    %v970 = vsub.f32 %v67, %v969
    %v971 = vand.u32 %v970, 4294901760
    %972 = vmatpush2.msra.mxu0 %v971
    %973 = vmatprep.subr.mxu0 0.0
    %v974 = vand.u32 %v66, 4294901760
    %v975 = vsub.f32 %v66, %v974
    %v976 = vand.u32 %v975, 4294901760
    %977 = vmatpush2.msra.mxu0 %v976
    %978 = vmatprep.subr.mxu0 0.0
    %v979 = vand.u32 %v65, 4294901760
    %v980 = vsub.f32 %v65, %v979
    %v981 = vand.u32 %v980, 4294901760
    %982 = vmatpush2.msra.mxu0 %v981
    %983 = vmatprep.subr.mxu0 0.0
    %v984 = vand.u32 %v64, 4294901760
    %v985 = vsub.f32 %v64, %v984
    %v986 = vand.u32 %v985, 4294901760
    %987 = vmatpush2.msra.mxu0 %v986
    %988 = vmatprep.subr.mxu0 0.0
    %v989 = vand.u32 %v63, 4294901760
    %v990 = vsub.f32 %v63, %v989
    %v991 = vand.u32 %v990, 4294901760
    %992 = vmatpush2.msra.mxu0 %v991
    %993 = vmatprep.subr.mxu0 0.0
    %v994 = vand.u32 %v62, 4294901760
    %v995 = vsub.f32 %v62, %v994
    %v996 = vand.u32 %v995, 4294901760
    %997 = vmatpush2.msra.mxu0 %v996
    %998 = vmatprep.subr.mxu0 0.0
    %v999 = vand.u32 %v61, 4294901760
    %v1000 = vsub.f32 %v61, %v999
    %v1001 = vand.u32 %v1000, 4294901760
    %1002 = vmatpush2.msra.mxu0 %v1001
    %1003 = vmatprep.subr.mxu0 0.0
    %v1004 = vand.u32 %v60, 4294901760
    %v1005 = vsub.f32 %v60, %v1004
    %v1006 = vand.u32 %v1005, 4294901760
    %1007 = vmatpush2.msra.mxu0 %v1006
    %v1008 = vand.u32 %v215, 4294901760
    %1009 = vmatprep.mubr.f32.mxu0 %v1008
    %v1010 = vand.u32 %v211, 4294901760
    %1011 = vmatmul.mubr.f32.gmra.mxu0 %v1010
    %v1012 = vpop.f32.mrf.mxu0
    %v1013 = vadd.f32 %v845, %v1012
    %v1014 = vpop.f32.mrf.mxu0
    %1015 = vdwg.mxu0
    %1016 = vmatprep.subr.mxu0 0.0
    %v1017 = vand.u32 %v59, 4294901760
    %1018 = vmatpush1.msra.mxu0 %v1017
    %1019 = vmatprep.subr.mxu0 0.0
    %v1020 = vand.u32 %v58, 4294901760
    %1021 = vmatpush1.msra.mxu0 %v1020
    %1022 = vmatprep.subr.mxu0 0.0
    %v1023 = vand.u32 %v57, 4294901760
    %1024 = vmatpush1.msra.mxu0 %v1023
    %1025 = vmatprep.subr.mxu0 0.0
    %v1026 = vand.u32 %v56, 4294901760
    %1027 = vmatpush1.msra.mxu0 %v1026
    %1028 = vmatprep.subr.mxu0 0.0
    %v1029 = vand.u32 %v55, 4294901760
    %1030 = vmatpush1.msra.mxu0 %v1029
    %1031 = vmatprep.subr.mxu0 0.0
    %v1032 = vand.u32 %v54, 4294901760
    %1033 = vmatpush1.msra.mxu0 %v1032
    %1034 = vmatprep.subr.mxu0 0.0
    %v1035 = vand.u32 %v53, 4294901760
    %1036 = vmatpush1.msra.mxu0 %v1035
    %1037 = vmatprep.subr.mxu0 0.0
    %v1038 = vand.u32 %v52, 4294901760
    %1039 = vmatpush1.msra.mxu0 %v1038
    %1040 = vmatprep.subr.mxu0 0.0
    %v1041 = vand.u32 %v51, 4294901760
    %1042 = vmatpush1.msra.mxu0 %v1041
    %1043 = vmatprep.subr.mxu0 0.0
    %v1044 = vand.u32 %v50, 4294901760
    %1045 = vmatpush1.msra.mxu0 %v1044
    %1046 = vmatprep.subr.mxu0 0.0
    %v1047 = vand.u32 %v49, 4294901760
    %1048 = vmatpush1.msra.mxu0 %v1047
    %1049 = vmatprep.subr.mxu0 0.0
    %v1050 = vand.u32 %v48, 4294901760
    %1051 = vmatpush1.msra.mxu0 %v1050
    %1052 = vmatprep.subr.mxu0 0.0
    %v1053 = vand.u32 %v47, 4294901760
    %1054 = vmatpush1.msra.mxu0 %v1053
    %1055 = vmatprep.subr.mxu0 0.0
    %v1056 = vand.u32 %v46, 4294901760
    %1057 = vmatpush1.msra.mxu0 %v1056
    %1058 = vmatprep.subr.mxu0 0.0
    %v1059 = vand.u32 %v45, 4294901760
    %1060 = vmatpush1.msra.mxu0 %v1059
    %1061 = vmatprep.subr.mxu0 0.0
    %v1062 = vand.u32 %v44, 4294901760
    %1063 = vmatpush1.msra.mxu0 %v1062
    %1064 = vmatprep.subr.mxu0 0.0
    %v1065 = vand.u32 %v75, 4294901760
    %1066 = vmatpush2.msra.mxu0 %v1065
    %1067 = vmatprep.subr.mxu0 0.0
    %v1068 = vand.u32 %v74, 4294901760
    %1069 = vmatpush2.msra.mxu0 %v1068
    %1070 = vmatprep.subr.mxu0 0.0
    %v1071 = vand.u32 %v73, 4294901760
    %1072 = vmatpush2.msra.mxu0 %v1071
    %1073 = vmatprep.subr.mxu0 0.0
    %v1074 = vand.u32 %v72, 4294901760
    %1075 = vmatpush2.msra.mxu0 %v1074
    %1076 = vmatprep.subr.mxu0 0.0
    %v1077 = vand.u32 %v71, 4294901760
    %1078 = vmatpush2.msra.mxu0 %v1077
    %1079 = vmatprep.subr.mxu0 0.0
    %v1080 = vand.u32 %v70, 4294901760
    %1081 = vmatpush2.msra.mxu0 %v1080
    %1082 = vmatprep.subr.mxu0 0.0
    %v1083 = vand.u32 %v69, 4294901760
    %1084 = vmatpush2.msra.mxu0 %v1083
    %1085 = vmatprep.subr.mxu0 0.0
    %v1086 = vand.u32 %v68, 4294901760
    %1087 = vmatpush2.msra.mxu0 %v1086
    %1088 = vmatprep.subr.mxu0 0.0
    %v1089 = vand.u32 %v67, 4294901760
    %1090 = vmatpush2.msra.mxu0 %v1089
    %1091 = vmatprep.subr.mxu0 0.0
    %v1092 = vand.u32 %v66, 4294901760
    %1093 = vmatpush2.msra.mxu0 %v1092
    %1094 = vmatprep.subr.mxu0 0.0
    %v1095 = vand.u32 %v65, 4294901760
    %1096 = vmatpush2.msra.mxu0 %v1095
    %1097 = vmatprep.subr.mxu0 0.0
    %v1098 = vand.u32 %v64, 4294901760
    %1099 = vmatpush2.msra.mxu0 %v1098
    %1100 = vmatprep.subr.mxu0 0.0
    %v1101 = vand.u32 %v63, 4294901760
    %1102 = vmatpush2.msra.mxu0 %v1101
    %1103 = vmatprep.subr.mxu0 0.0
    %v1104 = vand.u32 %v62, 4294901760
    %1105 = vmatpush2.msra.mxu0 %v1104
    %1106 = vmatprep.subr.mxu0 0.0
    %v1107 = vand.u32 %v61, 4294901760
    %1108 = vmatpush2.msra.mxu0 %v1107
    %1109 = vmatprep.subr.mxu0 0.0
    %v1110 = vand.u32 %v60, 4294901760
    %1111 = vmatpush2.msra.mxu0 %v1110
    %v1112 = vand.u32 %v215, 4294901760
    %1113 = vmatprep.mubr.f32.mxu0 %v1112
    %v1114 = vand.u32 %v211, 4294901760
    %1115 = vmatmul.mubr.f32.gmra.mxu0 %v1114
    %v1116 = vpop.f32.mrf.mxu0
    %v1117 = vadd.f32 %v1013, %v1116
    %v1118 = vpop.f32.mrf.mxu0
    %1119 = vdwg.mxu0
    %1120 = vmatprep.subr.mxu0 0.0
    %v1121 = vand.u32 %v91, 4294901760
    %1122 = vmatpush1.msra.mxu0 %v1121
    %1123 = vmatprep.subr.mxu0 0.0
    %v1124 = vand.u32 %v90, 4294901760
    %1125 = vmatpush1.msra.mxu0 %v1124
    %1126 = vmatprep.subr.mxu0 0.0
    %v1127 = vand.u32 %v89, 4294901760
    %1128 = vmatpush1.msra.mxu0 %v1127
    %1129 = vmatprep.subr.mxu0 0.0
    %v1130 = vand.u32 %v88, 4294901760
    %1131 = vmatpush1.msra.mxu0 %v1130
    %1132 = vmatprep.subr.mxu0 0.0
    %v1133 = vand.u32 %v87, 4294901760
    %1134 = vmatpush1.msra.mxu0 %v1133
    %1135 = vmatprep.subr.mxu0 0.0
    %v1136 = vand.u32 %v86, 4294901760
    %1137 = vmatpush1.msra.mxu0 %v1136
    %1138 = vmatprep.subr.mxu0 0.0
    %v1139 = vand.u32 %v85, 4294901760
    %1140 = vmatpush1.msra.mxu0 %v1139
    %1141 = vmatprep.subr.mxu0 0.0
    %v1142 = vand.u32 %v84, 4294901760
    %1143 = vmatpush1.msra.mxu0 %v1142
    %1144 = vmatprep.subr.mxu0 0.0
    %v1145 = vand.u32 %v83, 4294901760
    %1146 = vmatpush1.msra.mxu0 %v1145
    %1147 = vmatprep.subr.mxu0 0.0
    %v1148 = vand.u32 %v82, 4294901760
    %1149 = vmatpush1.msra.mxu0 %v1148
    %1150 = vmatprep.subr.mxu0 0.0
    %v1151 = vand.u32 %v81, 4294901760
    %1152 = vmatpush1.msra.mxu0 %v1151
    %1153 = vmatprep.subr.mxu0 0.0
    %v1154 = vand.u32 %v80, 4294901760
    %1155 = vmatpush1.msra.mxu0 %v1154
    %1156 = vmatprep.subr.mxu0 0.0
    %v1157 = vand.u32 %v79, 4294901760
    %1158 = vmatpush1.msra.mxu0 %v1157
    %1159 = vmatprep.subr.mxu0 0.0
    %v1160 = vand.u32 %v78, 4294901760
    %1161 = vmatpush1.msra.mxu0 %v1160
    %1162 = vmatprep.subr.mxu0 0.0
    %v1163 = vand.u32 %v77, 4294901760
    %1164 = vmatpush1.msra.mxu0 %v1163
    %1165 = vmatprep.subr.mxu0 0.0
    %v1166 = vand.u32 %v76, 4294901760
    %1167 = vmatpush1.msra.mxu0 %v1166
    %1168 = vmatprep.subr.mxu0 0.0
    %v1169 = vand.u32 %v107, 4294901760
    %1170 = vmatpush2.msra.mxu0 %v1169
    %1171 = vmatprep.subr.mxu0 0.0
    %v1172 = vand.u32 %v106, 4294901760
    %1173 = vmatpush2.msra.mxu0 %v1172
    %1174 = vmatprep.subr.mxu0 0.0
    %v1175 = vand.u32 %v105, 4294901760
    %1176 = vmatpush2.msra.mxu0 %v1175
    %1177 = vmatprep.subr.mxu0 0.0
    %v1178 = vand.u32 %v104, 4294901760
    %1179 = vmatpush2.msra.mxu0 %v1178
    %1180 = vmatprep.subr.mxu0 0.0
    %v1181 = vand.u32 %v103, 4294901760
    %1182 = vmatpush2.msra.mxu0 %v1181
    %1183 = vmatprep.subr.mxu0 0.0
    %v1184 = vand.u32 %v102, 4294901760
    %1185 = vmatpush2.msra.mxu0 %v1184
    %1186 = vmatprep.subr.mxu0 0.0
    %v1187 = vand.u32 %v101, 4294901760
    %1188 = vmatpush2.msra.mxu0 %v1187
    %1189 = vmatprep.subr.mxu0 0.0
    %v1190 = vand.u32 %v100, 4294901760
    %1191 = vmatpush2.msra.mxu0 %v1190
    %1192 = vmatprep.subr.mxu0 0.0
    %v1193 = vand.u32 %v99, 4294901760
    %1194 = vmatpush2.msra.mxu0 %v1193
    %1195 = vmatprep.subr.mxu0 0.0
    %v1196 = vand.u32 %v98, 4294901760
    %1197 = vmatpush2.msra.mxu0 %v1196
    %1198 = vmatprep.subr.mxu0 0.0
    %v1199 = vand.u32 %v97, 4294901760
    %1200 = vmatpush2.msra.mxu0 %v1199
    %1201 = vmatprep.subr.mxu0 0.0
    %v1202 = vand.u32 %v96, 4294901760
    %1203 = vmatpush2.msra.mxu0 %v1202
    %1204 = vmatprep.subr.mxu0 0.0
    %v1205 = vand.u32 %v95, 4294901760
    %1206 = vmatpush2.msra.mxu0 %v1205
    %1207 = vmatprep.subr.mxu0 0.0
    %v1208 = vand.u32 %v94, 4294901760
    %1209 = vmatpush2.msra.mxu0 %v1208
    %1210 = vmatprep.subr.mxu0 0.0
    %v1211 = vand.u32 %v93, 4294901760
    %1212 = vmatpush2.msra.mxu0 %v1211
    %1213 = vmatprep.subr.mxu0 0.0
    %v1214 = vand.u32 %v92, 4294901760
    %1215 = vmatpush2.msra.mxu0 %v1214
    %v1216 = vand.u32 %v223, 4294901760
    %v1217 = vsub.f32 %v223, %v1216
    %v1218 = vand.u32 %v1217, 4294901760
    %v1219 = vsub.f32 %v1217, %v1218
    %v1220 = vand.u32 %v1219, 4294901760
    %1221 = vmatprep.mubr.f32.mxu0 %v1220
    %v1222 = vand.u32 %v219, 4294901760
    %v1223 = vsub.f32 %v219, %v1222
    %v1224 = vand.u32 %v1223, 4294901760
    %v1225 = vsub.f32 %v1223, %v1224
    %v1226 = vand.u32 %v1225, 4294901760
    %1227 = vmatmul.mubr.f32.gmra.mxu0 %v1226
    %v1228 = vpop.f32.mrf.mxu0
    %v1229 = vadd.f32 %v1117, %v1228
    %v1230 = vpop.f32.mrf.mxu0
    %1231 = vdwg.mxu0
    %1232 = vmatprep.subr.mxu0 0.0
    %v1233 = vand.u32 %v91, 4294901760
    %v1234 = vsub.f32 %v91, %v1233
    %v1235 = vand.u32 %v1234, 4294901760
    %v1236 = vsub.f32 %v1234, %v1235
    %v1237 = vand.u32 %v1236, 4294901760
    %1238 = vmatpush1.msra.mxu0 %v1237
    %1239 = vmatprep.subr.mxu0 0.0
    %v1240 = vand.u32 %v90, 4294901760
    %v1241 = vsub.f32 %v90, %v1240
    %v1242 = vand.u32 %v1241, 4294901760
    %v1243 = vsub.f32 %v1241, %v1242
    %v1244 = vand.u32 %v1243, 4294901760
    %1245 = vmatpush1.msra.mxu0 %v1244
    %1246 = vmatprep.subr.mxu0 0.0
    %v1247 = vand.u32 %v89, 4294901760
    %v1248 = vsub.f32 %v89, %v1247
    %v1249 = vand.u32 %v1248, 4294901760
    %v1250 = vsub.f32 %v1248, %v1249
    %v1251 = vand.u32 %v1250, 4294901760
    %1252 = vmatpush1.msra.mxu0 %v1251
    %1253 = vmatprep.subr.mxu0 0.0
    %v1254 = vand.u32 %v88, 4294901760
    %v1255 = vsub.f32 %v88, %v1254
    %v1256 = vand.u32 %v1255, 4294901760
    %v1257 = vsub.f32 %v1255, %v1256
    %v1258 = vand.u32 %v1257, 4294901760
    %1259 = vmatpush1.msra.mxu0 %v1258
    %1260 = vmatprep.subr.mxu0 0.0
    %v1261 = vand.u32 %v87, 4294901760
    %v1262 = vsub.f32 %v87, %v1261
    %v1263 = vand.u32 %v1262, 4294901760
    %v1264 = vsub.f32 %v1262, %v1263
    %v1265 = vand.u32 %v1264, 4294901760
    %1266 = vmatpush1.msra.mxu0 %v1265
    %1267 = vmatprep.subr.mxu0 0.0
    %v1268 = vand.u32 %v86, 4294901760
    %v1269 = vsub.f32 %v86, %v1268
    %v1270 = vand.u32 %v1269, 4294901760
    %v1271 = vsub.f32 %v1269, %v1270
    %v1272 = vand.u32 %v1271, 4294901760
    %1273 = vmatpush1.msra.mxu0 %v1272
    %1274 = vmatprep.subr.mxu0 0.0
    %v1275 = vand.u32 %v85, 4294901760
    %v1276 = vsub.f32 %v85, %v1275
    %v1277 = vand.u32 %v1276, 4294901760
    %v1278 = vsub.f32 %v1276, %v1277
    %v1279 = vand.u32 %v1278, 4294901760
    %1280 = vmatpush1.msra.mxu0 %v1279
    %1281 = vmatprep.subr.mxu0 0.0
    %v1282 = vand.u32 %v84, 4294901760
    %v1283 = vsub.f32 %v84, %v1282
    %v1284 = vand.u32 %v1283, 4294901760
    %v1285 = vsub.f32 %v1283, %v1284
    %v1286 = vand.u32 %v1285, 4294901760
    %1287 = vmatpush1.msra.mxu0 %v1286
    %1288 = vmatprep.subr.mxu0 0.0
    %v1289 = vand.u32 %v83, 4294901760
    %v1290 = vsub.f32 %v83, %v1289
    %v1291 = vand.u32 %v1290, 4294901760
    %v1292 = vsub.f32 %v1290, %v1291
    %v1293 = vand.u32 %v1292, 4294901760
    %1294 = vmatpush1.msra.mxu0 %v1293
    %1295 = vmatprep.subr.mxu0 0.0
    %v1296 = vand.u32 %v82, 4294901760
    %v1297 = vsub.f32 %v82, %v1296
    %v1298 = vand.u32 %v1297, 4294901760
    %v1299 = vsub.f32 %v1297, %v1298
    %v1300 = vand.u32 %v1299, 4294901760
    %1301 = vmatpush1.msra.mxu0 %v1300
    %1302 = vmatprep.subr.mxu0 0.0
    %v1303 = vand.u32 %v81, 4294901760
    %v1304 = vsub.f32 %v81, %v1303
    %v1305 = vand.u32 %v1304, 4294901760
    %v1306 = vsub.f32 %v1304, %v1305
    %v1307 = vand.u32 %v1306, 4294901760
    %1308 = vmatpush1.msra.mxu0 %v1307
    %1309 = vmatprep.subr.mxu0 0.0
    %v1310 = vand.u32 %v80, 4294901760
    %v1311 = vsub.f32 %v80, %v1310
    %v1312 = vand.u32 %v1311, 4294901760
    %v1313 = vsub.f32 %v1311, %v1312
    %v1314 = vand.u32 %v1313, 4294901760
    %1315 = vmatpush1.msra.mxu0 %v1314
    %1316 = vmatprep.subr.mxu0 0.0
    %v1317 = vand.u32 %v79, 4294901760
    %v1318 = vsub.f32 %v79, %v1317
    %v1319 = vand.u32 %v1318, 4294901760
    %v1320 = vsub.f32 %v1318, %v1319
    %v1321 = vand.u32 %v1320, 4294901760
    %1322 = vmatpush1.msra.mxu0 %v1321
    %1323 = vmatprep.subr.mxu0 0.0
    %v1324 = vand.u32 %v78, 4294901760
    %v1325 = vsub.f32 %v78, %v1324
    %v1326 = vand.u32 %v1325, 4294901760
    %v1327 = vsub.f32 %v1325, %v1326
    %v1328 = vand.u32 %v1327, 4294901760
    %1329 = vmatpush1.msra.mxu0 %v1328
    %1330 = vmatprep.subr.mxu0 0.0
    %v1331 = vand.u32 %v77, 4294901760
    %v1332 = vsub.f32 %v77, %v1331
    %v1333 = vand.u32 %v1332, 4294901760
    %v1334 = vsub.f32 %v1332, %v1333
    %v1335 = vand.u32 %v1334, 4294901760
    %1336 = vmatpush1.msra.mxu0 %v1335
    %1337 = vmatprep.subr.mxu0 0.0
    %v1338 = vand.u32 %v76, 4294901760
    %v1339 = vsub.f32 %v76, %v1338
    %v1340 = vand.u32 %v1339, 4294901760
    %v1341 = vsub.f32 %v1339, %v1340
    %v1342 = vand.u32 %v1341, 4294901760
    %1343 = vmatpush1.msra.mxu0 %v1342
    %1344 = vmatprep.subr.mxu0 0.0
    %v1345 = vand.u32 %v107, 4294901760
    %v1346 = vsub.f32 %v107, %v1345
    %v1347 = vand.u32 %v1346, 4294901760
    %v1348 = vsub.f32 %v1346, %v1347
    %v1349 = vand.u32 %v1348, 4294901760
    %1350 = vmatpush2.msra.mxu0 %v1349
    %1351 = vmatprep.subr.mxu0 0.0
    %v1352 = vand.u32 %v106, 4294901760
    %v1353 = vsub.f32 %v106, %v1352
    %v1354 = vand.u32 %v1353, 4294901760
    %v1355 = vsub.f32 %v1353, %v1354
    %v1356 = vand.u32 %v1355, 4294901760
    %1357 = vmatpush2.msra.mxu0 %v1356
    %1358 = vmatprep.subr.mxu0 0.0
    %v1359 = vand.u32 %v105, 4294901760
    %v1360 = vsub.f32 %v105, %v1359
    %v1361 = vand.u32 %v1360, 4294901760
    %v1362 = vsub.f32 %v1360, %v1361
    %v1363 = vand.u32 %v1362, 4294901760
    %1364 = vmatpush2.msra.mxu0 %v1363
    %1365 = vmatprep.subr.mxu0 0.0
    %v1366 = vand.u32 %v104, 4294901760
    %v1367 = vsub.f32 %v104, %v1366
    %v1368 = vand.u32 %v1367, 4294901760
    %v1369 = vsub.f32 %v1367, %v1368
    %v1370 = vand.u32 %v1369, 4294901760
    %1371 = vmatpush2.msra.mxu0 %v1370
    %1372 = vmatprep.subr.mxu0 0.0
    %v1373 = vand.u32 %v103, 4294901760
    %v1374 = vsub.f32 %v103, %v1373
    %v1375 = vand.u32 %v1374, 4294901760
    %v1376 = vsub.f32 %v1374, %v1375
    %v1377 = vand.u32 %v1376, 4294901760
    %1378 = vmatpush2.msra.mxu0 %v1377
    %1379 = vmatprep.subr.mxu0 0.0
    %v1380 = vand.u32 %v102, 4294901760
    %v1381 = vsub.f32 %v102, %v1380
    %v1382 = vand.u32 %v1381, 4294901760
    %v1383 = vsub.f32 %v1381, %v1382
    %v1384 = vand.u32 %v1383, 4294901760
    %1385 = vmatpush2.msra.mxu0 %v1384
    %1386 = vmatprep.subr.mxu0 0.0
    %v1387 = vand.u32 %v101, 4294901760
    %v1388 = vsub.f32 %v101, %v1387
    %v1389 = vand.u32 %v1388, 4294901760
    %v1390 = vsub.f32 %v1388, %v1389
    %v1391 = vand.u32 %v1390, 4294901760
    %1392 = vmatpush2.msra.mxu0 %v1391
    %1393 = vmatprep.subr.mxu0 0.0
    %v1394 = vand.u32 %v100, 4294901760
    %v1395 = vsub.f32 %v100, %v1394
    %v1396 = vand.u32 %v1395, 4294901760
    %v1397 = vsub.f32 %v1395, %v1396
    %v1398 = vand.u32 %v1397, 4294901760
    %1399 = vmatpush2.msra.mxu0 %v1398
    %1400 = vmatprep.subr.mxu0 0.0
    %v1401 = vand.u32 %v99, 4294901760
    %v1402 = vsub.f32 %v99, %v1401
    %v1403 = vand.u32 %v1402, 4294901760
    %v1404 = vsub.f32 %v1402, %v1403
    %v1405 = vand.u32 %v1404, 4294901760
    %1406 = vmatpush2.msra.mxu0 %v1405
    %1407 = vmatprep.subr.mxu0 0.0
    %v1408 = vand.u32 %v98, 4294901760
    %v1409 = vsub.f32 %v98, %v1408
    %v1410 = vand.u32 %v1409, 4294901760
    %v1411 = vsub.f32 %v1409, %v1410
    %v1412 = vand.u32 %v1411, 4294901760
    %1413 = vmatpush2.msra.mxu0 %v1412
    %1414 = vmatprep.subr.mxu0 0.0
    %v1415 = vand.u32 %v97, 4294901760
    %v1416 = vsub.f32 %v97, %v1415
    %v1417 = vand.u32 %v1416, 4294901760
    %v1418 = vsub.f32 %v1416, %v1417
    %v1419 = vand.u32 %v1418, 4294901760
    %1420 = vmatpush2.msra.mxu0 %v1419
    %1421 = vmatprep.subr.mxu0 0.0
    %v1422 = vand.u32 %v96, 4294901760
    %v1423 = vsub.f32 %v96, %v1422
    %v1424 = vand.u32 %v1423, 4294901760
    %v1425 = vsub.f32 %v1423, %v1424
    %v1426 = vand.u32 %v1425, 4294901760
    %1427 = vmatpush2.msra.mxu0 %v1426
    %1428 = vmatprep.subr.mxu0 0.0
    %v1429 = vand.u32 %v95, 4294901760
    %v1430 = vsub.f32 %v95, %v1429
    %v1431 = vand.u32 %v1430, 4294901760
    %v1432 = vsub.f32 %v1430, %v1431
    %v1433 = vand.u32 %v1432, 4294901760
    %1434 = vmatpush2.msra.mxu0 %v1433
    %1435 = vmatprep.subr.mxu0 0.0
    %v1436 = vand.u32 %v94, 4294901760
    %v1437 = vsub.f32 %v94, %v1436
    %v1438 = vand.u32 %v1437, 4294901760
    %v1439 = vsub.f32 %v1437, %v1438
    %v1440 = vand.u32 %v1439, 4294901760
    %1441 = vmatpush2.msra.mxu0 %v1440
    %1442 = vmatprep.subr.mxu0 0.0
    %v1443 = vand.u32 %v93, 4294901760
    %v1444 = vsub.f32 %v93, %v1443
    %v1445 = vand.u32 %v1444, 4294901760
    %v1446 = vsub.f32 %v1444, %v1445
    %v1447 = vand.u32 %v1446, 4294901760
    %1448 = vmatpush2.msra.mxu0 %v1447
    %1449 = vmatprep.subr.mxu0 0.0
    %v1450 = vand.u32 %v92, 4294901760
    %v1451 = vsub.f32 %v92, %v1450
    %v1452 = vand.u32 %v1451, 4294901760
    %v1453 = vsub.f32 %v1451, %v1452
    %v1454 = vand.u32 %v1453, 4294901760
    %1455 = vmatpush2.msra.mxu0 %v1454
    %v1456 = vand.u32 %v223, 4294901760
    %1457 = vmatprep.mubr.f32.mxu0 %v1456
    %v1458 = vand.u32 %v219, 4294901760
    %1459 = vmatmul.mubr.f32.gmra.mxu0 %v1458
    %v1460 = vpop.f32.mrf.mxu0
    %v1461 = vadd.f32 %v1229, %v1460
    %v1462 = vpop.f32.mrf.mxu0
    %1463 = vdwg.mxu0
    %1464 = vmatprep.subr.mxu0 0.0
    %v1465 = vand.u32 %v91, 4294901760
    %v1466 = vsub.f32 %v91, %v1465
    %1467 = vmatpush1.msra.mxu0 %v1466
    %1468 = vmatprep.subr.mxu0 0.0
    %v1469 = vand.u32 %v90, 4294901760
    %v1470 = vsub.f32 %v90, %v1469
    %1471 = vmatpush1.msra.mxu0 %v1470
    %1472 = vmatprep.subr.mxu0 0.0
    %v1473 = vand.u32 %v89, 4294901760
    %v1474 = vsub.f32 %v89, %v1473
    %1475 = vmatpush1.msra.mxu0 %v1474
    %1476 = vmatprep.subr.mxu0 0.0
    %v1477 = vand.u32 %v88, 4294901760
    %v1478 = vsub.f32 %v88, %v1477
    %1479 = vmatpush1.msra.mxu0 %v1478
    %1480 = vmatprep.subr.mxu0 0.0
    %v1481 = vand.u32 %v87, 4294901760
    %v1482 = vsub.f32 %v87, %v1481
    %1483 = vmatpush1.msra.mxu0 %v1482
    %1484 = vmatprep.subr.mxu0 0.0
    %v1485 = vand.u32 %v86, 4294901760
    %v1486 = vsub.f32 %v86, %v1485
    %1487 = vmatpush1.msra.mxu0 %v1486
    %1488 = vmatprep.subr.mxu0 0.0
    %v1489 = vand.u32 %v85, 4294901760
    %v1490 = vsub.f32 %v85, %v1489
    %1491 = vmatpush1.msra.mxu0 %v1490
    %1492 = vmatprep.subr.mxu0 0.0
    %v1493 = vand.u32 %v84, 4294901760
    %v1494 = vsub.f32 %v84, %v1493
    %1495 = vmatpush1.msra.mxu0 %v1494
    %1496 = vmatprep.subr.mxu0 0.0
    %v1497 = vand.u32 %v83, 4294901760
    %v1498 = vsub.f32 %v83, %v1497
    %1499 = vmatpush1.msra.mxu0 %v1498
    %1500 = vmatprep.subr.mxu0 0.0
    %v1501 = vand.u32 %v82, 4294901760
    %v1502 = vsub.f32 %v82, %v1501
    %1503 = vmatpush1.msra.mxu0 %v1502
    %1504 = vmatprep.subr.mxu0 0.0
    %v1505 = vand.u32 %v81, 4294901760
    %v1506 = vsub.f32 %v81, %v1505
    %1507 = vmatpush1.msra.mxu0 %v1506
    %1508 = vmatprep.subr.mxu0 0.0
    %v1509 = vand.u32 %v80, 4294901760
    %v1510 = vsub.f32 %v80, %v1509
    %1511 = vmatpush1.msra.mxu0 %v1510
    %1512 = vmatprep.subr.mxu0 0.0
    %v1513 = vand.u32 %v79, 4294901760
    %v1514 = vsub.f32 %v79, %v1513
    %1515 = vmatpush1.msra.mxu0 %v1514
    %1516 = vmatprep.subr.mxu0 0.0
    %v1517 = vand.u32 %v78, 4294901760
    %v1518 = vsub.f32 %v78, %v1517
    %1519 = vmatpush1.msra.mxu0 %v1518
    %1520 = vmatprep.subr.mxu0 0.0
    %v1521 = vand.u32 %v77, 4294901760
    %v1522 = vsub.f32 %v77, %v1521
    %1523 = vmatpush1.msra.mxu0 %v1522
    %1524 = vmatprep.subr.mxu0 0.0
    %v1525 = vand.u32 %v76, 4294901760
    %v1526 = vsub.f32 %v76, %v1525
    %1527 = vmatpush1.msra.mxu0 %v1526
    %1528 = vmatprep.subr.mxu0 0.0
    %v1529 = vand.u32 %v107, 4294901760
    %v1530 = vsub.f32 %v107, %v1529
    %1531 = vmatpush2.msra.mxu0 %v1530
    %1532 = vmatprep.subr.mxu0 0.0
    %v1533 = vand.u32 %v106, 4294901760
    %v1534 = vsub.f32 %v106, %v1533
    %1535 = vmatpush2.msra.mxu0 %v1534
    %1536 = vmatprep.subr.mxu0 0.0
    %v1537 = vand.u32 %v105, 4294901760
    %v1538 = vsub.f32 %v105, %v1537
    %1539 = vmatpush2.msra.mxu0 %v1538
    %1540 = vmatprep.subr.mxu0 0.0
    %v1541 = vand.u32 %v104, 4294901760
    %v1542 = vsub.f32 %v104, %v1541
    %1543 = vmatpush2.msra.mxu0 %v1542
    %1544 = vmatprep.subr.mxu0 0.0
    %v1545 = vand.u32 %v103, 4294901760
    %v1546 = vsub.f32 %v103, %v1545
    %1547 = vmatpush2.msra.mxu0 %v1546
    %1548 = vmatprep.subr.mxu0 0.0
    %v1549 = vand.u32 %v102, 4294901760
    %v1550 = vsub.f32 %v102, %v1549
    %1551 = vmatpush2.msra.mxu0 %v1550
    %1552 = vmatprep.subr.mxu0 0.0
    %v1553 = vand.u32 %v101, 4294901760
    %v1554 = vsub.f32 %v101, %v1553
    %1555 = vmatpush2.msra.mxu0 %v1554
    %1556 = vmatprep.subr.mxu0 0.0
    %v1557 = vand.u32 %v100, 4294901760
    %v1558 = vsub.f32 %v100, %v1557
    %1559 = vmatpush2.msra.mxu0 %v1558
    %1560 = vmatprep.subr.mxu0 0.0
    %v1561 = vand.u32 %v99, 4294901760
    %v1562 = vsub.f32 %v99, %v1561
    %1563 = vmatpush2.msra.mxu0 %v1562
    %1564 = vmatprep.subr.mxu0 0.0
    %v1565 = vand.u32 %v98, 4294901760
    %v1566 = vsub.f32 %v98, %v1565
    %1567 = vmatpush2.msra.mxu0 %v1566
    %1568 = vmatprep.subr.mxu0 0.0
    %v1569 = vand.u32 %v97, 4294901760
    %v1570 = vsub.f32 %v97, %v1569
    %1571 = vmatpush2.msra.mxu0 %v1570
    %1572 = vmatprep.subr.mxu0 0.0
    %v1573 = vand.u32 %v96, 4294901760
    %v1574 = vsub.f32 %v96, %v1573
    %1575 = vmatpush2.msra.mxu0 %v1574
    %1576 = vmatprep.subr.mxu0 0.0
    %v1577 = vand.u32 %v95, 4294901760
    %v1578 = vsub.f32 %v95, %v1577
    %1579 = vmatpush2.msra.mxu0 %v1578
    %1580 = vmatprep.subr.mxu0 0.0
    %v1581 = vand.u32 %v94, 4294901760
    %v1582 = vsub.f32 %v94, %v1581
    %1583 = vmatpush2.msra.mxu0 %v1582
    %1584 = vmatprep.subr.mxu0 0.0
    %v1585 = vand.u32 %v93, 4294901760
    %v1586 = vsub.f32 %v93, %v1585
    %1587 = vmatpush2.msra.mxu0 %v1586
    %1588 = vmatprep.subr.mxu0 0.0
    %v1589 = vand.u32 %v92, 4294901760
    %v1590 = vsub.f32 %v92, %v1589
    %1591 = vmatpush2.msra.mxu0 %v1590
    %v1592 = vand.u32 %v223, 4294901760
    %v1593 = vsub.f32 %v223, %v1592
    %1594 = vmatprep.mubr.f32.mxu0 %v1593
    %v1595 = vand.u32 %v219, 4294901760
    %v1596 = vsub.f32 %v219, %v1595
    %1597 = vmatmul.mubr.f32.gmra.mxu0 %v1596
    %v1598 = vpop.f32.mrf.mxu0
    %v1599 = vadd.f32 %v1461, %v1598
    %v1600 = vpop.f32.mrf.mxu0
    %1601 = vdwg.mxu0
    %1602 = vmatprep.subr.mxu0 0.0
    %v1603 = vand.u32 %v91, 4294901760
    %1604 = vmatpush1.msra.mxu0 %v1603
    %1605 = vmatprep.subr.mxu0 0.0
    %v1606 = vand.u32 %v90, 4294901760
    %1607 = vmatpush1.msra.mxu0 %v1606
    %1608 = vmatprep.subr.mxu0 0.0
    %v1609 = vand.u32 %v89, 4294901760
    %1610 = vmatpush1.msra.mxu0 %v1609
    %1611 = vmatprep.subr.mxu0 0.0
    %v1612 = vand.u32 %v88, 4294901760
    %1613 = vmatpush1.msra.mxu0 %v1612
    %1614 = vmatprep.subr.mxu0 0.0
    %v1615 = vand.u32 %v87, 4294901760
    %1616 = vmatpush1.msra.mxu0 %v1615
    %1617 = vmatprep.subr.mxu0 0.0
    %v1618 = vand.u32 %v86, 4294901760
    %1619 = vmatpush1.msra.mxu0 %v1618
    %1620 = vmatprep.subr.mxu0 0.0
    %v1621 = vand.u32 %v85, 4294901760
    %1622 = vmatpush1.msra.mxu0 %v1621
    %1623 = vmatprep.subr.mxu0 0.0
    %v1624 = vand.u32 %v84, 4294901760
    %1625 = vmatpush1.msra.mxu0 %v1624
    %1626 = vmatprep.subr.mxu0 0.0
    %v1627 = vand.u32 %v83, 4294901760
    %1628 = vmatpush1.msra.mxu0 %v1627
    %1629 = vmatprep.subr.mxu0 0.0
    %v1630 = vand.u32 %v82, 4294901760
    %1631 = vmatpush1.msra.mxu0 %v1630
    %1632 = vmatprep.subr.mxu0 0.0
    %v1633 = vand.u32 %v81, 4294901760
    %1634 = vmatpush1.msra.mxu0 %v1633
    %1635 = vmatprep.subr.mxu0 0.0
    %v1636 = vand.u32 %v80, 4294901760
    %1637 = vmatpush1.msra.mxu0 %v1636
    %1638 = vmatprep.subr.mxu0 0.0
    %v1639 = vand.u32 %v79, 4294901760
    %1640 = vmatpush1.msra.mxu0 %v1639
    %1641 = vmatprep.subr.mxu0 0.0
    %v1642 = vand.u32 %v78, 4294901760
    %1643 = vmatpush1.msra.mxu0 %v1642
    %1644 = vmatprep.subr.mxu0 0.0
    %v1645 = vand.u32 %v77, 4294901760
    %1646 = vmatpush1.msra.mxu0 %v1645
    %1647 = vmatprep.subr.mxu0 0.0
    %v1648 = vand.u32 %v76, 4294901760
    %1649 = vmatpush1.msra.mxu0 %v1648
    %1650 = vmatprep.subr.mxu0 0.0
    %v1651 = vand.u32 %v107, 4294901760
    %1652 = vmatpush2.msra.mxu0 %v1651
    %1653 = vmatprep.subr.mxu0 0.0
    %v1654 = vand.u32 %v106, 4294901760
    %1655 = vmatpush2.msra.mxu0 %v1654
    %1656 = vmatprep.subr.mxu0 0.0
    %v1657 = vand.u32 %v105, 4294901760
    %1658 = vmatpush2.msra.mxu0 %v1657
    %1659 = vmatprep.subr.mxu0 0.0
    %v1660 = vand.u32 %v104, 4294901760
    %1661 = vmatpush2.msra.mxu0 %v1660
    %1662 = vmatprep.subr.mxu0 0.0
    %v1663 = vand.u32 %v103, 4294901760
    %1664 = vmatpush2.msra.mxu0 %v1663
    %1665 = vmatprep.subr.mxu0 0.0
    %v1666 = vand.u32 %v102, 4294901760
    %1667 = vmatpush2.msra.mxu0 %v1666
    %1668 = vmatprep.subr.mxu0 0.0
    %v1669 = vand.u32 %v101, 4294901760
    %1670 = vmatpush2.msra.mxu0 %v1669
    %1671 = vmatprep.subr.mxu0 0.0
    %v1672 = vand.u32 %v100, 4294901760
    %1673 = vmatpush2.msra.mxu0 %v1672
    %1674 = vmatprep.subr.mxu0 0.0
    %v1675 = vand.u32 %v99, 4294901760
    %1676 = vmatpush2.msra.mxu0 %v1675
    %1677 = vmatprep.subr.mxu0 0.0
    %v1678 = vand.u32 %v98, 4294901760
    %1679 = vmatpush2.msra.mxu0 %v1678
    %1680 = vmatprep.subr.mxu0 0.0
    %v1681 = vand.u32 %v97, 4294901760
    %1682 = vmatpush2.msra.mxu0 %v1681
    %1683 = vmatprep.subr.mxu0 0.0
    %v1684 = vand.u32 %v96, 4294901760
    %1685 = vmatpush2.msra.mxu0 %v1684
    %1686 = vmatprep.subr.mxu0 0.0
    %v1687 = vand.u32 %v95, 4294901760
    %1688 = vmatpush2.msra.mxu0 %v1687
    %1689 = vmatprep.subr.mxu0 0.0
    %v1690 = vand.u32 %v94, 4294901760
    %1691 = vmatpush2.msra.mxu0 %v1690
    %1692 = vmatprep.subr.mxu0 0.0
    %v1693 = vand.u32 %v93, 4294901760
    %1694 = vmatpush2.msra.mxu0 %v1693
    %1695 = vmatprep.subr.mxu0 0.0
    %v1696 = vand.u32 %v92, 4294901760
    %1697 = vmatpush2.msra.mxu0 %v1696
    %v1698 = vand.u32 %v223, 4294901760
    %v1699 = vsub.f32 %v223, %v1698
    %v1700 = vand.u32 %v1699, 4294901760
    %1701 = vmatprep.mubr.f32.mxu0 %v1700
    %v1702 = vand.u32 %v219, 4294901760
    %v1703 = vsub.f32 %v219, %v1702
    %v1704 = vand.u32 %v1703, 4294901760
    %1705 = vmatmul.mubr.f32.gmra.mxu0 %v1704
    %v1706 = vpop.f32.mrf.mxu0
    %v1707 = vadd.f32 %v1599, %v1706
    %v1708 = vpop.f32.mrf.mxu0
    %1709 = vdwg.mxu0
    %1710 = vmatprep.subr.mxu0 0.0
    %v1711 = vand.u32 %v91, 4294901760
    %v1712 = vsub.f32 %v91, %v1711
    %v1713 = vand.u32 %v1712, 4294901760
    %1714 = vmatpush1.msra.mxu0 %v1713
    %1715 = vmatprep.subr.mxu0 0.0
    %v1716 = vand.u32 %v90, 4294901760
    %v1717 = vsub.f32 %v90, %v1716
    %v1718 = vand.u32 %v1717, 4294901760
    %1719 = vmatpush1.msra.mxu0 %v1718
    %1720 = vmatprep.subr.mxu0 0.0
    %v1721 = vand.u32 %v89, 4294901760
    %v1722 = vsub.f32 %v89, %v1721
    %v1723 = vand.u32 %v1722, 4294901760
    %1724 = vmatpush1.msra.mxu0 %v1723
    %1725 = vmatprep.subr.mxu0 0.0
    %v1726 = vand.u32 %v88, 4294901760
    %v1727 = vsub.f32 %v88, %v1726
    %v1728 = vand.u32 %v1727, 4294901760
    %1729 = vmatpush1.msra.mxu0 %v1728
    %1730 = vmatprep.subr.mxu0 0.0
    %v1731 = vand.u32 %v87, 4294901760
    %v1732 = vsub.f32 %v87, %v1731
    %v1733 = vand.u32 %v1732, 4294901760
    %1734 = vmatpush1.msra.mxu0 %v1733
    %1735 = vmatprep.subr.mxu0 0.0
    %v1736 = vand.u32 %v86, 4294901760
    %v1737 = vsub.f32 %v86, %v1736
    %v1738 = vand.u32 %v1737, 4294901760
    %1739 = vmatpush1.msra.mxu0 %v1738
    %1740 = vmatprep.subr.mxu0 0.0
    %v1741 = vand.u32 %v85, 4294901760
    %v1742 = vsub.f32 %v85, %v1741
    %v1743 = vand.u32 %v1742, 4294901760
    %1744 = vmatpush1.msra.mxu0 %v1743
    %1745 = vmatprep.subr.mxu0 0.0
    %v1746 = vand.u32 %v84, 4294901760
    %v1747 = vsub.f32 %v84, %v1746
    %v1748 = vand.u32 %v1747, 4294901760
    %1749 = vmatpush1.msra.mxu0 %v1748
    %1750 = vmatprep.subr.mxu0 0.0
    %v1751 = vand.u32 %v83, 4294901760
    %v1752 = vsub.f32 %v83, %v1751
    %v1753 = vand.u32 %v1752, 4294901760
    %1754 = vmatpush1.msra.mxu0 %v1753
    %1755 = vmatprep.subr.mxu0 0.0
    %v1756 = vand.u32 %v82, 4294901760
    %v1757 = vsub.f32 %v82, %v1756
    %v1758 = vand.u32 %v1757, 4294901760
    %1759 = vmatpush1.msra.mxu0 %v1758
    %1760 = vmatprep.subr.mxu0 0.0
    %v1761 = vand.u32 %v81, 4294901760
    %v1762 = vsub.f32 %v81, %v1761
    %v1763 = vand.u32 %v1762, 4294901760
    %1764 = vmatpush1.msra.mxu0 %v1763
    %1765 = vmatprep.subr.mxu0 0.0
    %v1766 = vand.u32 %v80, 4294901760
    %v1767 = vsub.f32 %v80, %v1766
    %v1768 = vand.u32 %v1767, 4294901760
    %1769 = vmatpush1.msra.mxu0 %v1768
    %1770 = vmatprep.subr.mxu0 0.0
    %v1771 = vand.u32 %v79, 4294901760
    %v1772 = vsub.f32 %v79, %v1771
    %v1773 = vand.u32 %v1772, 4294901760
    %1774 = vmatpush1.msra.mxu0 %v1773
    %1775 = vmatprep.subr.mxu0 0.0
    %v1776 = vand.u32 %v78, 4294901760
    %v1777 = vsub.f32 %v78, %v1776
    %v1778 = vand.u32 %v1777, 4294901760
    %1779 = vmatpush1.msra.mxu0 %v1778
    %1780 = vmatprep.subr.mxu0 0.0
    %v1781 = vand.u32 %v77, 4294901760
    %v1782 = vsub.f32 %v77, %v1781
    %v1783 = vand.u32 %v1782, 4294901760
    %1784 = vmatpush1.msra.mxu0 %v1783
    %1785 = vmatprep.subr.mxu0 0.0
    %v1786 = vand.u32 %v76, 4294901760
    %v1787 = vsub.f32 %v76, %v1786
    %v1788 = vand.u32 %v1787, 4294901760
    %1789 = vmatpush1.msra.mxu0 %v1788
    %1790 = vmatprep.subr.mxu0 0.0
    %v1791 = vand.u32 %v107, 4294901760
    %v1792 = vsub.f32 %v107, %v1791
    %v1793 = vand.u32 %v1792, 4294901760
    %1794 = vmatpush2.msra.mxu0 %v1793
    %1795 = vmatprep.subr.mxu0 0.0
    %v1796 = vand.u32 %v106, 4294901760
    %v1797 = vsub.f32 %v106, %v1796
    %v1798 = vand.u32 %v1797, 4294901760
    %1799 = vmatpush2.msra.mxu0 %v1798
    %1800 = vmatprep.subr.mxu0 0.0
    %v1801 = vand.u32 %v105, 4294901760
    %v1802 = vsub.f32 %v105, %v1801
    %v1803 = vand.u32 %v1802, 4294901760
    %1804 = vmatpush2.msra.mxu0 %v1803
    %1805 = vmatprep.subr.mxu0 0.0
    %v1806 = vand.u32 %v104, 4294901760
    %v1807 = vsub.f32 %v104, %v1806
    %v1808 = vand.u32 %v1807, 4294901760
    %1809 = vmatpush2.msra.mxu0 %v1808
    %1810 = vmatprep.subr.mxu0 0.0
    %v1811 = vand.u32 %v103, 4294901760
    %v1812 = vsub.f32 %v103, %v1811
    %v1813 = vand.u32 %v1812, 4294901760
    %1814 = vmatpush2.msra.mxu0 %v1813
    %1815 = vmatprep.subr.mxu0 0.0
    %v1816 = vand.u32 %v102, 4294901760
    %v1817 = vsub.f32 %v102, %v1816
    %v1818 = vand.u32 %v1817, 4294901760
    %1819 = vmatpush2.msra.mxu0 %v1818
    %1820 = vmatprep.subr.mxu0 0.0
    %v1821 = vand.u32 %v101, 4294901760
    %v1822 = vsub.f32 %v101, %v1821
    %v1823 = vand.u32 %v1822, 4294901760
    %1824 = vmatpush2.msra.mxu0 %v1823
    %1825 = vmatprep.subr.mxu0 0.0
    %v1826 = vand.u32 %v100, 4294901760
    %v1827 = vsub.f32 %v100, %v1826
    %v1828 = vand.u32 %v1827, 4294901760
    %1829 = vmatpush2.msra.mxu0 %v1828
    %1830 = vmatprep.subr.mxu0 0.0
    %v1831 = vand.u32 %v99, 4294901760
    %v1832 = vsub.f32 %v99, %v1831
    %v1833 = vand.u32 %v1832, 4294901760
    %1834 = vmatpush2.msra.mxu0 %v1833
    %1835 = vmatprep.subr.mxu0 0.0
    %v1836 = vand.u32 %v98, 4294901760
    %v1837 = vsub.f32 %v98, %v1836
    %v1838 = vand.u32 %v1837, 4294901760
    %1839 = vmatpush2.msra.mxu0 %v1838
    %1840 = vmatprep.subr.mxu0 0.0
    %v1841 = vand.u32 %v97, 4294901760
    %v1842 = vsub.f32 %v97, %v1841
    %v1843 = vand.u32 %v1842, 4294901760
    %1844 = vmatpush2.msra.mxu0 %v1843
    %1845 = vmatprep.subr.mxu0 0.0
    %v1846 = vand.u32 %v96, 4294901760
    %v1847 = vsub.f32 %v96, %v1846
    %v1848 = vand.u32 %v1847, 4294901760
    %1849 = vmatpush2.msra.mxu0 %v1848
    %1850 = vmatprep.subr.mxu0 0.0
    %v1851 = vand.u32 %v95, 4294901760
    %v1852 = vsub.f32 %v95, %v1851
    %v1853 = vand.u32 %v1852, 4294901760
    %1854 = vmatpush2.msra.mxu0 %v1853
    %1855 = vmatprep.subr.mxu0 0.0
    %v1856 = vand.u32 %v94, 4294901760
    %v1857 = vsub.f32 %v94, %v1856
    %v1858 = vand.u32 %v1857, 4294901760
    %1859 = vmatpush2.msra.mxu0 %v1858
    %1860 = vmatprep.subr.mxu0 0.0
    %v1861 = vand.u32 %v93, 4294901760
    %v1862 = vsub.f32 %v93, %v1861
    %v1863 = vand.u32 %v1862, 4294901760
    %1864 = vmatpush2.msra.mxu0 %v1863
    %1865 = vmatprep.subr.mxu0 0.0
    %v1866 = vand.u32 %v92, 4294901760
    %v1867 = vsub.f32 %v92, %v1866
    %v1868 = vand.u32 %v1867, 4294901760
    %1869 = vmatpush2.msra.mxu0 %v1868
    %v1870 = vand.u32 %v223, 4294901760
    %1871 = vmatprep.mubr.f32.mxu0 %v1870
    %v1872 = vand.u32 %v219, 4294901760
    %1873 = vmatmul.mubr.f32.gmra.mxu0 %v1872
    %v1874 = vpop.f32.mrf.mxu0
    %v1875 = vadd.f32 %v1707, %v1874
    %v1876 = vpop.f32.mrf.mxu0
    %1877 = vdwg.mxu0
    %1878 = vmatprep.subr.mxu0 0.0
    %v1879 = vand.u32 %v91, 4294901760
    %1880 = vmatpush1.msra.mxu0 %v1879
    %1881 = vmatprep.subr.mxu0 0.0
    %v1882 = vand.u32 %v90, 4294901760
    %1883 = vmatpush1.msra.mxu0 %v1882
    %1884 = vmatprep.subr.mxu0 0.0
    %v1885 = vand.u32 %v89, 4294901760
    %1886 = vmatpush1.msra.mxu0 %v1885
    %1887 = vmatprep.subr.mxu0 0.0
    %v1888 = vand.u32 %v88, 4294901760
    %1889 = vmatpush1.msra.mxu0 %v1888
    %1890 = vmatprep.subr.mxu0 0.0
    %v1891 = vand.u32 %v87, 4294901760
    %1892 = vmatpush1.msra.mxu0 %v1891
    %1893 = vmatprep.subr.mxu0 0.0
    %v1894 = vand.u32 %v86, 4294901760
    %1895 = vmatpush1.msra.mxu0 %v1894
    %1896 = vmatprep.subr.mxu0 0.0
    %v1897 = vand.u32 %v85, 4294901760
    %1898 = vmatpush1.msra.mxu0 %v1897
    %1899 = vmatprep.subr.mxu0 0.0
    %v1900 = vand.u32 %v84, 4294901760
    %1901 = vmatpush1.msra.mxu0 %v1900
    %1902 = vmatprep.subr.mxu0 0.0
    %v1903 = vand.u32 %v83, 4294901760
    %1904 = vmatpush1.msra.mxu0 %v1903
    %1905 = vmatprep.subr.mxu0 0.0
    %v1906 = vand.u32 %v82, 4294901760
    %1907 = vmatpush1.msra.mxu0 %v1906
    %1908 = vmatprep.subr.mxu0 0.0
    %v1909 = vand.u32 %v81, 4294901760
    %1910 = vmatpush1.msra.mxu0 %v1909
    %1911 = vmatprep.subr.mxu0 0.0
    %v1912 = vand.u32 %v80, 4294901760
    %1913 = vmatpush1.msra.mxu0 %v1912
    %1914 = vmatprep.subr.mxu0 0.0
    %v1915 = vand.u32 %v79, 4294901760
    %1916 = vmatpush1.msra.mxu0 %v1915
    %1917 = vmatprep.subr.mxu0 0.0
    %v1918 = vand.u32 %v78, 4294901760
    %1919 = vmatpush1.msra.mxu0 %v1918
    %1920 = vmatprep.subr.mxu0 0.0
    %v1921 = vand.u32 %v77, 4294901760
    %1922 = vmatpush1.msra.mxu0 %v1921
    %1923 = vmatprep.subr.mxu0 0.0
    %v1924 = vand.u32 %v76, 4294901760
    %1925 = vmatpush1.msra.mxu0 %v1924
    %1926 = vmatprep.subr.mxu0 0.0
    %v1927 = vand.u32 %v107, 4294901760
    %1928 = vmatpush2.msra.mxu0 %v1927
    %1929 = vmatprep.subr.mxu0 0.0
    %v1930 = vand.u32 %v106, 4294901760
    %1931 = vmatpush2.msra.mxu0 %v1930
    %1932 = vmatprep.subr.mxu0 0.0
    %v1933 = vand.u32 %v105, 4294901760
    %1934 = vmatpush2.msra.mxu0 %v1933
    %1935 = vmatprep.subr.mxu0 0.0
    %v1936 = vand.u32 %v104, 4294901760
    %1937 = vmatpush2.msra.mxu0 %v1936
    %1938 = vmatprep.subr.mxu0 0.0
    %v1939 = vand.u32 %v103, 4294901760
    %1940 = vmatpush2.msra.mxu0 %v1939
    %1941 = vmatprep.subr.mxu0 0.0
    %v1942 = vand.u32 %v102, 4294901760
    %1943 = vmatpush2.msra.mxu0 %v1942
    %1944 = vmatprep.subr.mxu0 0.0
    %v1945 = vand.u32 %v101, 4294901760
    %1946 = vmatpush2.msra.mxu0 %v1945
    %1947 = vmatprep.subr.mxu0 0.0
    %v1948 = vand.u32 %v100, 4294901760
    %1949 = vmatpush2.msra.mxu0 %v1948
    %1950 = vmatprep.subr.mxu0 0.0
    %v1951 = vand.u32 %v99, 4294901760
    %1952 = vmatpush2.msra.mxu0 %v1951
    %1953 = vmatprep.subr.mxu0 0.0
    %v1954 = vand.u32 %v98, 4294901760
    %1955 = vmatpush2.msra.mxu0 %v1954
    %1956 = vmatprep.subr.mxu0 0.0
    %v1957 = vand.u32 %v97, 4294901760
    %1958 = vmatpush2.msra.mxu0 %v1957
    %1959 = vmatprep.subr.mxu0 0.0
    %v1960 = vand.u32 %v96, 4294901760
    %1961 = vmatpush2.msra.mxu0 %v1960
    %1962 = vmatprep.subr.mxu0 0.0
    %v1963 = vand.u32 %v95, 4294901760
    %1964 = vmatpush2.msra.mxu0 %v1963
    %1965 = vmatprep.subr.mxu0 0.0
    %v1966 = vand.u32 %v94, 4294901760
    %1967 = vmatpush2.msra.mxu0 %v1966
    %1968 = vmatprep.subr.mxu0 0.0
    %v1969 = vand.u32 %v93, 4294901760
    %1970 = vmatpush2.msra.mxu0 %v1969
    %1971 = vmatprep.subr.mxu0 0.0
    %v1972 = vand.u32 %v92, 4294901760
    %1973 = vmatpush2.msra.mxu0 %v1972
    %v1974 = vand.u32 %v223, 4294901760
    %1975 = vmatprep.mubr.f32.mxu0 %v1974
    %v1976 = vand.u32 %v219, 4294901760
    %1977 = vmatmul.mubr.f32.gmra.mxu0 %v1976
    %v1978 = vpop.f32.mrf.mxu0
    %v1979 = vadd.f32 %v1875, %v1978
    %v1980 = vpop.f32.mrf.mxu0
    %1981 = vdwg.mxu0
    %1982 = vmatprep.subr.mxu0 0.0
    %v1983 = vand.u32 %v123, 4294901760
    %1984 = vmatpush1.msra.mxu0 %v1983
    %1985 = vmatprep.subr.mxu0 0.0
    %v1986 = vand.u32 %v122, 4294901760
    %1987 = vmatpush1.msra.mxu0 %v1986
    %1988 = vmatprep.subr.mxu0 0.0
    %v1989 = vand.u32 %v121, 4294901760
    %1990 = vmatpush1.msra.mxu0 %v1989
    %1991 = vmatprep.subr.mxu0 0.0
    %v1992 = vand.u32 %v120, 4294901760
    %1993 = vmatpush1.msra.mxu0 %v1992
    %1994 = vmatprep.subr.mxu0 0.0
    %v1995 = vand.u32 %v119, 4294901760
    %1996 = vmatpush1.msra.mxu0 %v1995
    %1997 = vmatprep.subr.mxu0 0.0
    %v1998 = vand.u32 %v118, 4294901760
    %1999 = vmatpush1.msra.mxu0 %v1998
    %2000 = vmatprep.subr.mxu0 0.0
    %v2001 = vand.u32 %v117, 4294901760
    %2002 = vmatpush1.msra.mxu0 %v2001
    %2003 = vmatprep.subr.mxu0 0.0
    %v2004 = vand.u32 %v116, 4294901760
    %2005 = vmatpush1.msra.mxu0 %v2004
    %2006 = vmatprep.subr.mxu0 0.0
    %v2007 = vand.u32 %v115, 4294901760
    %2008 = vmatpush1.msra.mxu0 %v2007
    %2009 = vmatprep.subr.mxu0 0.0
    %v2010 = vand.u32 %v114, 4294901760
    %2011 = vmatpush1.msra.mxu0 %v2010
    %2012 = vmatprep.subr.mxu0 0.0
    %v2013 = vand.u32 %v113, 4294901760
    %2014 = vmatpush1.msra.mxu0 %v2013
    %2015 = vmatprep.subr.mxu0 0.0
    %v2016 = vand.u32 %v112, 4294901760
    %2017 = vmatpush1.msra.mxu0 %v2016
    %2018 = vmatprep.subr.mxu0 0.0
    %v2019 = vand.u32 %v111, 4294901760
    %2020 = vmatpush1.msra.mxu0 %v2019
    %2021 = vmatprep.subr.mxu0 0.0
    %v2022 = vand.u32 %v110, 4294901760
    %2023 = vmatpush1.msra.mxu0 %v2022
    %2024 = vmatprep.subr.mxu0 0.0
    %v2025 = vand.u32 %v109, 4294901760
    %2026 = vmatpush1.msra.mxu0 %v2025
    %2027 = vmatprep.subr.mxu0 0.0
    %v2028 = vand.u32 %v108, 4294901760
    %2029 = vmatpush1.msra.mxu0 %v2028
    %2030 = vmatprep.subr.mxu0 0.0
    %v2031 = vand.u32 %v139, 4294901760
    %2032 = vmatpush2.msra.mxu0 %v2031
    %2033 = vmatprep.subr.mxu0 0.0
    %v2034 = vand.u32 %v138, 4294901760
    %2035 = vmatpush2.msra.mxu0 %v2034
    %2036 = vmatprep.subr.mxu0 0.0
    %v2037 = vand.u32 %v137, 4294901760
    %2038 = vmatpush2.msra.mxu0 %v2037
    %2039 = vmatprep.subr.mxu0 0.0
    %v2040 = vand.u32 %v136, 4294901760
    %2041 = vmatpush2.msra.mxu0 %v2040
    %2042 = vmatprep.subr.mxu0 0.0
    %v2043 = vand.u32 %v135, 4294901760
    %2044 = vmatpush2.msra.mxu0 %v2043
    %2045 = vmatprep.subr.mxu0 0.0
    %v2046 = vand.u32 %v134, 4294901760
    %2047 = vmatpush2.msra.mxu0 %v2046
    %2048 = vmatprep.subr.mxu0 0.0
    %v2049 = vand.u32 %v133, 4294901760
    %2050 = vmatpush2.msra.mxu0 %v2049
    %2051 = vmatprep.subr.mxu0 0.0
    %v2052 = vand.u32 %v132, 4294901760
    %2053 = vmatpush2.msra.mxu0 %v2052
    %2054 = vmatprep.subr.mxu0 0.0
    %v2055 = vand.u32 %v131, 4294901760
    %2056 = vmatpush2.msra.mxu0 %v2055
    %2057 = vmatprep.subr.mxu0 0.0
    %v2058 = vand.u32 %v130, 4294901760
    %2059 = vmatpush2.msra.mxu0 %v2058
    %2060 = vmatprep.subr.mxu0 0.0
    %v2061 = vand.u32 %v129, 4294901760
    %2062 = vmatpush2.msra.mxu0 %v2061
    %2063 = vmatprep.subr.mxu0 0.0
    %v2064 = vand.u32 %v128, 4294901760
    %2065 = vmatpush2.msra.mxu0 %v2064
    %2066 = vmatprep.subr.mxu0 0.0
    %v2067 = vand.u32 %v127, 4294901760
    %2068 = vmatpush2.msra.mxu0 %v2067
    %2069 = vmatprep.subr.mxu0 0.0
    %v2070 = vand.u32 %v126, 4294901760
    %2071 = vmatpush2.msra.mxu0 %v2070
    %2072 = vmatprep.subr.mxu0 0.0
    %v2073 = vand.u32 %v125, 4294901760
    %2074 = vmatpush2.msra.mxu0 %v2073
    %2075 = vmatprep.subr.mxu0 0.0
    %v2076 = vand.u32 %v124, 4294901760
    %2077 = vmatpush2.msra.mxu0 %v2076
    %v2078 = vand.u32 %v231, 4294901760
    %v2079 = vsub.f32 %v231, %v2078
    %v2080 = vand.u32 %v2079, 4294901760
    %v2081 = vsub.f32 %v2079, %v2080
    %v2082 = vand.u32 %v2081, 4294901760
    %2083 = vmatprep.mubr.f32.mxu0 %v2082
    %v2084 = vand.u32 %v227, 4294901760
    %v2085 = vsub.f32 %v227, %v2084
    %v2086 = vand.u32 %v2085, 4294901760
    %v2087 = vsub.f32 %v2085, %v2086
    %v2088 = vand.u32 %v2087, 4294901760
    %2089 = vmatmul.mubr.f32.gmra.mxu0 %v2088
    %v2090 = vpop.f32.mrf.mxu0
    %v2091 = vadd.f32 %v1979, %v2090
    %v2092 = vpop.f32.mrf.mxu0
    %2093 = vdwg.mxu0
    %2094 = vmatprep.subr.mxu0 0.0
    %v2095 = vand.u32 %v123, 4294901760
    %v2096 = vsub.f32 %v123, %v2095
    %v2097 = vand.u32 %v2096, 4294901760
    %v2098 = vsub.f32 %v2096, %v2097
    %v2099 = vand.u32 %v2098, 4294901760
    %2100 = vmatpush1.msra.mxu0 %v2099
    %2101 = vmatprep.subr.mxu0 0.0
    %v2102 = vand.u32 %v122, 4294901760
    %v2103 = vsub.f32 %v122, %v2102
    %v2104 = vand.u32 %v2103, 4294901760
    %v2105 = vsub.f32 %v2103, %v2104
    %v2106 = vand.u32 %v2105, 4294901760
    %2107 = vmatpush1.msra.mxu0 %v2106
    %2108 = vmatprep.subr.mxu0 0.0
    %v2109 = vand.u32 %v121, 4294901760
    %v2110 = vsub.f32 %v121, %v2109
    %v2111 = vand.u32 %v2110, 4294901760
    %v2112 = vsub.f32 %v2110, %v2111
    %v2113 = vand.u32 %v2112, 4294901760
    %2114 = vmatpush1.msra.mxu0 %v2113
    %2115 = vmatprep.subr.mxu0 0.0
    %v2116 = vand.u32 %v120, 4294901760
    %v2117 = vsub.f32 %v120, %v2116
    %v2118 = vand.u32 %v2117, 4294901760
    %v2119 = vsub.f32 %v2117, %v2118
    %v2120 = vand.u32 %v2119, 4294901760
    %2121 = vmatpush1.msra.mxu0 %v2120
    %2122 = vmatprep.subr.mxu0 0.0
    %v2123 = vand.u32 %v119, 4294901760
    %v2124 = vsub.f32 %v119, %v2123
    %v2125 = vand.u32 %v2124, 4294901760
    %v2126 = vsub.f32 %v2124, %v2125
    %v2127 = vand.u32 %v2126, 4294901760
    %2128 = vmatpush1.msra.mxu0 %v2127
    %2129 = vmatprep.subr.mxu0 0.0
    %v2130 = vand.u32 %v118, 4294901760
    %v2131 = vsub.f32 %v118, %v2130
    %v2132 = vand.u32 %v2131, 4294901760
    %v2133 = vsub.f32 %v2131, %v2132
    %v2134 = vand.u32 %v2133, 4294901760
    %2135 = vmatpush1.msra.mxu0 %v2134
    %2136 = vmatprep.subr.mxu0 0.0
    %v2137 = vand.u32 %v117, 4294901760
    %v2138 = vsub.f32 %v117, %v2137
    %v2139 = vand.u32 %v2138, 4294901760
    %v2140 = vsub.f32 %v2138, %v2139
    %v2141 = vand.u32 %v2140, 4294901760
    %2142 = vmatpush1.msra.mxu0 %v2141
    %2143 = vmatprep.subr.mxu0 0.0
    %v2144 = vand.u32 %v116, 4294901760
    %v2145 = vsub.f32 %v116, %v2144
    %v2146 = vand.u32 %v2145, 4294901760
    %v2147 = vsub.f32 %v2145, %v2146
    %v2148 = vand.u32 %v2147, 4294901760
    %2149 = vmatpush1.msra.mxu0 %v2148
    %2150 = vmatprep.subr.mxu0 0.0
    %v2151 = vand.u32 %v115, 4294901760
    %v2152 = vsub.f32 %v115, %v2151
    %v2153 = vand.u32 %v2152, 4294901760
    %v2154 = vsub.f32 %v2152, %v2153
    %v2155 = vand.u32 %v2154, 4294901760
    %2156 = vmatpush1.msra.mxu0 %v2155
    %2157 = vmatprep.subr.mxu0 0.0
    %v2158 = vand.u32 %v114, 4294901760
    %v2159 = vsub.f32 %v114, %v2158
    %v2160 = vand.u32 %v2159, 4294901760
    %v2161 = vsub.f32 %v2159, %v2160
    %v2162 = vand.u32 %v2161, 4294901760
    %2163 = vmatpush1.msra.mxu0 %v2162
    %2164 = vmatprep.subr.mxu0 0.0
    %v2165 = vand.u32 %v113, 4294901760
    %v2166 = vsub.f32 %v113, %v2165
    %v2167 = vand.u32 %v2166, 4294901760
    %v2168 = vsub.f32 %v2166, %v2167
    %v2169 = vand.u32 %v2168, 4294901760
    %2170 = vmatpush1.msra.mxu0 %v2169
    %2171 = vmatprep.subr.mxu0 0.0
    %v2172 = vand.u32 %v112, 4294901760
    %v2173 = vsub.f32 %v112, %v2172
    %v2174 = vand.u32 %v2173, 4294901760
    %v2175 = vsub.f32 %v2173, %v2174
    %v2176 = vand.u32 %v2175, 4294901760
    %2177 = vmatpush1.msra.mxu0 %v2176
    %2178 = vmatprep.subr.mxu0 0.0
    %v2179 = vand.u32 %v111, 4294901760
    %v2180 = vsub.f32 %v111, %v2179
    %v2181 = vand.u32 %v2180, 4294901760
    %v2182 = vsub.f32 %v2180, %v2181
    %v2183 = vand.u32 %v2182, 4294901760
    %2184 = vmatpush1.msra.mxu0 %v2183
    %2185 = vmatprep.subr.mxu0 0.0
    %v2186 = vand.u32 %v110, 4294901760
    %v2187 = vsub.f32 %v110, %v2186
    %v2188 = vand.u32 %v2187, 4294901760
    %v2189 = vsub.f32 %v2187, %v2188
    %v2190 = vand.u32 %v2189, 4294901760
    %2191 = vmatpush1.msra.mxu0 %v2190
    %2192 = vmatprep.subr.mxu0 0.0
    %v2193 = vand.u32 %v109, 4294901760
    %v2194 = vsub.f32 %v109, %v2193
    %v2195 = vand.u32 %v2194, 4294901760
    %v2196 = vsub.f32 %v2194, %v2195
    %v2197 = vand.u32 %v2196, 4294901760
    %2198 = vmatpush1.msra.mxu0 %v2197
    %2199 = vmatprep.subr.mxu0 0.0
    %v2200 = vand.u32 %v108, 4294901760
    %v2201 = vsub.f32 %v108, %v2200
    %v2202 = vand.u32 %v2201, 4294901760
    %v2203 = vsub.f32 %v2201, %v2202
    %v2204 = vand.u32 %v2203, 4294901760
    %2205 = vmatpush1.msra.mxu0 %v2204
    %2206 = vmatprep.subr.mxu0 0.0
    %v2207 = vand.u32 %v139, 4294901760
    %v2208 = vsub.f32 %v139, %v2207
    %v2209 = vand.u32 %v2208, 4294901760
    %v2210 = vsub.f32 %v2208, %v2209
    %v2211 = vand.u32 %v2210, 4294901760
    %2212 = vmatpush2.msra.mxu0 %v2211
    %2213 = vmatprep.subr.mxu0 0.0
    %v2214 = vand.u32 %v138, 4294901760
    %v2215 = vsub.f32 %v138, %v2214
    %v2216 = vand.u32 %v2215, 4294901760
    %v2217 = vsub.f32 %v2215, %v2216
    %v2218 = vand.u32 %v2217, 4294901760
    %2219 = vmatpush2.msra.mxu0 %v2218
    %2220 = vmatprep.subr.mxu0 0.0
    %v2221 = vand.u32 %v137, 4294901760
    %v2222 = vsub.f32 %v137, %v2221
    %v2223 = vand.u32 %v2222, 4294901760
    %v2224 = vsub.f32 %v2222, %v2223
    %v2225 = vand.u32 %v2224, 4294901760
    %2226 = vmatpush2.msra.mxu0 %v2225
    %2227 = vmatprep.subr.mxu0 0.0
    %v2228 = vand.u32 %v136, 4294901760
    %v2229 = vsub.f32 %v136, %v2228
    %v2230 = vand.u32 %v2229, 4294901760
    %v2231 = vsub.f32 %v2229, %v2230
    %v2232 = vand.u32 %v2231, 4294901760
    %2233 = vmatpush2.msra.mxu0 %v2232
    %2234 = vmatprep.subr.mxu0 0.0
    %v2235 = vand.u32 %v135, 4294901760
    %v2236 = vsub.f32 %v135, %v2235
    %v2237 = vand.u32 %v2236, 4294901760
    %v2238 = vsub.f32 %v2236, %v2237
    %v2239 = vand.u32 %v2238, 4294901760
    %2240 = vmatpush2.msra.mxu0 %v2239
    %2241 = vmatprep.subr.mxu0 0.0
    %v2242 = vand.u32 %v134, 4294901760
    %v2243 = vsub.f32 %v134, %v2242
    %v2244 = vand.u32 %v2243, 4294901760
    %v2245 = vsub.f32 %v2243, %v2244
    %v2246 = vand.u32 %v2245, 4294901760
    %2247 = vmatpush2.msra.mxu0 %v2246
    %2248 = vmatprep.subr.mxu0 0.0
    %v2249 = vand.u32 %v133, 4294901760
    %v2250 = vsub.f32 %v133, %v2249
    %v2251 = vand.u32 %v2250, 4294901760
    %v2252 = vsub.f32 %v2250, %v2251
    %v2253 = vand.u32 %v2252, 4294901760
    %2254 = vmatpush2.msra.mxu0 %v2253
    %2255 = vmatprep.subr.mxu0 0.0
    %v2256 = vand.u32 %v132, 4294901760
    %v2257 = vsub.f32 %v132, %v2256
    %v2258 = vand.u32 %v2257, 4294901760
    %v2259 = vsub.f32 %v2257, %v2258
    %v2260 = vand.u32 %v2259, 4294901760
    %2261 = vmatpush2.msra.mxu0 %v2260
    %2262 = vmatprep.subr.mxu0 0.0
    %v2263 = vand.u32 %v131, 4294901760
    %v2264 = vsub.f32 %v131, %v2263
    %v2265 = vand.u32 %v2264, 4294901760
    %v2266 = vsub.f32 %v2264, %v2265
    %v2267 = vand.u32 %v2266, 4294901760
    %2268 = vmatpush2.msra.mxu0 %v2267
    %2269 = vmatprep.subr.mxu0 0.0
    %v2270 = vand.u32 %v130, 4294901760
    %v2271 = vsub.f32 %v130, %v2270
    %v2272 = vand.u32 %v2271, 4294901760
    %v2273 = vsub.f32 %v2271, %v2272
    %v2274 = vand.u32 %v2273, 4294901760
    %2275 = vmatpush2.msra.mxu0 %v2274
    %2276 = vmatprep.subr.mxu0 0.0
    %v2277 = vand.u32 %v129, 4294901760
    %v2278 = vsub.f32 %v129, %v2277
    %v2279 = vand.u32 %v2278, 4294901760
    %v2280 = vsub.f32 %v2278, %v2279
    %v2281 = vand.u32 %v2280, 4294901760
    %2282 = vmatpush2.msra.mxu0 %v2281
    %2283 = vmatprep.subr.mxu0 0.0
    %v2284 = vand.u32 %v128, 4294901760
    %v2285 = vsub.f32 %v128, %v2284
    %v2286 = vand.u32 %v2285, 4294901760
    %v2287 = vsub.f32 %v2285, %v2286
    %v2288 = vand.u32 %v2287, 4294901760
    %2289 = vmatpush2.msra.mxu0 %v2288
    %2290 = vmatprep.subr.mxu0 0.0
    %v2291 = vand.u32 %v127, 4294901760
    %v2292 = vsub.f32 %v127, %v2291
    %v2293 = vand.u32 %v2292, 4294901760
    %v2294 = vsub.f32 %v2292, %v2293
    %v2295 = vand.u32 %v2294, 4294901760
    %2296 = vmatpush2.msra.mxu0 %v2295
    %2297 = vmatprep.subr.mxu0 0.0
    %v2298 = vand.u32 %v126, 4294901760
    %v2299 = vsub.f32 %v126, %v2298
    %v2300 = vand.u32 %v2299, 4294901760
    %v2301 = vsub.f32 %v2299, %v2300
    %v2302 = vand.u32 %v2301, 4294901760
    %2303 = vmatpush2.msra.mxu0 %v2302
    %2304 = vmatprep.subr.mxu0 0.0
    %v2305 = vand.u32 %v125, 4294901760
    %v2306 = vsub.f32 %v125, %v2305
    %v2307 = vand.u32 %v2306, 4294901760
    %v2308 = vsub.f32 %v2306, %v2307
    %v2309 = vand.u32 %v2308, 4294901760
    %2310 = vmatpush2.msra.mxu0 %v2309
    %2311 = vmatprep.subr.mxu0 0.0
    %v2312 = vand.u32 %v124, 4294901760
    %v2313 = vsub.f32 %v124, %v2312
    %v2314 = vand.u32 %v2313, 4294901760
    %v2315 = vsub.f32 %v2313, %v2314
    %v2316 = vand.u32 %v2315, 4294901760
    %2317 = vmatpush2.msra.mxu0 %v2316
    %v2318 = vand.u32 %v231, 4294901760
    %2319 = vmatprep.mubr.f32.mxu0 %v2318
    %v2320 = vand.u32 %v227, 4294901760
    %2321 = vmatmul.mubr.f32.gmra.mxu0 %v2320
    %v2322 = vpop.f32.mrf.mxu0
    %v2323 = vadd.f32 %v2091, %v2322
    %v2324 = vpop.f32.mrf.mxu0
    %2325 = vdwg.mxu0
    %2326 = vmatprep.subr.mxu0 0.0
    %v2327 = vand.u32 %v123, 4294901760
    %v2328 = vsub.f32 %v123, %v2327
    %2329 = vmatpush1.msra.mxu0 %v2328
    %2330 = vmatprep.subr.mxu0 0.0
    %v2331 = vand.u32 %v122, 4294901760
    %v2332 = vsub.f32 %v122, %v2331
    %2333 = vmatpush1.msra.mxu0 %v2332
    %2334 = vmatprep.subr.mxu0 0.0
    %v2335 = vand.u32 %v121, 4294901760
    %v2336 = vsub.f32 %v121, %v2335
    %2337 = vmatpush1.msra.mxu0 %v2336
    %2338 = vmatprep.subr.mxu0 0.0
    %v2339 = vand.u32 %v120, 4294901760
    %v2340 = vsub.f32 %v120, %v2339
    %2341 = vmatpush1.msra.mxu0 %v2340
    %2342 = vmatprep.subr.mxu0 0.0
    %v2343 = vand.u32 %v119, 4294901760
    %v2344 = vsub.f32 %v119, %v2343
    %2345 = vmatpush1.msra.mxu0 %v2344
    %2346 = vmatprep.subr.mxu0 0.0
    %v2347 = vand.u32 %v118, 4294901760
    %v2348 = vsub.f32 %v118, %v2347
    %2349 = vmatpush1.msra.mxu0 %v2348
    %2350 = vmatprep.subr.mxu0 0.0
    %v2351 = vand.u32 %v117, 4294901760
    %v2352 = vsub.f32 %v117, %v2351
    %2353 = vmatpush1.msra.mxu0 %v2352
    %2354 = vmatprep.subr.mxu0 0.0
    %v2355 = vand.u32 %v116, 4294901760
    %v2356 = vsub.f32 %v116, %v2355
    %2357 = vmatpush1.msra.mxu0 %v2356
    %2358 = vmatprep.subr.mxu0 0.0
    %v2359 = vand.u32 %v115, 4294901760
    %v2360 = vsub.f32 %v115, %v2359
    %2361 = vmatpush1.msra.mxu0 %v2360
    %2362 = vmatprep.subr.mxu0 0.0
    %v2363 = vand.u32 %v114, 4294901760
    %v2364 = vsub.f32 %v114, %v2363
    %2365 = vmatpush1.msra.mxu0 %v2364
    %2366 = vmatprep.subr.mxu0 0.0
    %v2367 = vand.u32 %v113, 4294901760
    %v2368 = vsub.f32 %v113, %v2367
    %2369 = vmatpush1.msra.mxu0 %v2368
    %2370 = vmatprep.subr.mxu0 0.0
    %v2371 = vand.u32 %v112, 4294901760
    %v2372 = vsub.f32 %v112, %v2371
    %2373 = vmatpush1.msra.mxu0 %v2372
    %2374 = vmatprep.subr.mxu0 0.0
    %v2375 = vand.u32 %v111, 4294901760
    %v2376 = vsub.f32 %v111, %v2375
    %2377 = vmatpush1.msra.mxu0 %v2376
    %2378 = vmatprep.subr.mxu0 0.0
    %v2379 = vand.u32 %v110, 4294901760
    %v2380 = vsub.f32 %v110, %v2379
    %2381 = vmatpush1.msra.mxu0 %v2380
    %2382 = vmatprep.subr.mxu0 0.0
    %v2383 = vand.u32 %v109, 4294901760
    %v2384 = vsub.f32 %v109, %v2383
    %2385 = vmatpush1.msra.mxu0 %v2384
    %2386 = vmatprep.subr.mxu0 0.0
    %v2387 = vand.u32 %v108, 4294901760
    %v2388 = vsub.f32 %v108, %v2387
    %2389 = vmatpush1.msra.mxu0 %v2388
    %2390 = vmatprep.subr.mxu0 0.0
    %v2391 = vand.u32 %v139, 4294901760
    %v2392 = vsub.f32 %v139, %v2391
    %2393 = vmatpush2.msra.mxu0 %v2392
    %2394 = vmatprep.subr.mxu0 0.0
    %v2395 = vand.u32 %v138, 4294901760
    %v2396 = vsub.f32 %v138, %v2395
    %2397 = vmatpush2.msra.mxu0 %v2396
    %2398 = vmatprep.subr.mxu0 0.0
    %v2399 = vand.u32 %v137, 4294901760
    %v2400 = vsub.f32 %v137, %v2399
    %2401 = vmatpush2.msra.mxu0 %v2400
    %2402 = vmatprep.subr.mxu0 0.0
    %v2403 = vand.u32 %v136, 4294901760
    %v2404 = vsub.f32 %v136, %v2403
    %2405 = vmatpush2.msra.mxu0 %v2404
    %2406 = vmatprep.subr.mxu0 0.0
    %v2407 = vand.u32 %v135, 4294901760
    %v2408 = vsub.f32 %v135, %v2407
    %2409 = vmatpush2.msra.mxu0 %v2408
    %2410 = vmatprep.subr.mxu0 0.0
    %v2411 = vand.u32 %v134, 4294901760
    %v2412 = vsub.f32 %v134, %v2411
    %2413 = vmatpush2.msra.mxu0 %v2412
    %2414 = vmatprep.subr.mxu0 0.0
    %v2415 = vand.u32 %v133, 4294901760
    %v2416 = vsub.f32 %v133, %v2415
    %2417 = vmatpush2.msra.mxu0 %v2416
    %2418 = vmatprep.subr.mxu0 0.0
    %v2419 = vand.u32 %v132, 4294901760
    %v2420 = vsub.f32 %v132, %v2419
    %2421 = vmatpush2.msra.mxu0 %v2420
    %2422 = vmatprep.subr.mxu0 0.0
    %v2423 = vand.u32 %v131, 4294901760
    %v2424 = vsub.f32 %v131, %v2423
    %2425 = vmatpush2.msra.mxu0 %v2424
    %2426 = vmatprep.subr.mxu0 0.0
    %v2427 = vand.u32 %v130, 4294901760
    %v2428 = vsub.f32 %v130, %v2427
    %2429 = vmatpush2.msra.mxu0 %v2428
    %2430 = vmatprep.subr.mxu0 0.0
    %v2431 = vand.u32 %v129, 4294901760
    %v2432 = vsub.f32 %v129, %v2431
    %2433 = vmatpush2.msra.mxu0 %v2432
    %2434 = vmatprep.subr.mxu0 0.0
    %v2435 = vand.u32 %v128, 4294901760
    %v2436 = vsub.f32 %v128, %v2435
    %2437 = vmatpush2.msra.mxu0 %v2436
    %2438 = vmatprep.subr.mxu0 0.0
    %v2439 = vand.u32 %v127, 4294901760
    %v2440 = vsub.f32 %v127, %v2439
    %2441 = vmatpush2.msra.mxu0 %v2440
    %2442 = vmatprep.subr.mxu0 0.0
    %v2443 = vand.u32 %v126, 4294901760
    %v2444 = vsub.f32 %v126, %v2443
    %2445 = vmatpush2.msra.mxu0 %v2444
    %2446 = vmatprep.subr.mxu0 0.0
    %v2447 = vand.u32 %v125, 4294901760
    %v2448 = vsub.f32 %v125, %v2447
    %2449 = vmatpush2.msra.mxu0 %v2448
    %2450 = vmatprep.subr.mxu0 0.0
    %v2451 = vand.u32 %v124, 4294901760
    %v2452 = vsub.f32 %v124, %v2451
    %2453 = vmatpush2.msra.mxu0 %v2452
    %v2454 = vand.u32 %v231, 4294901760
    %v2455 = vsub.f32 %v231, %v2454
    %2456 = vmatprep.mubr.f32.mxu0 %v2455
    %v2457 = vand.u32 %v227, 4294901760
    %v2458 = vsub.f32 %v227, %v2457
    %2459 = vmatmul.mubr.f32.gmra.mxu0 %v2458
    %v2460 = vpop.f32.mrf.mxu0
    %v2461 = vadd.f32 %v2323, %v2460
    %v2462 = vpop.f32.mrf.mxu0
    %2463 = vdwg.mxu0
    %2464 = vmatprep.subr.mxu0 0.0
    %v2465 = vand.u32 %v123, 4294901760
    %2466 = vmatpush1.msra.mxu0 %v2465
    %2467 = vmatprep.subr.mxu0 0.0
    %v2468 = vand.u32 %v122, 4294901760
    %2469 = vmatpush1.msra.mxu0 %v2468
    %2470 = vmatprep.subr.mxu0 0.0
    %v2471 = vand.u32 %v121, 4294901760
    %2472 = vmatpush1.msra.mxu0 %v2471
    %2473 = vmatprep.subr.mxu0 0.0
    %v2474 = vand.u32 %v120, 4294901760
    %2475 = vmatpush1.msra.mxu0 %v2474
    %2476 = vmatprep.subr.mxu0 0.0
    %v2477 = vand.u32 %v119, 4294901760
    %2478 = vmatpush1.msra.mxu0 %v2477
    %2479 = vmatprep.subr.mxu0 0.0
    %v2480 = vand.u32 %v118, 4294901760
    %2481 = vmatpush1.msra.mxu0 %v2480
    %2482 = vmatprep.subr.mxu0 0.0
    %v2483 = vand.u32 %v117, 4294901760
    %2484 = vmatpush1.msra.mxu0 %v2483
    %2485 = vmatprep.subr.mxu0 0.0
    %v2486 = vand.u32 %v116, 4294901760
    %2487 = vmatpush1.msra.mxu0 %v2486
    %2488 = vmatprep.subr.mxu0 0.0
    %v2489 = vand.u32 %v115, 4294901760
    %2490 = vmatpush1.msra.mxu0 %v2489
    %2491 = vmatprep.subr.mxu0 0.0
    %v2492 = vand.u32 %v114, 4294901760
    %2493 = vmatpush1.msra.mxu0 %v2492
    %2494 = vmatprep.subr.mxu0 0.0
    %v2495 = vand.u32 %v113, 4294901760
    %2496 = vmatpush1.msra.mxu0 %v2495
    %2497 = vmatprep.subr.mxu0 0.0
    %v2498 = vand.u32 %v112, 4294901760
    %2499 = vmatpush1.msra.mxu0 %v2498
    %2500 = vmatprep.subr.mxu0 0.0
    %v2501 = vand.u32 %v111, 4294901760
    %2502 = vmatpush1.msra.mxu0 %v2501
    %2503 = vmatprep.subr.mxu0 0.0
    %v2504 = vand.u32 %v110, 4294901760
    %2505 = vmatpush1.msra.mxu0 %v2504
    %2506 = vmatprep.subr.mxu0 0.0
    %v2507 = vand.u32 %v109, 4294901760
    %2508 = vmatpush1.msra.mxu0 %v2507
    %2509 = vmatprep.subr.mxu0 0.0
    %v2510 = vand.u32 %v108, 4294901760
    %2511 = vmatpush1.msra.mxu0 %v2510
    %2512 = vmatprep.subr.mxu0 0.0
    %v2513 = vand.u32 %v139, 4294901760
    %2514 = vmatpush2.msra.mxu0 %v2513
    %2515 = vmatprep.subr.mxu0 0.0
    %v2516 = vand.u32 %v138, 4294901760
    %2517 = vmatpush2.msra.mxu0 %v2516
    %2518 = vmatprep.subr.mxu0 0.0
    %v2519 = vand.u32 %v137, 4294901760
    %2520 = vmatpush2.msra.mxu0 %v2519
    %2521 = vmatprep.subr.mxu0 0.0
    %v2522 = vand.u32 %v136, 4294901760
    %2523 = vmatpush2.msra.mxu0 %v2522
    %2524 = vmatprep.subr.mxu0 0.0
    %v2525 = vand.u32 %v135, 4294901760
    %2526 = vmatpush2.msra.mxu0 %v2525
    %2527 = vmatprep.subr.mxu0 0.0
    %v2528 = vand.u32 %v134, 4294901760
    %2529 = vmatpush2.msra.mxu0 %v2528
    %2530 = vmatprep.subr.mxu0 0.0
    %v2531 = vand.u32 %v133, 4294901760
    %2532 = vmatpush2.msra.mxu0 %v2531
    %2533 = vmatprep.subr.mxu0 0.0
    %v2534 = vand.u32 %v132, 4294901760
    %2535 = vmatpush2.msra.mxu0 %v2534
    %2536 = vmatprep.subr.mxu0 0.0
    %v2537 = vand.u32 %v131, 4294901760
    %2538 = vmatpush2.msra.mxu0 %v2537
    %2539 = vmatprep.subr.mxu0 0.0
    %v2540 = vand.u32 %v130, 4294901760
    %2541 = vmatpush2.msra.mxu0 %v2540
    %2542 = vmatprep.subr.mxu0 0.0
    %v2543 = vand.u32 %v129, 4294901760
    %2544 = vmatpush2.msra.mxu0 %v2543
    %2545 = vmatprep.subr.mxu0 0.0
    %v2546 = vand.u32 %v128, 4294901760
    %2547 = vmatpush2.msra.mxu0 %v2546
    %2548 = vmatprep.subr.mxu0 0.0
    %v2549 = vand.u32 %v127, 4294901760
    %2550 = vmatpush2.msra.mxu0 %v2549
    %2551 = vmatprep.subr.mxu0 0.0
    %v2552 = vand.u32 %v126, 4294901760
    %2553 = vmatpush2.msra.mxu0 %v2552
    %2554 = vmatprep.subr.mxu0 0.0
    %v2555 = vand.u32 %v125, 4294901760
    %2556 = vmatpush2.msra.mxu0 %v2555
    %2557 = vmatprep.subr.mxu0 0.0
    %v2558 = vand.u32 %v124, 4294901760
    %2559 = vmatpush2.msra.mxu0 %v2558
    %v2560 = vand.u32 %v231, 4294901760
    %v2561 = vsub.f32 %v231, %v2560
    %v2562 = vand.u32 %v2561, 4294901760
    %2563 = vmatprep.mubr.f32.mxu0 %v2562
    %v2564 = vand.u32 %v227, 4294901760
    %v2565 = vsub.f32 %v227, %v2564
    %v2566 = vand.u32 %v2565, 4294901760
    %2567 = vmatmul.mubr.f32.gmra.mxu0 %v2566
    %v2568 = vpop.f32.mrf.mxu0
    %v2569 = vadd.f32 %v2461, %v2568
    %v2570 = vpop.f32.mrf.mxu0
    %2571 = vdwg.mxu0
    %2572 = vmatprep.subr.mxu0 0.0
    %v2573 = vand.u32 %v123, 4294901760
    %v2574 = vsub.f32 %v123, %v2573
    %v2575 = vand.u32 %v2574, 4294901760
    %2576 = vmatpush1.msra.mxu0 %v2575
    %2577 = vmatprep.subr.mxu0 0.0
    %v2578 = vand.u32 %v122, 4294901760
    %v2579 = vsub.f32 %v122, %v2578
    %v2580 = vand.u32 %v2579, 4294901760
    %2581 = vmatpush1.msra.mxu0 %v2580
    %2582 = vmatprep.subr.mxu0 0.0
    %v2583 = vand.u32 %v121, 4294901760
    %v2584 = vsub.f32 %v121, %v2583
    %v2585 = vand.u32 %v2584, 4294901760
    %2586 = vmatpush1.msra.mxu0 %v2585
    %2587 = vmatprep.subr.mxu0 0.0
    %v2588 = vand.u32 %v120, 4294901760
    %v2589 = vsub.f32 %v120, %v2588
    %v2590 = vand.u32 %v2589, 4294901760
    %2591 = vmatpush1.msra.mxu0 %v2590
    %2592 = vmatprep.subr.mxu0 0.0
    %v2593 = vand.u32 %v119, 4294901760
    %v2594 = vsub.f32 %v119, %v2593
    %v2595 = vand.u32 %v2594, 4294901760
    %2596 = vmatpush1.msra.mxu0 %v2595
    %2597 = vmatprep.subr.mxu0 0.0
    %v2598 = vand.u32 %v118, 4294901760
    %v2599 = vsub.f32 %v118, %v2598
    %v2600 = vand.u32 %v2599, 4294901760
    %2601 = vmatpush1.msra.mxu0 %v2600
    %2602 = vmatprep.subr.mxu0 0.0
    %v2603 = vand.u32 %v117, 4294901760
    %v2604 = vsub.f32 %v117, %v2603
    %v2605 = vand.u32 %v2604, 4294901760
    %2606 = vmatpush1.msra.mxu0 %v2605
    %2607 = vmatprep.subr.mxu0 0.0
    %v2608 = vand.u32 %v116, 4294901760
    %v2609 = vsub.f32 %v116, %v2608
    %v2610 = vand.u32 %v2609, 4294901760
    %2611 = vmatpush1.msra.mxu0 %v2610
    %2612 = vmatprep.subr.mxu0 0.0
    %v2613 = vand.u32 %v115, 4294901760
    %v2614 = vsub.f32 %v115, %v2613
    %v2615 = vand.u32 %v2614, 4294901760
    %2616 = vmatpush1.msra.mxu0 %v2615
    %2617 = vmatprep.subr.mxu0 0.0
    %v2618 = vand.u32 %v114, 4294901760
    %v2619 = vsub.f32 %v114, %v2618
    %v2620 = vand.u32 %v2619, 4294901760
    %2621 = vmatpush1.msra.mxu0 %v2620
    %2622 = vmatprep.subr.mxu0 0.0
    %v2623 = vand.u32 %v113, 4294901760
    %v2624 = vsub.f32 %v113, %v2623
    %v2625 = vand.u32 %v2624, 4294901760
    %2626 = vmatpush1.msra.mxu0 %v2625
    %2627 = vmatprep.subr.mxu0 0.0
    %v2628 = vand.u32 %v112, 4294901760
    %v2629 = vsub.f32 %v112, %v2628
    %v2630 = vand.u32 %v2629, 4294901760
    %2631 = vmatpush1.msra.mxu0 %v2630
    %2632 = vmatprep.subr.mxu0 0.0
    %v2633 = vand.u32 %v111, 4294901760
    %v2634 = vsub.f32 %v111, %v2633
    %v2635 = vand.u32 %v2634, 4294901760
    %2636 = vmatpush1.msra.mxu0 %v2635
    %2637 = vmatprep.subr.mxu0 0.0
    %v2638 = vand.u32 %v110, 4294901760
    %v2639 = vsub.f32 %v110, %v2638
    %v2640 = vand.u32 %v2639, 4294901760
    %2641 = vmatpush1.msra.mxu0 %v2640
    %2642 = vmatprep.subr.mxu0 0.0
    %v2643 = vand.u32 %v109, 4294901760
    %v2644 = vsub.f32 %v109, %v2643
    %v2645 = vand.u32 %v2644, 4294901760
    %2646 = vmatpush1.msra.mxu0 %v2645
    %2647 = vmatprep.subr.mxu0 0.0
    %v2648 = vand.u32 %v108, 4294901760
    %v2649 = vsub.f32 %v108, %v2648
    %v2650 = vand.u32 %v2649, 4294901760
    %2651 = vmatpush1.msra.mxu0 %v2650
    %2652 = vmatprep.subr.mxu0 0.0
    %v2653 = vand.u32 %v139, 4294901760
    %v2654 = vsub.f32 %v139, %v2653
    %v2655 = vand.u32 %v2654, 4294901760
    %2656 = vmatpush2.msra.mxu0 %v2655
    %2657 = vmatprep.subr.mxu0 0.0
    %v2658 = vand.u32 %v138, 4294901760
    %v2659 = vsub.f32 %v138, %v2658
    %v2660 = vand.u32 %v2659, 4294901760
    %2661 = vmatpush2.msra.mxu0 %v2660
    %2662 = vmatprep.subr.mxu0 0.0
    %v2663 = vand.u32 %v137, 4294901760
    %v2664 = vsub.f32 %v137, %v2663
    %v2665 = vand.u32 %v2664, 4294901760
    %2666 = vmatpush2.msra.mxu0 %v2665
    %2667 = vmatprep.subr.mxu0 0.0
    %v2668 = vand.u32 %v136, 4294901760
    %v2669 = vsub.f32 %v136, %v2668
    %v2670 = vand.u32 %v2669, 4294901760
    %2671 = vmatpush2.msra.mxu0 %v2670
    %2672 = vmatprep.subr.mxu0 0.0
    %v2673 = vand.u32 %v135, 4294901760
    %v2674 = vsub.f32 %v135, %v2673
    %v2675 = vand.u32 %v2674, 4294901760
    %2676 = vmatpush2.msra.mxu0 %v2675
    %2677 = vmatprep.subr.mxu0 0.0
    %v2678 = vand.u32 %v134, 4294901760
    %v2679 = vsub.f32 %v134, %v2678
    %v2680 = vand.u32 %v2679, 4294901760
    %2681 = vmatpush2.msra.mxu0 %v2680
    %2682 = vmatprep.subr.mxu0 0.0
    %v2683 = vand.u32 %v133, 4294901760
    %v2684 = vsub.f32 %v133, %v2683
    %v2685 = vand.u32 %v2684, 4294901760
    %2686 = vmatpush2.msra.mxu0 %v2685
    %2687 = vmatprep.subr.mxu0 0.0
    %v2688 = vand.u32 %v132, 4294901760
    %v2689 = vsub.f32 %v132, %v2688
    %v2690 = vand.u32 %v2689, 4294901760
    %2691 = vmatpush2.msra.mxu0 %v2690
    %2692 = vmatprep.subr.mxu0 0.0
    %v2693 = vand.u32 %v131, 4294901760
    %v2694 = vsub.f32 %v131, %v2693
    %v2695 = vand.u32 %v2694, 4294901760
    %2696 = vmatpush2.msra.mxu0 %v2695
    %2697 = vmatprep.subr.mxu0 0.0
    %v2698 = vand.u32 %v130, 4294901760
    %v2699 = vsub.f32 %v130, %v2698
    %v2700 = vand.u32 %v2699, 4294901760
    %2701 = vmatpush2.msra.mxu0 %v2700
    %2702 = vmatprep.subr.mxu0 0.0
    %v2703 = vand.u32 %v129, 4294901760
    %v2704 = vsub.f32 %v129, %v2703
    %v2705 = vand.u32 %v2704, 4294901760
    %2706 = vmatpush2.msra.mxu0 %v2705
    %2707 = vmatprep.subr.mxu0 0.0
    %v2708 = vand.u32 %v128, 4294901760
    %v2709 = vsub.f32 %v128, %v2708
    %v2710 = vand.u32 %v2709, 4294901760
    %2711 = vmatpush2.msra.mxu0 %v2710
    %2712 = vmatprep.subr.mxu0 0.0
    %v2713 = vand.u32 %v127, 4294901760
    %v2714 = vsub.f32 %v127, %v2713
    %v2715 = vand.u32 %v2714, 4294901760
    %2716 = vmatpush2.msra.mxu0 %v2715
    %2717 = vmatprep.subr.mxu0 0.0
    %v2718 = vand.u32 %v126, 4294901760
    %v2719 = vsub.f32 %v126, %v2718
    %v2720 = vand.u32 %v2719, 4294901760
    %2721 = vmatpush2.msra.mxu0 %v2720
    %2722 = vmatprep.subr.mxu0 0.0
    %v2723 = vand.u32 %v125, 4294901760
    %v2724 = vsub.f32 %v125, %v2723
    %v2725 = vand.u32 %v2724, 4294901760
    %2726 = vmatpush2.msra.mxu0 %v2725
    %2727 = vmatprep.subr.mxu0 0.0
    %v2728 = vand.u32 %v124, 4294901760
    %v2729 = vsub.f32 %v124, %v2728
    %v2730 = vand.u32 %v2729, 4294901760
    %2731 = vmatpush2.msra.mxu0 %v2730
    %v2732 = vand.u32 %v231, 4294901760
    %2733 = vmatprep.mubr.f32.mxu0 %v2732
    %v2734 = vand.u32 %v227, 4294901760
    %2735 = vmatmul.mubr.f32.gmra.mxu0 %v2734
    %v2736 = vpop.f32.mrf.mxu0
    %v2737 = vadd.f32 %v2569, %v2736
    %v2738 = vpop.f32.mrf.mxu0
    %2739 = vdwg.mxu0
    %2740 = vmatprep.subr.mxu0 0.0
    %v2741 = vand.u32 %v123, 4294901760
    %2742 = vmatpush1.msra.mxu0 %v2741
    %2743 = vmatprep.subr.mxu0 0.0
    %v2744 = vand.u32 %v122, 4294901760
    %2745 = vmatpush1.msra.mxu0 %v2744
    %2746 = vmatprep.subr.mxu0 0.0
    %v2747 = vand.u32 %v121, 4294901760
    %2748 = vmatpush1.msra.mxu0 %v2747
    %2749 = vmatprep.subr.mxu0 0.0
    %v2750 = vand.u32 %v120, 4294901760
    %2751 = vmatpush1.msra.mxu0 %v2750
    %2752 = vmatprep.subr.mxu0 0.0
    %v2753 = vand.u32 %v119, 4294901760
    %2754 = vmatpush1.msra.mxu0 %v2753
    %2755 = vmatprep.subr.mxu0 0.0
    %v2756 = vand.u32 %v118, 4294901760
    %2757 = vmatpush1.msra.mxu0 %v2756
    %2758 = vmatprep.subr.mxu0 0.0
    %v2759 = vand.u32 %v117, 4294901760
    %2760 = vmatpush1.msra.mxu0 %v2759
    %2761 = vmatprep.subr.mxu0 0.0
    %v2762 = vand.u32 %v116, 4294901760
    %2763 = vmatpush1.msra.mxu0 %v2762
    %2764 = vmatprep.subr.mxu0 0.0
    %v2765 = vand.u32 %v115, 4294901760
    %2766 = vmatpush1.msra.mxu0 %v2765
    %2767 = vmatprep.subr.mxu0 0.0
    %v2768 = vand.u32 %v114, 4294901760
    %2769 = vmatpush1.msra.mxu0 %v2768
    %2770 = vmatprep.subr.mxu0 0.0
    %v2771 = vand.u32 %v113, 4294901760
    %2772 = vmatpush1.msra.mxu0 %v2771
    %2773 = vmatprep.subr.mxu0 0.0
    %v2774 = vand.u32 %v112, 4294901760
    %2775 = vmatpush1.msra.mxu0 %v2774
    %2776 = vmatprep.subr.mxu0 0.0
    %v2777 = vand.u32 %v111, 4294901760
    %2778 = vmatpush1.msra.mxu0 %v2777
    %2779 = vmatprep.subr.mxu0 0.0
    %v2780 = vand.u32 %v110, 4294901760
    %2781 = vmatpush1.msra.mxu0 %v2780
    %2782 = vmatprep.subr.mxu0 0.0
    %v2783 = vand.u32 %v109, 4294901760
    %2784 = vmatpush1.msra.mxu0 %v2783
    %2785 = vmatprep.subr.mxu0 0.0
    %v2786 = vand.u32 %v108, 4294901760
    %2787 = vmatpush1.msra.mxu0 %v2786
    %2788 = vmatprep.subr.mxu0 0.0
    %v2789 = vand.u32 %v139, 4294901760
    %2790 = vmatpush2.msra.mxu0 %v2789
    %2791 = vmatprep.subr.mxu0 0.0
    %v2792 = vand.u32 %v138, 4294901760
    %2793 = vmatpush2.msra.mxu0 %v2792
    %2794 = vmatprep.subr.mxu0 0.0
    %v2795 = vand.u32 %v137, 4294901760
    %2796 = vmatpush2.msra.mxu0 %v2795
    %2797 = vmatprep.subr.mxu0 0.0
    %v2798 = vand.u32 %v136, 4294901760
    %2799 = vmatpush2.msra.mxu0 %v2798
    %2800 = vmatprep.subr.mxu0 0.0
    %v2801 = vand.u32 %v135, 4294901760
    %2802 = vmatpush2.msra.mxu0 %v2801
    %2803 = vmatprep.subr.mxu0 0.0
    %v2804 = vand.u32 %v134, 4294901760
    %2805 = vmatpush2.msra.mxu0 %v2804
    %2806 = vmatprep.subr.mxu0 0.0
    %v2807 = vand.u32 %v133, 4294901760
    %2808 = vmatpush2.msra.mxu0 %v2807
    %2809 = vmatprep.subr.mxu0 0.0
    %v2810 = vand.u32 %v132, 4294901760
    %2811 = vmatpush2.msra.mxu0 %v2810
    %2812 = vmatprep.subr.mxu0 0.0
    %v2813 = vand.u32 %v131, 4294901760
    %2814 = vmatpush2.msra.mxu0 %v2813
    %2815 = vmatprep.subr.mxu0 0.0
    %v2816 = vand.u32 %v130, 4294901760
    %2817 = vmatpush2.msra.mxu0 %v2816
    %2818 = vmatprep.subr.mxu0 0.0
    %v2819 = vand.u32 %v129, 4294901760
    %2820 = vmatpush2.msra.mxu0 %v2819
    %2821 = vmatprep.subr.mxu0 0.0
    %v2822 = vand.u32 %v128, 4294901760
    %2823 = vmatpush2.msra.mxu0 %v2822
    %2824 = vmatprep.subr.mxu0 0.0
    %v2825 = vand.u32 %v127, 4294901760
    %2826 = vmatpush2.msra.mxu0 %v2825
    %2827 = vmatprep.subr.mxu0 0.0
    %v2828 = vand.u32 %v126, 4294901760
    %2829 = vmatpush2.msra.mxu0 %v2828
    %2830 = vmatprep.subr.mxu0 0.0
    %v2831 = vand.u32 %v125, 4294901760
    %2832 = vmatpush2.msra.mxu0 %v2831
    %2833 = vmatprep.subr.mxu0 0.0
    %v2834 = vand.u32 %v124, 4294901760
    %2835 = vmatpush2.msra.mxu0 %v2834
    %v2836 = vand.u32 %v231, 4294901760
    %2837 = vmatprep.mubr.f32.mxu0 %v2836
    %v2838 = vand.u32 %v227, 4294901760
    %2839 = vmatmul.mubr.f32.gmra.mxu0 %v2838
    %v2840 = vpop.f32.mrf.mxu0
    %v2841 = vadd.f32 %v2737, %v2840
    %v2842 = vpop.f32.mrf.mxu0
    %2843 = vdwg.mxu0
    %2844 = vmatprep.subr.mxu0 0.0
    %v2845 = vand.u32 %v155, 4294901760
    %2846 = vmatpush1.msra.mxu0 %v2845
    %2847 = vmatprep.subr.mxu0 0.0
    %v2848 = vand.u32 %v154, 4294901760
    %2849 = vmatpush1.msra.mxu0 %v2848
    %2850 = vmatprep.subr.mxu0 0.0
    %v2851 = vand.u32 %v153, 4294901760
    %2852 = vmatpush1.msra.mxu0 %v2851
    %2853 = vmatprep.subr.mxu0 0.0
    %v2854 = vand.u32 %v152, 4294901760
    %2855 = vmatpush1.msra.mxu0 %v2854
    %2856 = vmatprep.subr.mxu0 0.0
    %v2857 = vand.u32 %v151, 4294901760
    %2858 = vmatpush1.msra.mxu0 %v2857
    %2859 = vmatprep.subr.mxu0 0.0
    %v2860 = vand.u32 %v150, 4294901760
    %2861 = vmatpush1.msra.mxu0 %v2860
    %2862 = vmatprep.subr.mxu0 0.0
    %v2863 = vand.u32 %v149, 4294901760
    %2864 = vmatpush1.msra.mxu0 %v2863
    %2865 = vmatprep.subr.mxu0 0.0
    %v2866 = vand.u32 %v148, 4294901760
    %2867 = vmatpush1.msra.mxu0 %v2866
    %2868 = vmatprep.subr.mxu0 0.0
    %v2869 = vand.u32 %v147, 4294901760
    %2870 = vmatpush1.msra.mxu0 %v2869
    %2871 = vmatprep.subr.mxu0 0.0
    %v2872 = vand.u32 %v146, 4294901760
    %2873 = vmatpush1.msra.mxu0 %v2872
    %2874 = vmatprep.subr.mxu0 0.0
    %v2875 = vand.u32 %v145, 4294901760
    %2876 = vmatpush1.msra.mxu0 %v2875
    %2877 = vmatprep.subr.mxu0 0.0
    %v2878 = vand.u32 %v144, 4294901760
    %2879 = vmatpush1.msra.mxu0 %v2878
    %2880 = vmatprep.subr.mxu0 0.0
    %v2881 = vand.u32 %v143, 4294901760
    %2882 = vmatpush1.msra.mxu0 %v2881
    %2883 = vmatprep.subr.mxu0 0.0
    %v2884 = vand.u32 %v142, 4294901760
    %2885 = vmatpush1.msra.mxu0 %v2884
    %2886 = vmatprep.subr.mxu0 0.0
    %v2887 = vand.u32 %v141, 4294901760
    %2888 = vmatpush1.msra.mxu0 %v2887
    %2889 = vmatprep.subr.mxu0 0.0
    %v2890 = vand.u32 %v140, 4294901760
    %2891 = vmatpush1.msra.mxu0 %v2890
    %2892 = vmatprep.subr.mxu0 0.0
    %v2893 = vand.u32 %v171, 4294901760
    %2894 = vmatpush2.msra.mxu0 %v2893
    %2895 = vmatprep.subr.mxu0 0.0
    %v2896 = vand.u32 %v170, 4294901760
    %2897 = vmatpush2.msra.mxu0 %v2896
    %2898 = vmatprep.subr.mxu0 0.0
    %v2899 = vand.u32 %v169, 4294901760
    %2900 = vmatpush2.msra.mxu0 %v2899
    %2901 = vmatprep.subr.mxu0 0.0
    %v2902 = vand.u32 %v168, 4294901760
    %2903 = vmatpush2.msra.mxu0 %v2902
    %2904 = vmatprep.subr.mxu0 0.0
    %v2905 = vand.u32 %v167, 4294901760
    %2906 = vmatpush2.msra.mxu0 %v2905
    %2907 = vmatprep.subr.mxu0 0.0
    %v2908 = vand.u32 %v166, 4294901760
    %2909 = vmatpush2.msra.mxu0 %v2908
    %2910 = vmatprep.subr.mxu0 0.0
    %v2911 = vand.u32 %v165, 4294901760
    %2912 = vmatpush2.msra.mxu0 %v2911
    %2913 = vmatprep.subr.mxu0 0.0
    %v2914 = vand.u32 %v164, 4294901760
    %2915 = vmatpush2.msra.mxu0 %v2914
    %2916 = vmatprep.subr.mxu0 0.0
    %v2917 = vand.u32 %v163, 4294901760
    %2918 = vmatpush2.msra.mxu0 %v2917
    %2919 = vmatprep.subr.mxu0 0.0
    %v2920 = vand.u32 %v162, 4294901760
    %2921 = vmatpush2.msra.mxu0 %v2920
    %2922 = vmatprep.subr.mxu0 0.0
    %v2923 = vand.u32 %v161, 4294901760
    %2924 = vmatpush2.msra.mxu0 %v2923
    %2925 = vmatprep.subr.mxu0 0.0
    %v2926 = vand.u32 %v160, 4294901760
    %2927 = vmatpush2.msra.mxu0 %v2926
    %2928 = vmatprep.subr.mxu0 0.0
    %v2929 = vand.u32 %v159, 4294901760
    %2930 = vmatpush2.msra.mxu0 %v2929
    %2931 = vmatprep.subr.mxu0 0.0
    %v2932 = vand.u32 %v158, 4294901760
    %2933 = vmatpush2.msra.mxu0 %v2932
    %2934 = vmatprep.subr.mxu0 0.0
    %v2935 = vand.u32 %v157, 4294901760
    %2936 = vmatpush2.msra.mxu0 %v2935
    %2937 = vmatprep.subr.mxu0 0.0
    %v2938 = vand.u32 %v156, 4294901760
    %2939 = vmatpush2.msra.mxu0 %v2938
    %v2940 = vand.u32 %v239, 4294901760
    %v2941 = vsub.f32 %v239, %v2940
    %v2942 = vand.u32 %v2941, 4294901760
    %v2943 = vsub.f32 %v2941, %v2942
    %v2944 = vand.u32 %v2943, 4294901760
    %2945 = vmatprep.mubr.f32.mxu0 %v2944
    %v2946 = vand.u32 %v235, 4294901760
    %v2947 = vsub.f32 %v235, %v2946
    %v2948 = vand.u32 %v2947, 4294901760
    %v2949 = vsub.f32 %v2947, %v2948
    %v2950 = vand.u32 %v2949, 4294901760
    %2951 = vmatmul.mubr.f32.gmra.mxu0 %v2950
    %v2952 = vpop.f32.mrf.mxu0
    %v2953 = vadd.f32 %v2841, %v2952
    %v2954 = vpop.f32.mrf.mxu0
    %2955 = vdwg.mxu0
    %2956 = vmatprep.subr.mxu0 0.0
    %v2957 = vand.u32 %v155, 4294901760
    %v2958 = vsub.f32 %v155, %v2957
    %v2959 = vand.u32 %v2958, 4294901760
    %v2960 = vsub.f32 %v2958, %v2959
    %v2961 = vand.u32 %v2960, 4294901760
    %2962 = vmatpush1.msra.mxu0 %v2961
    %2963 = vmatprep.subr.mxu0 0.0
    %v2964 = vand.u32 %v154, 4294901760
    %v2965 = vsub.f32 %v154, %v2964
    %v2966 = vand.u32 %v2965, 4294901760
    %v2967 = vsub.f32 %v2965, %v2966
    %v2968 = vand.u32 %v2967, 4294901760
    %2969 = vmatpush1.msra.mxu0 %v2968
    %2970 = vmatprep.subr.mxu0 0.0
    %v2971 = vand.u32 %v153, 4294901760
    %v2972 = vsub.f32 %v153, %v2971
    %v2973 = vand.u32 %v2972, 4294901760
    %v2974 = vsub.f32 %v2972, %v2973
    %v2975 = vand.u32 %v2974, 4294901760
    %2976 = vmatpush1.msra.mxu0 %v2975
    %2977 = vmatprep.subr.mxu0 0.0
    %v2978 = vand.u32 %v152, 4294901760
    %v2979 = vsub.f32 %v152, %v2978
    %v2980 = vand.u32 %v2979, 4294901760
    %v2981 = vsub.f32 %v2979, %v2980
    %v2982 = vand.u32 %v2981, 4294901760
    %2983 = vmatpush1.msra.mxu0 %v2982
    %2984 = vmatprep.subr.mxu0 0.0
    %v2985 = vand.u32 %v151, 4294901760
    %v2986 = vsub.f32 %v151, %v2985
    %v2987 = vand.u32 %v2986, 4294901760
    %v2988 = vsub.f32 %v2986, %v2987
    %v2989 = vand.u32 %v2988, 4294901760
    %2990 = vmatpush1.msra.mxu0 %v2989
    %2991 = vmatprep.subr.mxu0 0.0
    %v2992 = vand.u32 %v150, 4294901760
    %v2993 = vsub.f32 %v150, %v2992
    %v2994 = vand.u32 %v2993, 4294901760
    %v2995 = vsub.f32 %v2993, %v2994
    %v2996 = vand.u32 %v2995, 4294901760
    %2997 = vmatpush1.msra.mxu0 %v2996
    %2998 = vmatprep.subr.mxu0 0.0
    %v2999 = vand.u32 %v149, 4294901760
    %v3000 = vsub.f32 %v149, %v2999
    %v3001 = vand.u32 %v3000, 4294901760
    %v3002 = vsub.f32 %v3000, %v3001
    %v3003 = vand.u32 %v3002, 4294901760
    %3004 = vmatpush1.msra.mxu0 %v3003
    %3005 = vmatprep.subr.mxu0 0.0
    %v3006 = vand.u32 %v148, 4294901760
    %v3007 = vsub.f32 %v148, %v3006
    %v3008 = vand.u32 %v3007, 4294901760
    %v3009 = vsub.f32 %v3007, %v3008
    %v3010 = vand.u32 %v3009, 4294901760
    %3011 = vmatpush1.msra.mxu0 %v3010
    %3012 = vmatprep.subr.mxu0 0.0
    %v3013 = vand.u32 %v147, 4294901760
    %v3014 = vsub.f32 %v147, %v3013
    %v3015 = vand.u32 %v3014, 4294901760
    %v3016 = vsub.f32 %v3014, %v3015
    %v3017 = vand.u32 %v3016, 4294901760
    %3018 = vmatpush1.msra.mxu0 %v3017
    %3019 = vmatprep.subr.mxu0 0.0
    %v3020 = vand.u32 %v146, 4294901760
    %v3021 = vsub.f32 %v146, %v3020
    %v3022 = vand.u32 %v3021, 4294901760
    %v3023 = vsub.f32 %v3021, %v3022
    %v3024 = vand.u32 %v3023, 4294901760
    %3025 = vmatpush1.msra.mxu0 %v3024
    %3026 = vmatprep.subr.mxu0 0.0
    %v3027 = vand.u32 %v145, 4294901760
    %v3028 = vsub.f32 %v145, %v3027
    %v3029 = vand.u32 %v3028, 4294901760
    %v3030 = vsub.f32 %v3028, %v3029
    %v3031 = vand.u32 %v3030, 4294901760
    %3032 = vmatpush1.msra.mxu0 %v3031
    %3033 = vmatprep.subr.mxu0 0.0
    %v3034 = vand.u32 %v144, 4294901760
    %v3035 = vsub.f32 %v144, %v3034
    %v3036 = vand.u32 %v3035, 4294901760
    %v3037 = vsub.f32 %v3035, %v3036
    %v3038 = vand.u32 %v3037, 4294901760
    %3039 = vmatpush1.msra.mxu0 %v3038
    %3040 = vmatprep.subr.mxu0 0.0
    %v3041 = vand.u32 %v143, 4294901760
    %v3042 = vsub.f32 %v143, %v3041
    %v3043 = vand.u32 %v3042, 4294901760
    %v3044 = vsub.f32 %v3042, %v3043
    %v3045 = vand.u32 %v3044, 4294901760
    %3046 = vmatpush1.msra.mxu0 %v3045
    %3047 = vmatprep.subr.mxu0 0.0
    %v3048 = vand.u32 %v142, 4294901760
    %v3049 = vsub.f32 %v142, %v3048
    %v3050 = vand.u32 %v3049, 4294901760
    %v3051 = vsub.f32 %v3049, %v3050
    %v3052 = vand.u32 %v3051, 4294901760
    %3053 = vmatpush1.msra.mxu0 %v3052
    %3054 = vmatprep.subr.mxu0 0.0
    %v3055 = vand.u32 %v141, 4294901760
    %v3056 = vsub.f32 %v141, %v3055
    %v3057 = vand.u32 %v3056, 4294901760
    %v3058 = vsub.f32 %v3056, %v3057
    %v3059 = vand.u32 %v3058, 4294901760
    %3060 = vmatpush1.msra.mxu0 %v3059
    %3061 = vmatprep.subr.mxu0 0.0
    %v3062 = vand.u32 %v140, 4294901760
    %v3063 = vsub.f32 %v140, %v3062
    %v3064 = vand.u32 %v3063, 4294901760
    %v3065 = vsub.f32 %v3063, %v3064
    %v3066 = vand.u32 %v3065, 4294901760
    %3067 = vmatpush1.msra.mxu0 %v3066
    %3068 = vmatprep.subr.mxu0 0.0
    %v3069 = vand.u32 %v171, 4294901760
    %v3070 = vsub.f32 %v171, %v3069
    %v3071 = vand.u32 %v3070, 4294901760
    %v3072 = vsub.f32 %v3070, %v3071
    %v3073 = vand.u32 %v3072, 4294901760
    %3074 = vmatpush2.msra.mxu0 %v3073
    %3075 = vmatprep.subr.mxu0 0.0
    %v3076 = vand.u32 %v170, 4294901760
    %v3077 = vsub.f32 %v170, %v3076
    %v3078 = vand.u32 %v3077, 4294901760
    %v3079 = vsub.f32 %v3077, %v3078
    %v3080 = vand.u32 %v3079, 4294901760
    %3081 = vmatpush2.msra.mxu0 %v3080
    %3082 = vmatprep.subr.mxu0 0.0
    %v3083 = vand.u32 %v169, 4294901760
    %v3084 = vsub.f32 %v169, %v3083
    %v3085 = vand.u32 %v3084, 4294901760
    %v3086 = vsub.f32 %v3084, %v3085
    %v3087 = vand.u32 %v3086, 4294901760
    %3088 = vmatpush2.msra.mxu0 %v3087
    %3089 = vmatprep.subr.mxu0 0.0
    %v3090 = vand.u32 %v168, 4294901760
    %v3091 = vsub.f32 %v168, %v3090
    %v3092 = vand.u32 %v3091, 4294901760
    %v3093 = vsub.f32 %v3091, %v3092
    %v3094 = vand.u32 %v3093, 4294901760
    %3095 = vmatpush2.msra.mxu0 %v3094
    %3096 = vmatprep.subr.mxu0 0.0
    %v3097 = vand.u32 %v167, 4294901760
    %v3098 = vsub.f32 %v167, %v3097
    %v3099 = vand.u32 %v3098, 4294901760
    %v3100 = vsub.f32 %v3098, %v3099
    %v3101 = vand.u32 %v3100, 4294901760
    %3102 = vmatpush2.msra.mxu0 %v3101
    %3103 = vmatprep.subr.mxu0 0.0
    %v3104 = vand.u32 %v166, 4294901760
    %v3105 = vsub.f32 %v166, %v3104
    %v3106 = vand.u32 %v3105, 4294901760
    %v3107 = vsub.f32 %v3105, %v3106
    %v3108 = vand.u32 %v3107, 4294901760
    %3109 = vmatpush2.msra.mxu0 %v3108
    %3110 = vmatprep.subr.mxu0 0.0
    %v3111 = vand.u32 %v165, 4294901760
    %v3112 = vsub.f32 %v165, %v3111
    %v3113 = vand.u32 %v3112, 4294901760
    %v3114 = vsub.f32 %v3112, %v3113
    %v3115 = vand.u32 %v3114, 4294901760
    %3116 = vmatpush2.msra.mxu0 %v3115
    %3117 = vmatprep.subr.mxu0 0.0
    %v3118 = vand.u32 %v164, 4294901760
    %v3119 = vsub.f32 %v164, %v3118
    %v3120 = vand.u32 %v3119, 4294901760
    %v3121 = vsub.f32 %v3119, %v3120
    %v3122 = vand.u32 %v3121, 4294901760
    %3123 = vmatpush2.msra.mxu0 %v3122
    %3124 = vmatprep.subr.mxu0 0.0
    %v3125 = vand.u32 %v163, 4294901760
    %v3126 = vsub.f32 %v163, %v3125
    %v3127 = vand.u32 %v3126, 4294901760
    %v3128 = vsub.f32 %v3126, %v3127
    %v3129 = vand.u32 %v3128, 4294901760
    %3130 = vmatpush2.msra.mxu0 %v3129
    %3131 = vmatprep.subr.mxu0 0.0
    %v3132 = vand.u32 %v162, 4294901760
    %v3133 = vsub.f32 %v162, %v3132
    %v3134 = vand.u32 %v3133, 4294901760
    %v3135 = vsub.f32 %v3133, %v3134
    %v3136 = vand.u32 %v3135, 4294901760
    %3137 = vmatpush2.msra.mxu0 %v3136
    %3138 = vmatprep.subr.mxu0 0.0
    %v3139 = vand.u32 %v161, 4294901760
    %v3140 = vsub.f32 %v161, %v3139
    %v3141 = vand.u32 %v3140, 4294901760
    %v3142 = vsub.f32 %v3140, %v3141
    %v3143 = vand.u32 %v3142, 4294901760
    %3144 = vmatpush2.msra.mxu0 %v3143
    %3145 = vmatprep.subr.mxu0 0.0
    %v3146 = vand.u32 %v160, 4294901760
    %v3147 = vsub.f32 %v160, %v3146
    %v3148 = vand.u32 %v3147, 4294901760
    %v3149 = vsub.f32 %v3147, %v3148
    %v3150 = vand.u32 %v3149, 4294901760
    %3151 = vmatpush2.msra.mxu0 %v3150
    %3152 = vmatprep.subr.mxu0 0.0
    %v3153 = vand.u32 %v159, 4294901760
    %v3154 = vsub.f32 %v159, %v3153
    %v3155 = vand.u32 %v3154, 4294901760
    %v3156 = vsub.f32 %v3154, %v3155
    %v3157 = vand.u32 %v3156, 4294901760
    %3158 = vmatpush2.msra.mxu0 %v3157
    %3159 = vmatprep.subr.mxu0 0.0
    %v3160 = vand.u32 %v158, 4294901760
    %v3161 = vsub.f32 %v158, %v3160
    %v3162 = vand.u32 %v3161, 4294901760
    %v3163 = vsub.f32 %v3161, %v3162
    %v3164 = vand.u32 %v3163, 4294901760
    %3165 = vmatpush2.msra.mxu0 %v3164
    %3166 = vmatprep.subr.mxu0 0.0
    %v3167 = vand.u32 %v157, 4294901760
    %v3168 = vsub.f32 %v157, %v3167
    %v3169 = vand.u32 %v3168, 4294901760
    %v3170 = vsub.f32 %v3168, %v3169
    %v3171 = vand.u32 %v3170, 4294901760
    %3172 = vmatpush2.msra.mxu0 %v3171
    %3173 = vmatprep.subr.mxu0 0.0
    %v3174 = vand.u32 %v156, 4294901760
    %v3175 = vsub.f32 %v156, %v3174
    %v3176 = vand.u32 %v3175, 4294901760
    %v3177 = vsub.f32 %v3175, %v3176
    %v3178 = vand.u32 %v3177, 4294901760
    %3179 = vmatpush2.msra.mxu0 %v3178
    %v3180 = vand.u32 %v239, 4294901760
    %3181 = vmatprep.mubr.f32.mxu0 %v3180
    %v3182 = vand.u32 %v235, 4294901760
    %3183 = vmatmul.mubr.f32.gmra.mxu0 %v3182
    %v3184 = vpop.f32.mrf.mxu0
    %v3185 = vadd.f32 %v2953, %v3184
    %v3186 = vpop.f32.mrf.mxu0
    %3187 = vdwg.mxu0
    %3188 = vmatprep.subr.mxu0 0.0
    %v3189 = vand.u32 %v155, 4294901760
    %v3190 = vsub.f32 %v155, %v3189
    %3191 = vmatpush1.msra.mxu0 %v3190
    %3192 = vmatprep.subr.mxu0 0.0
    %v3193 = vand.u32 %v154, 4294901760
    %v3194 = vsub.f32 %v154, %v3193
    %3195 = vmatpush1.msra.mxu0 %v3194
    %3196 = vmatprep.subr.mxu0 0.0
    %v3197 = vand.u32 %v153, 4294901760
    %v3198 = vsub.f32 %v153, %v3197
    %3199 = vmatpush1.msra.mxu0 %v3198
    %3200 = vmatprep.subr.mxu0 0.0
    %v3201 = vand.u32 %v152, 4294901760
    %v3202 = vsub.f32 %v152, %v3201
    %3203 = vmatpush1.msra.mxu0 %v3202
    %3204 = vmatprep.subr.mxu0 0.0
    %v3205 = vand.u32 %v151, 4294901760
    %v3206 = vsub.f32 %v151, %v3205
    %3207 = vmatpush1.msra.mxu0 %v3206
    %3208 = vmatprep.subr.mxu0 0.0
    %v3209 = vand.u32 %v150, 4294901760
    %v3210 = vsub.f32 %v150, %v3209
    %3211 = vmatpush1.msra.mxu0 %v3210
    %3212 = vmatprep.subr.mxu0 0.0
    %v3213 = vand.u32 %v149, 4294901760
    %v3214 = vsub.f32 %v149, %v3213
    %3215 = vmatpush1.msra.mxu0 %v3214
    %3216 = vmatprep.subr.mxu0 0.0
    %v3217 = vand.u32 %v148, 4294901760
    %v3218 = vsub.f32 %v148, %v3217
    %3219 = vmatpush1.msra.mxu0 %v3218
    %3220 = vmatprep.subr.mxu0 0.0
    %v3221 = vand.u32 %v147, 4294901760
    %v3222 = vsub.f32 %v147, %v3221
    %3223 = vmatpush1.msra.mxu0 %v3222
    %3224 = vmatprep.subr.mxu0 0.0
    %v3225 = vand.u32 %v146, 4294901760
    %v3226 = vsub.f32 %v146, %v3225
    %3227 = vmatpush1.msra.mxu0 %v3226
    %3228 = vmatprep.subr.mxu0 0.0
    %v3229 = vand.u32 %v145, 4294901760
    %v3230 = vsub.f32 %v145, %v3229
    %3231 = vmatpush1.msra.mxu0 %v3230
    %3232 = vmatprep.subr.mxu0 0.0
    %v3233 = vand.u32 %v144, 4294901760
    %v3234 = vsub.f32 %v144, %v3233
    %3235 = vmatpush1.msra.mxu0 %v3234
    %3236 = vmatprep.subr.mxu0 0.0
    %v3237 = vand.u32 %v143, 4294901760
    %v3238 = vsub.f32 %v143, %v3237
    %3239 = vmatpush1.msra.mxu0 %v3238
    %3240 = vmatprep.subr.mxu0 0.0
    %v3241 = vand.u32 %v142, 4294901760
    %v3242 = vsub.f32 %v142, %v3241
    %3243 = vmatpush1.msra.mxu0 %v3242
    %3244 = vmatprep.subr.mxu0 0.0
    %v3245 = vand.u32 %v141, 4294901760
    %v3246 = vsub.f32 %v141, %v3245
    %3247 = vmatpush1.msra.mxu0 %v3246
    %3248 = vmatprep.subr.mxu0 0.0
    %v3249 = vand.u32 %v140, 4294901760
    %v3250 = vsub.f32 %v140, %v3249
    %3251 = vmatpush1.msra.mxu0 %v3250
    %3252 = vmatprep.subr.mxu0 0.0
    %v3253 = vand.u32 %v171, 4294901760
    %v3254 = vsub.f32 %v171, %v3253
    %3255 = vmatpush2.msra.mxu0 %v3254
    %3256 = vmatprep.subr.mxu0 0.0
    %v3257 = vand.u32 %v170, 4294901760
    %v3258 = vsub.f32 %v170, %v3257
    %3259 = vmatpush2.msra.mxu0 %v3258
    %3260 = vmatprep.subr.mxu0 0.0
    %v3261 = vand.u32 %v169, 4294901760
    %v3262 = vsub.f32 %v169, %v3261
    %3263 = vmatpush2.msra.mxu0 %v3262
    %3264 = vmatprep.subr.mxu0 0.0
    %v3265 = vand.u32 %v168, 4294901760
    %v3266 = vsub.f32 %v168, %v3265
    %3267 = vmatpush2.msra.mxu0 %v3266
    %3268 = vmatprep.subr.mxu0 0.0
    %v3269 = vand.u32 %v167, 4294901760
    %v3270 = vsub.f32 %v167, %v3269
    %3271 = vmatpush2.msra.mxu0 %v3270
    %3272 = vmatprep.subr.mxu0 0.0
    %v3273 = vand.u32 %v166, 4294901760
    %v3274 = vsub.f32 %v166, %v3273
    %3275 = vmatpush2.msra.mxu0 %v3274
    %3276 = vmatprep.subr.mxu0 0.0
    %v3277 = vand.u32 %v165, 4294901760
    %v3278 = vsub.f32 %v165, %v3277
    %3279 = vmatpush2.msra.mxu0 %v3278
    %3280 = vmatprep.subr.mxu0 0.0
    %v3281 = vand.u32 %v164, 4294901760
    %v3282 = vsub.f32 %v164, %v3281
    %3283 = vmatpush2.msra.mxu0 %v3282
    %3284 = vmatprep.subr.mxu0 0.0
    %v3285 = vand.u32 %v163, 4294901760
    %v3286 = vsub.f32 %v163, %v3285
    %3287 = vmatpush2.msra.mxu0 %v3286
    %3288 = vmatprep.subr.mxu0 0.0
    %v3289 = vand.u32 %v162, 4294901760
    %v3290 = vsub.f32 %v162, %v3289
    %3291 = vmatpush2.msra.mxu0 %v3290
    %3292 = vmatprep.subr.mxu0 0.0
    %v3293 = vand.u32 %v161, 4294901760
    %v3294 = vsub.f32 %v161, %v3293
    %3295 = vmatpush2.msra.mxu0 %v3294
    %3296 = vmatprep.subr.mxu0 0.0
    %v3297 = vand.u32 %v160, 4294901760
    %v3298 = vsub.f32 %v160, %v3297
    %3299 = vmatpush2.msra.mxu0 %v3298
    %3300 = vmatprep.subr.mxu0 0.0
    %v3301 = vand.u32 %v159, 4294901760
    %v3302 = vsub.f32 %v159, %v3301
    %3303 = vmatpush2.msra.mxu0 %v3302
    %3304 = vmatprep.subr.mxu0 0.0
    %v3305 = vand.u32 %v158, 4294901760
    %v3306 = vsub.f32 %v158, %v3305
    %3307 = vmatpush2.msra.mxu0 %v3306
    %3308 = vmatprep.subr.mxu0 0.0
    %v3309 = vand.u32 %v157, 4294901760
    %v3310 = vsub.f32 %v157, %v3309
    %3311 = vmatpush2.msra.mxu0 %v3310
    %3312 = vmatprep.subr.mxu0 0.0
    %v3313 = vand.u32 %v156, 4294901760
    %v3314 = vsub.f32 %v156, %v3313
    %3315 = vmatpush2.msra.mxu0 %v3314
    %v3316 = vand.u32 %v239, 4294901760
    %v3317 = vsub.f32 %v239, %v3316
    %3318 = vmatprep.mubr.f32.mxu0 %v3317
    %v3319 = vand.u32 %v235, 4294901760
    %v3320 = vsub.f32 %v235, %v3319
    %3321 = vmatmul.mubr.f32.gmra.mxu0 %v3320
    %v3322 = vpop.f32.mrf.mxu0
    %v3323 = vadd.f32 %v3185, %v3322
    %v3324 = vpop.f32.mrf.mxu0
    %3325 = vdwg.mxu0
    %3326 = vmatprep.subr.mxu0 0.0
    %v3327 = vand.u32 %v155, 4294901760
    %3328 = vmatpush1.msra.mxu0 %v3327
    %3329 = vmatprep.subr.mxu0 0.0
    %v3330 = vand.u32 %v154, 4294901760
    %3331 = vmatpush1.msra.mxu0 %v3330
    %3332 = vmatprep.subr.mxu0 0.0
    %v3333 = vand.u32 %v153, 4294901760
    %3334 = vmatpush1.msra.mxu0 %v3333
    %3335 = vmatprep.subr.mxu0 0.0
    %v3336 = vand.u32 %v152, 4294901760
    %3337 = vmatpush1.msra.mxu0 %v3336
    %3338 = vmatprep.subr.mxu0 0.0
    %v3339 = vand.u32 %v151, 4294901760
    %3340 = vmatpush1.msra.mxu0 %v3339
    %3341 = vmatprep.subr.mxu0 0.0
    %v3342 = vand.u32 %v150, 4294901760
    %3343 = vmatpush1.msra.mxu0 %v3342
    %3344 = vmatprep.subr.mxu0 0.0
    %v3345 = vand.u32 %v149, 4294901760
    %3346 = vmatpush1.msra.mxu0 %v3345
    %3347 = vmatprep.subr.mxu0 0.0
    %v3348 = vand.u32 %v148, 4294901760
    %3349 = vmatpush1.msra.mxu0 %v3348
    %3350 = vmatprep.subr.mxu0 0.0
    %v3351 = vand.u32 %v147, 4294901760
    %3352 = vmatpush1.msra.mxu0 %v3351
    %3353 = vmatprep.subr.mxu0 0.0
    %v3354 = vand.u32 %v146, 4294901760
    %3355 = vmatpush1.msra.mxu0 %v3354
    %3356 = vmatprep.subr.mxu0 0.0
    %v3357 = vand.u32 %v145, 4294901760
    %3358 = vmatpush1.msra.mxu0 %v3357
    %3359 = vmatprep.subr.mxu0 0.0
    %v3360 = vand.u32 %v144, 4294901760
    %3361 = vmatpush1.msra.mxu0 %v3360
    %3362 = vmatprep.subr.mxu0 0.0
    %v3363 = vand.u32 %v143, 4294901760
    %3364 = vmatpush1.msra.mxu0 %v3363
    %3365 = vmatprep.subr.mxu0 0.0
    %v3366 = vand.u32 %v142, 4294901760
    %3367 = vmatpush1.msra.mxu0 %v3366
    %3368 = vmatprep.subr.mxu0 0.0
    %v3369 = vand.u32 %v141, 4294901760
    %3370 = vmatpush1.msra.mxu0 %v3369
    %3371 = vmatprep.subr.mxu0 0.0
    %v3372 = vand.u32 %v140, 4294901760
    %3373 = vmatpush1.msra.mxu0 %v3372
    %3374 = vmatprep.subr.mxu0 0.0
    %v3375 = vand.u32 %v171, 4294901760
    %3376 = vmatpush2.msra.mxu0 %v3375
    %3377 = vmatprep.subr.mxu0 0.0
    %v3378 = vand.u32 %v170, 4294901760
    %3379 = vmatpush2.msra.mxu0 %v3378
    %3380 = vmatprep.subr.mxu0 0.0
    %v3381 = vand.u32 %v169, 4294901760
    %3382 = vmatpush2.msra.mxu0 %v3381
    %3383 = vmatprep.subr.mxu0 0.0
    %v3384 = vand.u32 %v168, 4294901760
    %3385 = vmatpush2.msra.mxu0 %v3384
    %3386 = vmatprep.subr.mxu0 0.0
    %v3387 = vand.u32 %v167, 4294901760
    %3388 = vmatpush2.msra.mxu0 %v3387
    %3389 = vmatprep.subr.mxu0 0.0
    %v3390 = vand.u32 %v166, 4294901760
    %3391 = vmatpush2.msra.mxu0 %v3390
    %3392 = vmatprep.subr.mxu0 0.0
    %v3393 = vand.u32 %v165, 4294901760
    %3394 = vmatpush2.msra.mxu0 %v3393
    %3395 = vmatprep.subr.mxu0 0.0
    %v3396 = vand.u32 %v164, 4294901760
    %3397 = vmatpush2.msra.mxu0 %v3396
    %3398 = vmatprep.subr.mxu0 0.0
    %v3399 = vand.u32 %v163, 4294901760
    %3400 = vmatpush2.msra.mxu0 %v3399
    %3401 = vmatprep.subr.mxu0 0.0
    %v3402 = vand.u32 %v162, 4294901760
    %3403 = vmatpush2.msra.mxu0 %v3402
    %3404 = vmatprep.subr.mxu0 0.0
    %v3405 = vand.u32 %v161, 4294901760
    %3406 = vmatpush2.msra.mxu0 %v3405
    %3407 = vmatprep.subr.mxu0 0.0
    %v3408 = vand.u32 %v160, 4294901760
    %3409 = vmatpush2.msra.mxu0 %v3408
    %3410 = vmatprep.subr.mxu0 0.0
    %v3411 = vand.u32 %v159, 4294901760
    %3412 = vmatpush2.msra.mxu0 %v3411
    %3413 = vmatprep.subr.mxu0 0.0
    %v3414 = vand.u32 %v158, 4294901760
    %3415 = vmatpush2.msra.mxu0 %v3414
    %3416 = vmatprep.subr.mxu0 0.0
    %v3417 = vand.u32 %v157, 4294901760
    %3418 = vmatpush2.msra.mxu0 %v3417
    %3419 = vmatprep.subr.mxu0 0.0
    %v3420 = vand.u32 %v156, 4294901760
    %3421 = vmatpush2.msra.mxu0 %v3420
    %v3422 = vand.u32 %v239, 4294901760
    %v3423 = vsub.f32 %v239, %v3422
    %v3424 = vand.u32 %v3423, 4294901760
    %3425 = vmatprep.mubr.f32.mxu0 %v3424
    %v3426 = vand.u32 %v235, 4294901760
    %v3427 = vsub.f32 %v235, %v3426
    %v3428 = vand.u32 %v3427, 4294901760
    %3429 = vmatmul.mubr.f32.gmra.mxu0 %v3428
    %v3430 = vpop.f32.mrf.mxu0
    %v3431 = vadd.f32 %v3323, %v3430
    %v3432 = vpop.f32.mrf.mxu0
    %3433 = vdwg.mxu0
    %3434 = vmatprep.subr.mxu0 0.0
    %v3435 = vand.u32 %v155, 4294901760
    %v3436 = vsub.f32 %v155, %v3435
    %v3437 = vand.u32 %v3436, 4294901760
    %3438 = vmatpush1.msra.mxu0 %v3437
    %3439 = vmatprep.subr.mxu0 0.0
    %v3440 = vand.u32 %v154, 4294901760
    %v3441 = vsub.f32 %v154, %v3440
    %v3442 = vand.u32 %v3441, 4294901760
    %3443 = vmatpush1.msra.mxu0 %v3442
    %3444 = vmatprep.subr.mxu0 0.0
    %v3445 = vand.u32 %v153, 4294901760
    %v3446 = vsub.f32 %v153, %v3445
    %v3447 = vand.u32 %v3446, 4294901760
    %3448 = vmatpush1.msra.mxu0 %v3447
    %3449 = vmatprep.subr.mxu0 0.0
    %v3450 = vand.u32 %v152, 4294901760
    %v3451 = vsub.f32 %v152, %v3450
    %v3452 = vand.u32 %v3451, 4294901760
    %3453 = vmatpush1.msra.mxu0 %v3452
    %3454 = vmatprep.subr.mxu0 0.0
    %v3455 = vand.u32 %v151, 4294901760
    %v3456 = vsub.f32 %v151, %v3455
    %v3457 = vand.u32 %v3456, 4294901760
    %3458 = vmatpush1.msra.mxu0 %v3457
    %3459 = vmatprep.subr.mxu0 0.0
    %v3460 = vand.u32 %v150, 4294901760
    %v3461 = vsub.f32 %v150, %v3460
    %v3462 = vand.u32 %v3461, 4294901760
    %3463 = vmatpush1.msra.mxu0 %v3462
    %3464 = vmatprep.subr.mxu0 0.0
    %v3465 = vand.u32 %v149, 4294901760
    %v3466 = vsub.f32 %v149, %v3465
    %v3467 = vand.u32 %v3466, 4294901760
    %3468 = vmatpush1.msra.mxu0 %v3467
    %3469 = vmatprep.subr.mxu0 0.0
    %v3470 = vand.u32 %v148, 4294901760
    %v3471 = vsub.f32 %v148, %v3470
    %v3472 = vand.u32 %v3471, 4294901760
    %3473 = vmatpush1.msra.mxu0 %v3472
    %3474 = vmatprep.subr.mxu0 0.0
    %v3475 = vand.u32 %v147, 4294901760
    %v3476 = vsub.f32 %v147, %v3475
    %v3477 = vand.u32 %v3476, 4294901760
    %3478 = vmatpush1.msra.mxu0 %v3477
    %3479 = vmatprep.subr.mxu0 0.0
    %v3480 = vand.u32 %v146, 4294901760
    %v3481 = vsub.f32 %v146, %v3480
    %v3482 = vand.u32 %v3481, 4294901760
    %3483 = vmatpush1.msra.mxu0 %v3482
    %3484 = vmatprep.subr.mxu0 0.0
    %v3485 = vand.u32 %v145, 4294901760
    %v3486 = vsub.f32 %v145, %v3485
    %v3487 = vand.u32 %v3486, 4294901760
    %3488 = vmatpush1.msra.mxu0 %v3487
    %3489 = vmatprep.subr.mxu0 0.0
    %v3490 = vand.u32 %v144, 4294901760
    %v3491 = vsub.f32 %v144, %v3490
    %v3492 = vand.u32 %v3491, 4294901760
    %3493 = vmatpush1.msra.mxu0 %v3492
    %3494 = vmatprep.subr.mxu0 0.0
    %v3495 = vand.u32 %v143, 4294901760
    %v3496 = vsub.f32 %v143, %v3495
    %v3497 = vand.u32 %v3496, 4294901760
    %3498 = vmatpush1.msra.mxu0 %v3497
    %3499 = vmatprep.subr.mxu0 0.0
    %v3500 = vand.u32 %v142, 4294901760
    %v3501 = vsub.f32 %v142, %v3500
    %v3502 = vand.u32 %v3501, 4294901760
    %3503 = vmatpush1.msra.mxu0 %v3502
    %3504 = vmatprep.subr.mxu0 0.0
    %v3505 = vand.u32 %v141, 4294901760
    %v3506 = vsub.f32 %v141, %v3505
    %v3507 = vand.u32 %v3506, 4294901760
    %3508 = vmatpush1.msra.mxu0 %v3507
    %3509 = vmatprep.subr.mxu0 0.0
    %v3510 = vand.u32 %v140, 4294901760
    %v3511 = vsub.f32 %v140, %v3510
    %v3512 = vand.u32 %v3511, 4294901760
    %3513 = vmatpush1.msra.mxu0 %v3512
    %3514 = vmatprep.subr.mxu0 0.0
    %v3515 = vand.u32 %v171, 4294901760
    %v3516 = vsub.f32 %v171, %v3515
    %v3517 = vand.u32 %v3516, 4294901760
    %3518 = vmatpush2.msra.mxu0 %v3517
    %3519 = vmatprep.subr.mxu0 0.0
    %v3520 = vand.u32 %v170, 4294901760
    %v3521 = vsub.f32 %v170, %v3520
    %v3522 = vand.u32 %v3521, 4294901760
    %3523 = vmatpush2.msra.mxu0 %v3522
    %3524 = vmatprep.subr.mxu0 0.0
    %v3525 = vand.u32 %v169, 4294901760
    %v3526 = vsub.f32 %v169, %v3525
    %v3527 = vand.u32 %v3526, 4294901760
    %3528 = vmatpush2.msra.mxu0 %v3527
    %3529 = vmatprep.subr.mxu0 0.0
    %v3530 = vand.u32 %v168, 4294901760
    %v3531 = vsub.f32 %v168, %v3530
    %v3532 = vand.u32 %v3531, 4294901760
    %3533 = vmatpush2.msra.mxu0 %v3532
    %3534 = vmatprep.subr.mxu0 0.0
    %v3535 = vand.u32 %v167, 4294901760
    %v3536 = vsub.f32 %v167, %v3535
    %v3537 = vand.u32 %v3536, 4294901760
    %3538 = vmatpush2.msra.mxu0 %v3537
    %3539 = vmatprep.subr.mxu0 0.0
    %v3540 = vand.u32 %v166, 4294901760
    %v3541 = vsub.f32 %v166, %v3540
    %v3542 = vand.u32 %v3541, 4294901760
    %3543 = vmatpush2.msra.mxu0 %v3542
    %3544 = vmatprep.subr.mxu0 0.0
    %v3545 = vand.u32 %v165, 4294901760
    %v3546 = vsub.f32 %v165, %v3545
    %v3547 = vand.u32 %v3546, 4294901760
    %3548 = vmatpush2.msra.mxu0 %v3547
    %3549 = vmatprep.subr.mxu0 0.0
    %v3550 = vand.u32 %v164, 4294901760
    %v3551 = vsub.f32 %v164, %v3550
    %v3552 = vand.u32 %v3551, 4294901760
    %3553 = vmatpush2.msra.mxu0 %v3552
    %3554 = vmatprep.subr.mxu0 0.0
    %v3555 = vand.u32 %v163, 4294901760
    %v3556 = vsub.f32 %v163, %v3555
    %v3557 = vand.u32 %v3556, 4294901760
    %3558 = vmatpush2.msra.mxu0 %v3557
    %3559 = vmatprep.subr.mxu0 0.0
    %v3560 = vand.u32 %v162, 4294901760
    %v3561 = vsub.f32 %v162, %v3560
    %v3562 = vand.u32 %v3561, 4294901760
    %3563 = vmatpush2.msra.mxu0 %v3562
    %3564 = vmatprep.subr.mxu0 0.0
    %v3565 = vand.u32 %v161, 4294901760
    %v3566 = vsub.f32 %v161, %v3565
    %v3567 = vand.u32 %v3566, 4294901760
    %3568 = vmatpush2.msra.mxu0 %v3567
    %3569 = vmatprep.subr.mxu0 0.0
    %v3570 = vand.u32 %v160, 4294901760
    %v3571 = vsub.f32 %v160, %v3570
    %v3572 = vand.u32 %v3571, 4294901760
    %3573 = vmatpush2.msra.mxu0 %v3572
    %3574 = vmatprep.subr.mxu0 0.0
    %v3575 = vand.u32 %v159, 4294901760
    %v3576 = vsub.f32 %v159, %v3575
    %v3577 = vand.u32 %v3576, 4294901760
    %3578 = vmatpush2.msra.mxu0 %v3577
    %3579 = vmatprep.subr.mxu0 0.0
    %v3580 = vand.u32 %v158, 4294901760
    %v3581 = vsub.f32 %v158, %v3580
    %v3582 = vand.u32 %v3581, 4294901760
    %3583 = vmatpush2.msra.mxu0 %v3582
    %3584 = vmatprep.subr.mxu0 0.0
    %v3585 = vand.u32 %v157, 4294901760
    %v3586 = vsub.f32 %v157, %v3585
    %v3587 = vand.u32 %v3586, 4294901760
    %3588 = vmatpush2.msra.mxu0 %v3587
    %3589 = vmatprep.subr.mxu0 0.0
    %v3590 = vand.u32 %v156, 4294901760
    %v3591 = vsub.f32 %v156, %v3590
    %v3592 = vand.u32 %v3591, 4294901760
    %3593 = vmatpush2.msra.mxu0 %v3592
    %v3594 = vand.u32 %v239, 4294901760
    %3595 = vmatprep.mubr.f32.mxu0 %v3594
    %v3596 = vand.u32 %v235, 4294901760
    %3597 = vmatmul.mubr.f32.gmra.mxu0 %v3596
    %v3598 = vpop.f32.mrf.mxu0
    %v3599 = vadd.f32 %v3431, %v3598
    %v3600 = vpop.f32.mrf.mxu0
    %3601 = vdwg.mxu0
    %3602 = vmatprep.subr.mxu0 0.0
    %v3603 = vand.u32 %v155, 4294901760
    %3604 = vmatpush1.msra.mxu0 %v3603
    %3605 = vmatprep.subr.mxu0 0.0
    %v3606 = vand.u32 %v154, 4294901760
    %3607 = vmatpush1.msra.mxu0 %v3606
    %3608 = vmatprep.subr.mxu0 0.0
    %v3609 = vand.u32 %v153, 4294901760
    %3610 = vmatpush1.msra.mxu0 %v3609
    %3611 = vmatprep.subr.mxu0 0.0
    %v3612 = vand.u32 %v152, 4294901760
    %3613 = vmatpush1.msra.mxu0 %v3612
    %3614 = vmatprep.subr.mxu0 0.0
    %v3615 = vand.u32 %v151, 4294901760
    %3616 = vmatpush1.msra.mxu0 %v3615
    %3617 = vmatprep.subr.mxu0 0.0
    %v3618 = vand.u32 %v150, 4294901760
    %3619 = vmatpush1.msra.mxu0 %v3618
    %3620 = vmatprep.subr.mxu0 0.0
    %v3621 = vand.u32 %v149, 4294901760
    %3622 = vmatpush1.msra.mxu0 %v3621
    %3623 = vmatprep.subr.mxu0 0.0
    %v3624 = vand.u32 %v148, 4294901760
    %3625 = vmatpush1.msra.mxu0 %v3624
    %3626 = vmatprep.subr.mxu0 0.0
    %v3627 = vand.u32 %v147, 4294901760
    %3628 = vmatpush1.msra.mxu0 %v3627
    %3629 = vmatprep.subr.mxu0 0.0
    %v3630 = vand.u32 %v146, 4294901760
    %3631 = vmatpush1.msra.mxu0 %v3630
    %3632 = vmatprep.subr.mxu0 0.0
    %v3633 = vand.u32 %v145, 4294901760
    %3634 = vmatpush1.msra.mxu0 %v3633
    %3635 = vmatprep.subr.mxu0 0.0
    %v3636 = vand.u32 %v144, 4294901760
    %3637 = vmatpush1.msra.mxu0 %v3636
    %3638 = vmatprep.subr.mxu0 0.0
    %v3639 = vand.u32 %v143, 4294901760
    %3640 = vmatpush1.msra.mxu0 %v3639
    %3641 = vmatprep.subr.mxu0 0.0
    %v3642 = vand.u32 %v142, 4294901760
    %3643 = vmatpush1.msra.mxu0 %v3642
    %3644 = vmatprep.subr.mxu0 0.0
    %v3645 = vand.u32 %v141, 4294901760
    %3646 = vmatpush1.msra.mxu0 %v3645
    %3647 = vmatprep.subr.mxu0 0.0
    %v3648 = vand.u32 %v140, 4294901760
    %3649 = vmatpush1.msra.mxu0 %v3648
    %3650 = vmatprep.subr.mxu0 0.0
    %v3651 = vand.u32 %v171, 4294901760
    %3652 = vmatpush2.msra.mxu0 %v3651
    %3653 = vmatprep.subr.mxu0 0.0
    %v3654 = vand.u32 %v170, 4294901760
    %3655 = vmatpush2.msra.mxu0 %v3654
    %3656 = vmatprep.subr.mxu0 0.0
    %v3657 = vand.u32 %v169, 4294901760
    %3658 = vmatpush2.msra.mxu0 %v3657
    %3659 = vmatprep.subr.mxu0 0.0
    %v3660 = vand.u32 %v168, 4294901760
    %3661 = vmatpush2.msra.mxu0 %v3660
    %3662 = vmatprep.subr.mxu0 0.0
    %v3663 = vand.u32 %v167, 4294901760
    %3664 = vmatpush2.msra.mxu0 %v3663
    %3665 = vmatprep.subr.mxu0 0.0
    %v3666 = vand.u32 %v166, 4294901760
    %3667 = vmatpush2.msra.mxu0 %v3666
    %3668 = vmatprep.subr.mxu0 0.0
    %v3669 = vand.u32 %v165, 4294901760
    %3670 = vmatpush2.msra.mxu0 %v3669
    %3671 = vmatprep.subr.mxu0 0.0
    %v3672 = vand.u32 %v164, 4294901760
    %3673 = vmatpush2.msra.mxu0 %v3672
    %3674 = vmatprep.subr.mxu0 0.0
    %v3675 = vand.u32 %v163, 4294901760
    %3676 = vmatpush2.msra.mxu0 %v3675
    %3677 = vmatprep.subr.mxu0 0.0
    %v3678 = vand.u32 %v162, 4294901760
    %3679 = vmatpush2.msra.mxu0 %v3678
    %3680 = vmatprep.subr.mxu0 0.0
    %v3681 = vand.u32 %v161, 4294901760
    %3682 = vmatpush2.msra.mxu0 %v3681
    %3683 = vmatprep.subr.mxu0 0.0
    %v3684 = vand.u32 %v160, 4294901760
    %3685 = vmatpush2.msra.mxu0 %v3684
    %3686 = vmatprep.subr.mxu0 0.0
    %v3687 = vand.u32 %v159, 4294901760
    %3688 = vmatpush2.msra.mxu0 %v3687
    %3689 = vmatprep.subr.mxu0 0.0
    %v3690 = vand.u32 %v158, 4294901760
    %3691 = vmatpush2.msra.mxu0 %v3690
    %3692 = vmatprep.subr.mxu0 0.0
    %v3693 = vand.u32 %v157, 4294901760
    %3694 = vmatpush2.msra.mxu0 %v3693
    %3695 = vmatprep.subr.mxu0 0.0
    %v3696 = vand.u32 %v156, 4294901760
    %3697 = vmatpush2.msra.mxu0 %v3696
    %v3698 = vand.u32 %v239, 4294901760
    %3699 = vmatprep.mubr.f32.mxu0 %v3698
    %v3700 = vand.u32 %v235, 4294901760
    %3701 = vmatmul.mubr.f32.gmra.mxu0 %v3700
    %v3702 = vpop.f32.mrf.mxu0
    %v3703 = vadd.f32 %v3599, %v3702
    %v3704 = vpop.f32.mrf.mxu0
    %3705 = vdwg.mxu0
    %3706 = vmatprep.subr.mxu0 0.0
    %v3707 = vand.u32 %v187, 4294901760
    %3708 = vmatpush1.msra.mxu0 %v3707
    %3709 = vmatprep.subr.mxu0 0.0
    %v3710 = vand.u32 %v186, 4294901760
    %3711 = vmatpush1.msra.mxu0 %v3710
    %3712 = vmatprep.subr.mxu0 0.0
    %v3713 = vand.u32 %v185, 4294901760
    %3714 = vmatpush1.msra.mxu0 %v3713
    %3715 = vmatprep.subr.mxu0 0.0
    %v3716 = vand.u32 %v184, 4294901760
    %3717 = vmatpush1.msra.mxu0 %v3716
    %3718 = vmatprep.subr.mxu0 0.0
    %v3719 = vand.u32 %v183, 4294901760
    %3720 = vmatpush1.msra.mxu0 %v3719
    %3721 = vmatprep.subr.mxu0 0.0
    %v3722 = vand.u32 %v182, 4294901760
    %3723 = vmatpush1.msra.mxu0 %v3722
    %3724 = vmatprep.subr.mxu0 0.0
    %v3725 = vand.u32 %v181, 4294901760
    %3726 = vmatpush1.msra.mxu0 %v3725
    %3727 = vmatprep.subr.mxu0 0.0
    %v3728 = vand.u32 %v180, 4294901760
    %3729 = vmatpush1.msra.mxu0 %v3728
    %3730 = vmatprep.subr.mxu0 0.0
    %v3731 = vand.u32 %v179, 4294901760
    %3732 = vmatpush1.msra.mxu0 %v3731
    %3733 = vmatprep.subr.mxu0 0.0
    %v3734 = vand.u32 %v178, 4294901760
    %3735 = vmatpush1.msra.mxu0 %v3734
    %3736 = vmatprep.subr.mxu0 0.0
    %v3737 = vand.u32 %v177, 4294901760
    %3738 = vmatpush1.msra.mxu0 %v3737
    %3739 = vmatprep.subr.mxu0 0.0
    %v3740 = vand.u32 %v176, 4294901760
    %3741 = vmatpush1.msra.mxu0 %v3740
    %3742 = vmatprep.subr.mxu0 0.0
    %v3743 = vand.u32 %v175, 4294901760
    %3744 = vmatpush1.msra.mxu0 %v3743
    %3745 = vmatprep.subr.mxu0 0.0
    %v3746 = vand.u32 %v174, 4294901760
    %3747 = vmatpush1.msra.mxu0 %v3746
    %3748 = vmatprep.subr.mxu0 0.0
    %v3749 = vand.u32 %v173, 4294901760
    %3750 = vmatpush1.msra.mxu0 %v3749
    %3751 = vmatprep.subr.mxu0 0.0
    %v3752 = vand.u32 %v172, 4294901760
    %3753 = vmatpush1.msra.mxu0 %v3752
    %3754 = vmatprep.subr.mxu0 0.0
    %v3755 = vand.u32 %v203, 4294901760
    %3756 = vmatpush2.msra.mxu0 %v3755
    %3757 = vmatprep.subr.mxu0 0.0
    %v3758 = vand.u32 %v202, 4294901760
    %3759 = vmatpush2.msra.mxu0 %v3758
    %3760 = vmatprep.subr.mxu0 0.0
    %v3761 = vand.u32 %v201, 4294901760
    %3762 = vmatpush2.msra.mxu0 %v3761
    %3763 = vmatprep.subr.mxu0 0.0
    %v3764 = vand.u32 %v200, 4294901760
    %3765 = vmatpush2.msra.mxu0 %v3764
    %3766 = vmatprep.subr.mxu0 0.0
    %v3767 = vand.u32 %v199, 4294901760
    %3768 = vmatpush2.msra.mxu0 %v3767
    %3769 = vmatprep.subr.mxu0 0.0
    %v3770 = vand.u32 %v198, 4294901760
    %3771 = vmatpush2.msra.mxu0 %v3770
    %3772 = vmatprep.subr.mxu0 0.0
    %v3773 = vand.u32 %v197, 4294901760
    %3774 = vmatpush2.msra.mxu0 %v3773
    %3775 = vmatprep.subr.mxu0 0.0
    %v3776 = vand.u32 %v196, 4294901760
    %3777 = vmatpush2.msra.mxu0 %v3776
    %3778 = vmatprep.subr.mxu0 0.0
    %v3779 = vand.u32 %v195, 4294901760
    %3780 = vmatpush2.msra.mxu0 %v3779
    %3781 = vmatprep.subr.mxu0 0.0
    %v3782 = vand.u32 %v194, 4294901760
    %3783 = vmatpush2.msra.mxu0 %v3782
    %3784 = vmatprep.subr.mxu0 0.0
    %v3785 = vand.u32 %v193, 4294901760
    %3786 = vmatpush2.msra.mxu0 %v3785
    %3787 = vmatprep.subr.mxu0 0.0
    %v3788 = vand.u32 %v192, 4294901760
    %3789 = vmatpush2.msra.mxu0 %v3788
    %3790 = vmatprep.subr.mxu0 0.0
    %v3791 = vand.u32 %v191, 4294901760
    %3792 = vmatpush2.msra.mxu0 %v3791
    %3793 = vmatprep.subr.mxu0 0.0
    %v3794 = vand.u32 %v190, 4294901760
    %3795 = vmatpush2.msra.mxu0 %v3794
    %3796 = vmatprep.subr.mxu0 0.0
    %v3797 = vand.u32 %v189, 4294901760
    %3798 = vmatpush2.msra.mxu0 %v3797
    %3799 = vmatprep.subr.mxu0 0.0
    %v3800 = vand.u32 %v188, 4294901760
    %3801 = vmatpush2.msra.mxu0 %v3800
    %v3802 = vand.u32 %v247, 4294901760
    %v3803 = vsub.f32 %v247, %v3802
    %v3804 = vand.u32 %v3803, 4294901760
    %v3805 = vsub.f32 %v3803, %v3804
    %v3806 = vand.u32 %v3805, 4294901760
    %3807 = vmatprep.mubr.f32.mxu0 %v3806
    %v3808 = vand.u32 %v243, 4294901760
    %v3809 = vsub.f32 %v243, %v3808
    %v3810 = vand.u32 %v3809, 4294901760
    %v3811 = vsub.f32 %v3809, %v3810
    %v3812 = vand.u32 %v3811, 4294901760
    %3813 = vmatmul.mubr.f32.gmra.mxu0 %v3812
    %v3814 = vpop.f32.mrf.mxu0
    %v3815 = vadd.f32 %v3703, %v3814
    %v3816 = vpop.f32.mrf.mxu0
    %3817 = vdwg.mxu0
    %3818 = vmatprep.subr.mxu0 0.0
    %v3819 = vand.u32 %v187, 4294901760
    %v3820 = vsub.f32 %v187, %v3819
    %v3821 = vand.u32 %v3820, 4294901760
    %v3822 = vsub.f32 %v3820, %v3821
    %v3823 = vand.u32 %v3822, 4294901760
    %3824 = vmatpush1.msra.mxu0 %v3823
    %3825 = vmatprep.subr.mxu0 0.0
    %v3826 = vand.u32 %v186, 4294901760
    %v3827 = vsub.f32 %v186, %v3826
    %v3828 = vand.u32 %v3827, 4294901760
    %v3829 = vsub.f32 %v3827, %v3828
    %v3830 = vand.u32 %v3829, 4294901760
    %3831 = vmatpush1.msra.mxu0 %v3830
    %3832 = vmatprep.subr.mxu0 0.0
    %v3833 = vand.u32 %v185, 4294901760
    %v3834 = vsub.f32 %v185, %v3833
    %v3835 = vand.u32 %v3834, 4294901760
    %v3836 = vsub.f32 %v3834, %v3835
    %v3837 = vand.u32 %v3836, 4294901760
    %3838 = vmatpush1.msra.mxu0 %v3837
    %3839 = vmatprep.subr.mxu0 0.0
    %v3840 = vand.u32 %v184, 4294901760
    %v3841 = vsub.f32 %v184, %v3840
    %v3842 = vand.u32 %v3841, 4294901760
    %v3843 = vsub.f32 %v3841, %v3842
    %v3844 = vand.u32 %v3843, 4294901760
    %3845 = vmatpush1.msra.mxu0 %v3844
    %3846 = vmatprep.subr.mxu0 0.0
    %v3847 = vand.u32 %v183, 4294901760
    %v3848 = vsub.f32 %v183, %v3847
    %v3849 = vand.u32 %v3848, 4294901760
    %v3850 = vsub.f32 %v3848, %v3849
    %v3851 = vand.u32 %v3850, 4294901760
    %3852 = vmatpush1.msra.mxu0 %v3851
    %3853 = vmatprep.subr.mxu0 0.0
    %v3854 = vand.u32 %v182, 4294901760
    %v3855 = vsub.f32 %v182, %v3854
    %v3856 = vand.u32 %v3855, 4294901760
    %v3857 = vsub.f32 %v3855, %v3856
    %v3858 = vand.u32 %v3857, 4294901760
    %3859 = vmatpush1.msra.mxu0 %v3858
    %3860 = vmatprep.subr.mxu0 0.0
    %v3861 = vand.u32 %v181, 4294901760
    %v3862 = vsub.f32 %v181, %v3861
    %v3863 = vand.u32 %v3862, 4294901760
    %v3864 = vsub.f32 %v3862, %v3863
    %v3865 = vand.u32 %v3864, 4294901760
    %3866 = vmatpush1.msra.mxu0 %v3865
    %3867 = vmatprep.subr.mxu0 0.0
    %v3868 = vand.u32 %v180, 4294901760
    %v3869 = vsub.f32 %v180, %v3868
    %v3870 = vand.u32 %v3869, 4294901760
    %v3871 = vsub.f32 %v3869, %v3870
    %v3872 = vand.u32 %v3871, 4294901760
    %3873 = vmatpush1.msra.mxu0 %v3872
    %3874 = vmatprep.subr.mxu0 0.0
    %v3875 = vand.u32 %v179, 4294901760
    %v3876 = vsub.f32 %v179, %v3875
    %v3877 = vand.u32 %v3876, 4294901760
    %v3878 = vsub.f32 %v3876, %v3877
    %v3879 = vand.u32 %v3878, 4294901760
    %3880 = vmatpush1.msra.mxu0 %v3879
    %3881 = vmatprep.subr.mxu0 0.0
    %v3882 = vand.u32 %v178, 4294901760
    %v3883 = vsub.f32 %v178, %v3882
    %v3884 = vand.u32 %v3883, 4294901760
    %v3885 = vsub.f32 %v3883, %v3884
    %v3886 = vand.u32 %v3885, 4294901760
    %3887 = vmatpush1.msra.mxu0 %v3886
    %3888 = vmatprep.subr.mxu0 0.0
    %v3889 = vand.u32 %v177, 4294901760
    %v3890 = vsub.f32 %v177, %v3889
    %v3891 = vand.u32 %v3890, 4294901760
    %v3892 = vsub.f32 %v3890, %v3891
    %v3893 = vand.u32 %v3892, 4294901760
    %3894 = vmatpush1.msra.mxu0 %v3893
    %3895 = vmatprep.subr.mxu0 0.0
    %v3896 = vand.u32 %v176, 4294901760
    %v3897 = vsub.f32 %v176, %v3896
    %v3898 = vand.u32 %v3897, 4294901760
    %v3899 = vsub.f32 %v3897, %v3898
    %v3900 = vand.u32 %v3899, 4294901760
    %3901 = vmatpush1.msra.mxu0 %v3900
    %3902 = vmatprep.subr.mxu0 0.0
    %v3903 = vand.u32 %v175, 4294901760
    %v3904 = vsub.f32 %v175, %v3903
    %v3905 = vand.u32 %v3904, 4294901760
    %v3906 = vsub.f32 %v3904, %v3905
    %v3907 = vand.u32 %v3906, 4294901760
    %3908 = vmatpush1.msra.mxu0 %v3907
    %3909 = vmatprep.subr.mxu0 0.0
    %v3910 = vand.u32 %v174, 4294901760
    %v3911 = vsub.f32 %v174, %v3910
    %v3912 = vand.u32 %v3911, 4294901760
    %v3913 = vsub.f32 %v3911, %v3912
    %v3914 = vand.u32 %v3913, 4294901760
    %3915 = vmatpush1.msra.mxu0 %v3914
    %3916 = vmatprep.subr.mxu0 0.0
    %v3917 = vand.u32 %v173, 4294901760
    %v3918 = vsub.f32 %v173, %v3917
    %v3919 = vand.u32 %v3918, 4294901760
    %v3920 = vsub.f32 %v3918, %v3919
    %v3921 = vand.u32 %v3920, 4294901760
    %3922 = vmatpush1.msra.mxu0 %v3921
    %3923 = vmatprep.subr.mxu0 0.0
    %v3924 = vand.u32 %v172, 4294901760
    %v3925 = vsub.f32 %v172, %v3924
    %v3926 = vand.u32 %v3925, 4294901760
    %v3927 = vsub.f32 %v3925, %v3926
    %v3928 = vand.u32 %v3927, 4294901760
    %3929 = vmatpush1.msra.mxu0 %v3928
    %3930 = vmatprep.subr.mxu0 0.0
    %v3931 = vand.u32 %v203, 4294901760
    %v3932 = vsub.f32 %v203, %v3931
    %v3933 = vand.u32 %v3932, 4294901760
    %v3934 = vsub.f32 %v3932, %v3933
    %v3935 = vand.u32 %v3934, 4294901760
    %3936 = vmatpush2.msra.mxu0 %v3935
    %3937 = vmatprep.subr.mxu0 0.0
    %v3938 = vand.u32 %v202, 4294901760
    %v3939 = vsub.f32 %v202, %v3938
    %v3940 = vand.u32 %v3939, 4294901760
    %v3941 = vsub.f32 %v3939, %v3940
    %v3942 = vand.u32 %v3941, 4294901760
    %3943 = vmatpush2.msra.mxu0 %v3942
    %3944 = vmatprep.subr.mxu0 0.0
    %v3945 = vand.u32 %v201, 4294901760
    %v3946 = vsub.f32 %v201, %v3945
    %v3947 = vand.u32 %v3946, 4294901760
    %v3948 = vsub.f32 %v3946, %v3947
    %v3949 = vand.u32 %v3948, 4294901760
    %3950 = vmatpush2.msra.mxu0 %v3949
    %3951 = vmatprep.subr.mxu0 0.0
    %v3952 = vand.u32 %v200, 4294901760
    %v3953 = vsub.f32 %v200, %v3952
    %v3954 = vand.u32 %v3953, 4294901760
    %v3955 = vsub.f32 %v3953, %v3954
    %v3956 = vand.u32 %v3955, 4294901760
    %3957 = vmatpush2.msra.mxu0 %v3956
    %3958 = vmatprep.subr.mxu0 0.0
    %v3959 = vand.u32 %v199, 4294901760
    %v3960 = vsub.f32 %v199, %v3959
    %v3961 = vand.u32 %v3960, 4294901760
    %v3962 = vsub.f32 %v3960, %v3961
    %v3963 = vand.u32 %v3962, 4294901760
    %3964 = vmatpush2.msra.mxu0 %v3963
    %3965 = vmatprep.subr.mxu0 0.0
    %v3966 = vand.u32 %v198, 4294901760
    %v3967 = vsub.f32 %v198, %v3966
    %v3968 = vand.u32 %v3967, 4294901760
    %v3969 = vsub.f32 %v3967, %v3968
    %v3970 = vand.u32 %v3969, 4294901760
    %3971 = vmatpush2.msra.mxu0 %v3970
    %3972 = vmatprep.subr.mxu0 0.0
    %v3973 = vand.u32 %v197, 4294901760
    %v3974 = vsub.f32 %v197, %v3973
    %v3975 = vand.u32 %v3974, 4294901760
    %v3976 = vsub.f32 %v3974, %v3975
    %v3977 = vand.u32 %v3976, 4294901760
    %3978 = vmatpush2.msra.mxu0 %v3977
    %3979 = vmatprep.subr.mxu0 0.0
    %v3980 = vand.u32 %v196, 4294901760
    %v3981 = vsub.f32 %v196, %v3980
    %v3982 = vand.u32 %v3981, 4294901760
    %v3983 = vsub.f32 %v3981, %v3982
    %v3984 = vand.u32 %v3983, 4294901760
    %3985 = vmatpush2.msra.mxu0 %v3984
    %3986 = vmatprep.subr.mxu0 0.0
    %v3987 = vand.u32 %v195, 4294901760
    %v3988 = vsub.f32 %v195, %v3987
    %v3989 = vand.u32 %v3988, 4294901760
    %v3990 = vsub.f32 %v3988, %v3989
    %v3991 = vand.u32 %v3990, 4294901760
    %3992 = vmatpush2.msra.mxu0 %v3991
    %3993 = vmatprep.subr.mxu0 0.0
    %v3994 = vand.u32 %v194, 4294901760
    %v3995 = vsub.f32 %v194, %v3994
    %v3996 = vand.u32 %v3995, 4294901760
    %v3997 = vsub.f32 %v3995, %v3996
    %v3998 = vand.u32 %v3997, 4294901760
    %3999 = vmatpush2.msra.mxu0 %v3998
    %4000 = vmatprep.subr.mxu0 0.0
    %v4001 = vand.u32 %v193, 4294901760
    %v4002 = vsub.f32 %v193, %v4001
    %v4003 = vand.u32 %v4002, 4294901760
    %v4004 = vsub.f32 %v4002, %v4003
    %v4005 = vand.u32 %v4004, 4294901760
    %4006 = vmatpush2.msra.mxu0 %v4005
    %4007 = vmatprep.subr.mxu0 0.0
    %v4008 = vand.u32 %v192, 4294901760
    %v4009 = vsub.f32 %v192, %v4008
    %v4010 = vand.u32 %v4009, 4294901760
    %v4011 = vsub.f32 %v4009, %v4010
    %v4012 = vand.u32 %v4011, 4294901760
    %4013 = vmatpush2.msra.mxu0 %v4012
    %4014 = vmatprep.subr.mxu0 0.0
    %v4015 = vand.u32 %v191, 4294901760
    %v4016 = vsub.f32 %v191, %v4015
    %v4017 = vand.u32 %v4016, 4294901760
    %v4018 = vsub.f32 %v4016, %v4017
    %v4019 = vand.u32 %v4018, 4294901760
    %4020 = vmatpush2.msra.mxu0 %v4019
    %4021 = vmatprep.subr.mxu0 0.0
    %v4022 = vand.u32 %v190, 4294901760
    %v4023 = vsub.f32 %v190, %v4022
    %v4024 = vand.u32 %v4023, 4294901760
    %v4025 = vsub.f32 %v4023, %v4024
    %v4026 = vand.u32 %v4025, 4294901760
    %4027 = vmatpush2.msra.mxu0 %v4026
    %4028 = vmatprep.subr.mxu0 0.0
    %v4029 = vand.u32 %v189, 4294901760
    %v4030 = vsub.f32 %v189, %v4029
    %v4031 = vand.u32 %v4030, 4294901760
    %v4032 = vsub.f32 %v4030, %v4031
    %v4033 = vand.u32 %v4032, 4294901760
    %4034 = vmatpush2.msra.mxu0 %v4033
    %4035 = vmatprep.subr.mxu0 0.0
    %v4036 = vand.u32 %v188, 4294901760
    %v4037 = vsub.f32 %v188, %v4036
    %v4038 = vand.u32 %v4037, 4294901760
    %v4039 = vsub.f32 %v4037, %v4038
    %v4040 = vand.u32 %v4039, 4294901760
    %4041 = vmatpush2.msra.mxu0 %v4040
    %v4042 = vand.u32 %v247, 4294901760
    %4043 = vmatprep.mubr.f32.mxu0 %v4042
    %v4044 = vand.u32 %v243, 4294901760
    %4045 = vmatmul.mubr.f32.gmra.mxu0 %v4044
    %v4046 = vpop.f32.mrf.mxu0
    %v4047 = vadd.f32 %v3815, %v4046
    %v4048 = vpop.f32.mrf.mxu0
    %4049 = vdwg.mxu0
    %4050 = vmatprep.subr.mxu0 0.0
    %v4051 = vand.u32 %v187, 4294901760
    %v4052 = vsub.f32 %v187, %v4051
    %4053 = vmatpush1.msra.mxu0 %v4052
    %4054 = vmatprep.subr.mxu0 0.0
    %v4055 = vand.u32 %v186, 4294901760
    %v4056 = vsub.f32 %v186, %v4055
    %4057 = vmatpush1.msra.mxu0 %v4056
    %4058 = vmatprep.subr.mxu0 0.0
    %v4059 = vand.u32 %v185, 4294901760
    %v4060 = vsub.f32 %v185, %v4059
    %4061 = vmatpush1.msra.mxu0 %v4060
    %4062 = vmatprep.subr.mxu0 0.0
    %v4063 = vand.u32 %v184, 4294901760
    %v4064 = vsub.f32 %v184, %v4063
    %4065 = vmatpush1.msra.mxu0 %v4064
    %4066 = vmatprep.subr.mxu0 0.0
    %v4067 = vand.u32 %v183, 4294901760
    %v4068 = vsub.f32 %v183, %v4067
    %4069 = vmatpush1.msra.mxu0 %v4068
    %4070 = vmatprep.subr.mxu0 0.0
    %v4071 = vand.u32 %v182, 4294901760
    %v4072 = vsub.f32 %v182, %v4071
    %4073 = vmatpush1.msra.mxu0 %v4072
    %4074 = vmatprep.subr.mxu0 0.0
    %v4075 = vand.u32 %v181, 4294901760
    %v4076 = vsub.f32 %v181, %v4075
    %4077 = vmatpush1.msra.mxu0 %v4076
    %4078 = vmatprep.subr.mxu0 0.0
    %v4079 = vand.u32 %v180, 4294901760
    %v4080 = vsub.f32 %v180, %v4079
    %4081 = vmatpush1.msra.mxu0 %v4080
    %4082 = vmatprep.subr.mxu0 0.0
    %v4083 = vand.u32 %v179, 4294901760
    %v4084 = vsub.f32 %v179, %v4083
    %4085 = vmatpush1.msra.mxu0 %v4084
    %4086 = vmatprep.subr.mxu0 0.0
    %v4087 = vand.u32 %v178, 4294901760
    %v4088 = vsub.f32 %v178, %v4087
    %4089 = vmatpush1.msra.mxu0 %v4088
    %4090 = vmatprep.subr.mxu0 0.0
    %v4091 = vand.u32 %v177, 4294901760
    %v4092 = vsub.f32 %v177, %v4091
    %4093 = vmatpush1.msra.mxu0 %v4092
    %4094 = vmatprep.subr.mxu0 0.0
    %v4095 = vand.u32 %v176, 4294901760
    %v4096 = vsub.f32 %v176, %v4095
    %4097 = vmatpush1.msra.mxu0 %v4096
    %4098 = vmatprep.subr.mxu0 0.0
    %v4099 = vand.u32 %v175, 4294901760
    %v4100 = vsub.f32 %v175, %v4099
    %4101 = vmatpush1.msra.mxu0 %v4100
    %4102 = vmatprep.subr.mxu0 0.0
    %v4103 = vand.u32 %v174, 4294901760
    %v4104 = vsub.f32 %v174, %v4103
    %4105 = vmatpush1.msra.mxu0 %v4104
    %4106 = vmatprep.subr.mxu0 0.0
    %v4107 = vand.u32 %v173, 4294901760
    %v4108 = vsub.f32 %v173, %v4107
    %4109 = vmatpush1.msra.mxu0 %v4108
    %4110 = vmatprep.subr.mxu0 0.0
    %v4111 = vand.u32 %v172, 4294901760
    %v4112 = vsub.f32 %v172, %v4111
    %4113 = vmatpush1.msra.mxu0 %v4112
    %4114 = vmatprep.subr.mxu0 0.0
    %v4115 = vand.u32 %v203, 4294901760
    %v4116 = vsub.f32 %v203, %v4115
    %4117 = vmatpush2.msra.mxu0 %v4116
    %4118 = vmatprep.subr.mxu0 0.0
    %v4119 = vand.u32 %v202, 4294901760
    %v4120 = vsub.f32 %v202, %v4119
    %4121 = vmatpush2.msra.mxu0 %v4120
    %4122 = vmatprep.subr.mxu0 0.0
    %v4123 = vand.u32 %v201, 4294901760
    %v4124 = vsub.f32 %v201, %v4123
    %4125 = vmatpush2.msra.mxu0 %v4124
    %4126 = vmatprep.subr.mxu0 0.0
    %v4127 = vand.u32 %v200, 4294901760
    %v4128 = vsub.f32 %v200, %v4127
    %4129 = vmatpush2.msra.mxu0 %v4128
    %4130 = vmatprep.subr.mxu0 0.0
    %v4131 = vand.u32 %v199, 4294901760
    %v4132 = vsub.f32 %v199, %v4131
    %4133 = vmatpush2.msra.mxu0 %v4132
    %4134 = vmatprep.subr.mxu0 0.0
    %v4135 = vand.u32 %v198, 4294901760
    %v4136 = vsub.f32 %v198, %v4135
    %4137 = vmatpush2.msra.mxu0 %v4136
    %4138 = vmatprep.subr.mxu0 0.0
    %v4139 = vand.u32 %v197, 4294901760
    %v4140 = vsub.f32 %v197, %v4139
    %4141 = vmatpush2.msra.mxu0 %v4140
    %4142 = vmatprep.subr.mxu0 0.0
    %v4143 = vand.u32 %v196, 4294901760
    %v4144 = vsub.f32 %v196, %v4143
    %4145 = vmatpush2.msra.mxu0 %v4144
    %4146 = vmatprep.subr.mxu0 0.0
    %v4147 = vand.u32 %v195, 4294901760
    %v4148 = vsub.f32 %v195, %v4147
    %4149 = vmatpush2.msra.mxu0 %v4148
    %4150 = vmatprep.subr.mxu0 0.0
    %v4151 = vand.u32 %v194, 4294901760
    %v4152 = vsub.f32 %v194, %v4151
    %4153 = vmatpush2.msra.mxu0 %v4152
    %4154 = vmatprep.subr.mxu0 0.0
    %v4155 = vand.u32 %v193, 4294901760
    %v4156 = vsub.f32 %v193, %v4155
    %4157 = vmatpush2.msra.mxu0 %v4156
    %4158 = vmatprep.subr.mxu0 0.0
    %v4159 = vand.u32 %v192, 4294901760
    %v4160 = vsub.f32 %v192, %v4159
    %4161 = vmatpush2.msra.mxu0 %v4160
    %4162 = vmatprep.subr.mxu0 0.0
    %v4163 = vand.u32 %v191, 4294901760
    %v4164 = vsub.f32 %v191, %v4163
    %4165 = vmatpush2.msra.mxu0 %v4164
    %4166 = vmatprep.subr.mxu0 0.0
    %v4167 = vand.u32 %v190, 4294901760
    %v4168 = vsub.f32 %v190, %v4167
    %4169 = vmatpush2.msra.mxu0 %v4168
    %4170 = vmatprep.subr.mxu0 0.0
    %v4171 = vand.u32 %v189, 4294901760
    %v4172 = vsub.f32 %v189, %v4171
    %4173 = vmatpush2.msra.mxu0 %v4172
    %4174 = vmatprep.subr.mxu0 0.0
    %v4175 = vand.u32 %v188, 4294901760
    %v4176 = vsub.f32 %v188, %v4175
    %4177 = vmatpush2.msra.mxu0 %v4176
    %v4178 = vand.u32 %v247, 4294901760
    %v4179 = vsub.f32 %v247, %v4178
    %4180 = vmatprep.mubr.f32.mxu0 %v4179
    %v4181 = vand.u32 %v243, 4294901760
    %v4182 = vsub.f32 %v243, %v4181
    %4183 = vmatmul.mubr.f32.gmra.mxu0 %v4182
    %v4184 = vpop.f32.mrf.mxu0
    %v4185 = vadd.f32 %v4047, %v4184
    %v4186 = vpop.f32.mrf.mxu0
    %4187 = vdwg.mxu0
    %4188 = vmatprep.subr.mxu0 0.0
    %v4189 = vand.u32 %v187, 4294901760
    %4190 = vmatpush1.msra.mxu0 %v4189
    %4191 = vmatprep.subr.mxu0 0.0
    %v4192 = vand.u32 %v186, 4294901760
    %4193 = vmatpush1.msra.mxu0 %v4192
    %4194 = vmatprep.subr.mxu0 0.0
    %v4195 = vand.u32 %v185, 4294901760
    %4196 = vmatpush1.msra.mxu0 %v4195
    %4197 = vmatprep.subr.mxu0 0.0
    %v4198 = vand.u32 %v184, 4294901760
    %4199 = vmatpush1.msra.mxu0 %v4198
    %4200 = vmatprep.subr.mxu0 0.0
    %v4201 = vand.u32 %v183, 4294901760
    %4202 = vmatpush1.msra.mxu0 %v4201
    %4203 = vmatprep.subr.mxu0 0.0
    %v4204 = vand.u32 %v182, 4294901760
    %4205 = vmatpush1.msra.mxu0 %v4204
    %4206 = vmatprep.subr.mxu0 0.0
    %v4207 = vand.u32 %v181, 4294901760
    %4208 = vmatpush1.msra.mxu0 %v4207
    %4209 = vmatprep.subr.mxu0 0.0
    %v4210 = vand.u32 %v180, 4294901760
    %4211 = vmatpush1.msra.mxu0 %v4210
    %4212 = vmatprep.subr.mxu0 0.0
    %v4213 = vand.u32 %v179, 4294901760
    %4214 = vmatpush1.msra.mxu0 %v4213
    %4215 = vmatprep.subr.mxu0 0.0
    %v4216 = vand.u32 %v178, 4294901760
    %4217 = vmatpush1.msra.mxu0 %v4216
    %4218 = vmatprep.subr.mxu0 0.0
    %v4219 = vand.u32 %v177, 4294901760
    %4220 = vmatpush1.msra.mxu0 %v4219
    %4221 = vmatprep.subr.mxu0 0.0
    %v4222 = vand.u32 %v176, 4294901760
    %4223 = vmatpush1.msra.mxu0 %v4222
    %4224 = vmatprep.subr.mxu0 0.0
    %v4225 = vand.u32 %v175, 4294901760
    %4226 = vmatpush1.msra.mxu0 %v4225
    %4227 = vmatprep.subr.mxu0 0.0
    %v4228 = vand.u32 %v174, 4294901760
    %4229 = vmatpush1.msra.mxu0 %v4228
    %4230 = vmatprep.subr.mxu0 0.0
    %v4231 = vand.u32 %v173, 4294901760
    %4232 = vmatpush1.msra.mxu0 %v4231
    %4233 = vmatprep.subr.mxu0 0.0
    %v4234 = vand.u32 %v172, 4294901760
    %4235 = vmatpush1.msra.mxu0 %v4234
    %4236 = vmatprep.subr.mxu0 0.0
    %v4237 = vand.u32 %v203, 4294901760
    %4238 = vmatpush2.msra.mxu0 %v4237
    %4239 = vmatprep.subr.mxu0 0.0
    %v4240 = vand.u32 %v202, 4294901760
    %4241 = vmatpush2.msra.mxu0 %v4240
    %4242 = vmatprep.subr.mxu0 0.0
    %v4243 = vand.u32 %v201, 4294901760
    %4244 = vmatpush2.msra.mxu0 %v4243
    %4245 = vmatprep.subr.mxu0 0.0
    %v4246 = vand.u32 %v200, 4294901760
    %4247 = vmatpush2.msra.mxu0 %v4246
    %4248 = vmatprep.subr.mxu0 0.0
    %v4249 = vand.u32 %v199, 4294901760
    %4250 = vmatpush2.msra.mxu0 %v4249
    %4251 = vmatprep.subr.mxu0 0.0
    %v4252 = vand.u32 %v198, 4294901760
    %4253 = vmatpush2.msra.mxu0 %v4252
    %4254 = vmatprep.subr.mxu0 0.0
    %v4255 = vand.u32 %v197, 4294901760
    %4256 = vmatpush2.msra.mxu0 %v4255
    %4257 = vmatprep.subr.mxu0 0.0
    %v4258 = vand.u32 %v196, 4294901760
    %4259 = vmatpush2.msra.mxu0 %v4258
    %4260 = vmatprep.subr.mxu0 0.0
    %v4261 = vand.u32 %v195, 4294901760
    %4262 = vmatpush2.msra.mxu0 %v4261
    %4263 = vmatprep.subr.mxu0 0.0
    %v4264 = vand.u32 %v194, 4294901760
    %4265 = vmatpush2.msra.mxu0 %v4264
    %4266 = vmatprep.subr.mxu0 0.0
    %v4267 = vand.u32 %v193, 4294901760
    %4268 = vmatpush2.msra.mxu0 %v4267
    %4269 = vmatprep.subr.mxu0 0.0
    %v4270 = vand.u32 %v192, 4294901760
    %4271 = vmatpush2.msra.mxu0 %v4270
    %4272 = vmatprep.subr.mxu0 0.0
    %v4273 = vand.u32 %v191, 4294901760
    %4274 = vmatpush2.msra.mxu0 %v4273
    %4275 = vmatprep.subr.mxu0 0.0
    %v4276 = vand.u32 %v190, 4294901760
    %4277 = vmatpush2.msra.mxu0 %v4276
    %4278 = vmatprep.subr.mxu0 0.0
    %v4279 = vand.u32 %v189, 4294901760
    %4280 = vmatpush2.msra.mxu0 %v4279
    %4281 = vmatprep.subr.mxu0 0.0
    %v4282 = vand.u32 %v188, 4294901760
    %4283 = vmatpush2.msra.mxu0 %v4282
    %v4284 = vand.u32 %v247, 4294901760
    %v4285 = vsub.f32 %v247, %v4284
    %v4286 = vand.u32 %v4285, 4294901760
    %4287 = vmatprep.mubr.f32.mxu0 %v4286
    %v4288 = vand.u32 %v243, 4294901760
    %v4289 = vsub.f32 %v243, %v4288
    %v4290 = vand.u32 %v4289, 4294901760
    %4291 = vmatmul.mubr.f32.gmra.mxu0 %v4290
    %v4292 = vpop.f32.mrf.mxu0
    %v4293 = vadd.f32 %v4185, %v4292
    %v4294 = vpop.f32.mrf.mxu0
    %4295 = vdwg.mxu0
    %4296 = vmatprep.subr.mxu0 0.0
    %v4297 = vand.u32 %v187, 4294901760
    %v4298 = vsub.f32 %v187, %v4297
    %v4299 = vand.u32 %v4298, 4294901760
    %4300 = vmatpush1.msra.mxu0 %v4299
    %4301 = vmatprep.subr.mxu0 0.0
    %v4302 = vand.u32 %v186, 4294901760
    %v4303 = vsub.f32 %v186, %v4302
    %v4304 = vand.u32 %v4303, 4294901760
    %4305 = vmatpush1.msra.mxu0 %v4304
    %4306 = vmatprep.subr.mxu0 0.0
    %v4307 = vand.u32 %v185, 4294901760
    %v4308 = vsub.f32 %v185, %v4307
    %v4309 = vand.u32 %v4308, 4294901760
    %4310 = vmatpush1.msra.mxu0 %v4309
    %4311 = vmatprep.subr.mxu0 0.0
    %v4312 = vand.u32 %v184, 4294901760
    %v4313 = vsub.f32 %v184, %v4312
    %v4314 = vand.u32 %v4313, 4294901760
    %4315 = vmatpush1.msra.mxu0 %v4314
    %4316 = vmatprep.subr.mxu0 0.0
    %v4317 = vand.u32 %v183, 4294901760
    %v4318 = vsub.f32 %v183, %v4317
    %v4319 = vand.u32 %v4318, 4294901760
    %4320 = vmatpush1.msra.mxu0 %v4319
    %4321 = vmatprep.subr.mxu0 0.0
    %v4322 = vand.u32 %v182, 4294901760
    %v4323 = vsub.f32 %v182, %v4322
    %v4324 = vand.u32 %v4323, 4294901760
    %4325 = vmatpush1.msra.mxu0 %v4324
    %4326 = vmatprep.subr.mxu0 0.0
    %v4327 = vand.u32 %v181, 4294901760
    %v4328 = vsub.f32 %v181, %v4327
    %v4329 = vand.u32 %v4328, 4294901760
    %4330 = vmatpush1.msra.mxu0 %v4329
    %4331 = vmatprep.subr.mxu0 0.0
    %v4332 = vand.u32 %v180, 4294901760
    %v4333 = vsub.f32 %v180, %v4332
    %v4334 = vand.u32 %v4333, 4294901760
    %4335 = vmatpush1.msra.mxu0 %v4334
    %4336 = vmatprep.subr.mxu0 0.0
    %v4337 = vand.u32 %v179, 4294901760
    %v4338 = vsub.f32 %v179, %v4337
    %v4339 = vand.u32 %v4338, 4294901760
    %4340 = vmatpush1.msra.mxu0 %v4339
    %4341 = vmatprep.subr.mxu0 0.0
    %v4342 = vand.u32 %v178, 4294901760
    %v4343 = vsub.f32 %v178, %v4342
    %v4344 = vand.u32 %v4343, 4294901760
    %4345 = vmatpush1.msra.mxu0 %v4344
    %4346 = vmatprep.subr.mxu0 0.0
    %v4347 = vand.u32 %v177, 4294901760
    %v4348 = vsub.f32 %v177, %v4347
    %v4349 = vand.u32 %v4348, 4294901760
    %4350 = vmatpush1.msra.mxu0 %v4349
    %4351 = vmatprep.subr.mxu0 0.0
    %v4352 = vand.u32 %v176, 4294901760
    %v4353 = vsub.f32 %v176, %v4352
    %v4354 = vand.u32 %v4353, 4294901760
    %4355 = vmatpush1.msra.mxu0 %v4354
    %4356 = vmatprep.subr.mxu0 0.0
    %v4357 = vand.u32 %v175, 4294901760
    %v4358 = vsub.f32 %v175, %v4357
    %v4359 = vand.u32 %v4358, 4294901760
    %4360 = vmatpush1.msra.mxu0 %v4359
    %4361 = vmatprep.subr.mxu0 0.0
    %v4362 = vand.u32 %v174, 4294901760
    %v4363 = vsub.f32 %v174, %v4362
    %v4364 = vand.u32 %v4363, 4294901760
    %4365 = vmatpush1.msra.mxu0 %v4364
    %4366 = vmatprep.subr.mxu0 0.0
    %v4367 = vand.u32 %v173, 4294901760
    %v4368 = vsub.f32 %v173, %v4367
    %v4369 = vand.u32 %v4368, 4294901760
    %4370 = vmatpush1.msra.mxu0 %v4369
    %4371 = vmatprep.subr.mxu0 0.0
    %v4372 = vand.u32 %v172, 4294901760
    %v4373 = vsub.f32 %v172, %v4372
    %v4374 = vand.u32 %v4373, 4294901760
    %4375 = vmatpush1.msra.mxu0 %v4374
    %4376 = vmatprep.subr.mxu0 0.0
    %v4377 = vand.u32 %v203, 4294901760
    %v4378 = vsub.f32 %v203, %v4377
    %v4379 = vand.u32 %v4378, 4294901760
    %4380 = vmatpush2.msra.mxu0 %v4379
    %4381 = vmatprep.subr.mxu0 0.0
    %v4382 = vand.u32 %v202, 4294901760
    %v4383 = vsub.f32 %v202, %v4382
    %v4384 = vand.u32 %v4383, 4294901760
    %4385 = vmatpush2.msra.mxu0 %v4384
    %4386 = vmatprep.subr.mxu0 0.0
    %v4387 = vand.u32 %v201, 4294901760
    %v4388 = vsub.f32 %v201, %v4387
    %v4389 = vand.u32 %v4388, 4294901760
    %4390 = vmatpush2.msra.mxu0 %v4389
    %4391 = vmatprep.subr.mxu0 0.0
    %v4392 = vand.u32 %v200, 4294901760
    %v4393 = vsub.f32 %v200, %v4392
    %v4394 = vand.u32 %v4393, 4294901760
    %4395 = vmatpush2.msra.mxu0 %v4394
    %4396 = vmatprep.subr.mxu0 0.0
    %v4397 = vand.u32 %v199, 4294901760
    %v4398 = vsub.f32 %v199, %v4397
    %v4399 = vand.u32 %v4398, 4294901760
    %4400 = vmatpush2.msra.mxu0 %v4399
    %4401 = vmatprep.subr.mxu0 0.0
    %v4402 = vand.u32 %v198, 4294901760
    %v4403 = vsub.f32 %v198, %v4402
    %v4404 = vand.u32 %v4403, 4294901760
    %4405 = vmatpush2.msra.mxu0 %v4404
    %4406 = vmatprep.subr.mxu0 0.0
    %v4407 = vand.u32 %v197, 4294901760
    %v4408 = vsub.f32 %v197, %v4407
    %v4409 = vand.u32 %v4408, 4294901760
    %4410 = vmatpush2.msra.mxu0 %v4409
    %4411 = vmatprep.subr.mxu0 0.0
    %v4412 = vand.u32 %v196, 4294901760
    %v4413 = vsub.f32 %v196, %v4412
    %v4414 = vand.u32 %v4413, 4294901760
    %4415 = vmatpush2.msra.mxu0 %v4414
    %4416 = vmatprep.subr.mxu0 0.0
    %v4417 = vand.u32 %v195, 4294901760
    %v4418 = vsub.f32 %v195, %v4417
    %v4419 = vand.u32 %v4418, 4294901760
    %4420 = vmatpush2.msra.mxu0 %v4419
    %4421 = vmatprep.subr.mxu0 0.0
    %v4422 = vand.u32 %v194, 4294901760
    %v4423 = vsub.f32 %v194, %v4422
    %v4424 = vand.u32 %v4423, 4294901760
    %4425 = vmatpush2.msra.mxu0 %v4424
    %4426 = vmatprep.subr.mxu0 0.0
    %v4427 = vand.u32 %v193, 4294901760
    %v4428 = vsub.f32 %v193, %v4427
    %v4429 = vand.u32 %v4428, 4294901760
    %4430 = vmatpush2.msra.mxu0 %v4429
    %4431 = vmatprep.subr.mxu0 0.0
    %v4432 = vand.u32 %v192, 4294901760
    %v4433 = vsub.f32 %v192, %v4432
    %v4434 = vand.u32 %v4433, 4294901760
    %4435 = vmatpush2.msra.mxu0 %v4434
    %4436 = vmatprep.subr.mxu0 0.0
    %v4437 = vand.u32 %v191, 4294901760
    %v4438 = vsub.f32 %v191, %v4437
    %v4439 = vand.u32 %v4438, 4294901760
    %4440 = vmatpush2.msra.mxu0 %v4439
    %4441 = vmatprep.subr.mxu0 0.0
    %v4442 = vand.u32 %v190, 4294901760
    %v4443 = vsub.f32 %v190, %v4442
    %v4444 = vand.u32 %v4443, 4294901760
    %4445 = vmatpush2.msra.mxu0 %v4444
    %4446 = vmatprep.subr.mxu0 0.0
    %v4447 = vand.u32 %v189, 4294901760
    %v4448 = vsub.f32 %v189, %v4447
    %v4449 = vand.u32 %v4448, 4294901760
    %4450 = vmatpush2.msra.mxu0 %v4449
    %4451 = vmatprep.subr.mxu0 0.0
    %v4452 = vand.u32 %v188, 4294901760
    %v4453 = vsub.f32 %v188, %v4452
    %v4454 = vand.u32 %v4453, 4294901760
    %4455 = vmatpush2.msra.mxu0 %v4454
    %v4456 = vand.u32 %v247, 4294901760
    %4457 = vmatprep.mubr.f32.mxu0 %v4456
    %v4458 = vand.u32 %v243, 4294901760
    %4459 = vmatmul.mubr.f32.gmra.mxu0 %v4458
    %v4460 = vpop.f32.mrf.mxu0
    %v4461 = vadd.f32 %v4293, %v4460
    %v4462 = vpop.f32.mrf.mxu0
    %4463 = vdwg.mxu0
    %4464 = vmatprep.subr.mxu0 0.0
    %v4465 = vand.u32 %v187, 4294901760
    %4466 = vmatpush1.msra.mxu0 %v4465
    %4467 = vmatprep.subr.mxu0 0.0
    %v4468 = vand.u32 %v186, 4294901760
    %4469 = vmatpush1.msra.mxu0 %v4468
    %4470 = vmatprep.subr.mxu0 0.0
    %v4471 = vand.u32 %v185, 4294901760
    %4472 = vmatpush1.msra.mxu0 %v4471
    %4473 = vmatprep.subr.mxu0 0.0
    %v4474 = vand.u32 %v184, 4294901760
    %4475 = vmatpush1.msra.mxu0 %v4474
    %4476 = vmatprep.subr.mxu0 0.0
    %v4477 = vand.u32 %v183, 4294901760
    %4478 = vmatpush1.msra.mxu0 %v4477
    %4479 = vmatprep.subr.mxu0 0.0
    %v4480 = vand.u32 %v182, 4294901760
    %4481 = vmatpush1.msra.mxu0 %v4480
    %4482 = vmatprep.subr.mxu0 0.0
    %v4483 = vand.u32 %v181, 4294901760
    %4484 = vmatpush1.msra.mxu0 %v4483
    %4485 = vmatprep.subr.mxu0 0.0
    %v4486 = vand.u32 %v180, 4294901760
    %4487 = vmatpush1.msra.mxu0 %v4486
    %4488 = vmatprep.subr.mxu0 0.0
    %v4489 = vand.u32 %v179, 4294901760
    %4490 = vmatpush1.msra.mxu0 %v4489
    %4491 = vmatprep.subr.mxu0 0.0
    %v4492 = vand.u32 %v178, 4294901760
    %4493 = vmatpush1.msra.mxu0 %v4492
    %4494 = vmatprep.subr.mxu0 0.0
    %v4495 = vand.u32 %v177, 4294901760
    %4496 = vmatpush1.msra.mxu0 %v4495
    %4497 = vmatprep.subr.mxu0 0.0
    %v4498 = vand.u32 %v176, 4294901760
    %4499 = vmatpush1.msra.mxu0 %v4498
    %4500 = vmatprep.subr.mxu0 0.0
    %v4501 = vand.u32 %v175, 4294901760
    %4502 = vmatpush1.msra.mxu0 %v4501
    %4503 = vmatprep.subr.mxu0 0.0
    %v4504 = vand.u32 %v174, 4294901760
    %4505 = vmatpush1.msra.mxu0 %v4504
    %4506 = vmatprep.subr.mxu0 0.0
    %v4507 = vand.u32 %v173, 4294901760
    %4508 = vmatpush1.msra.mxu0 %v4507
    %4509 = vmatprep.subr.mxu0 0.0
    %v4510 = vand.u32 %v172, 4294901760
    %4511 = vmatpush1.msra.mxu0 %v4510
    %4512 = vmatprep.subr.mxu0 0.0
    %v4513 = vand.u32 %v203, 4294901760
    %4514 = vmatpush2.msra.mxu0 %v4513
    %4515 = vmatprep.subr.mxu0 0.0
    %v4516 = vand.u32 %v202, 4294901760
    %4517 = vmatpush2.msra.mxu0 %v4516
    %4518 = vmatprep.subr.mxu0 0.0
    %v4519 = vand.u32 %v201, 4294901760
    %4520 = vmatpush2.msra.mxu0 %v4519
    %4521 = vmatprep.subr.mxu0 0.0
    %v4522 = vand.u32 %v200, 4294901760
    %4523 = vmatpush2.msra.mxu0 %v4522
    %4524 = vmatprep.subr.mxu0 0.0
    %v4525 = vand.u32 %v199, 4294901760
    %4526 = vmatpush2.msra.mxu0 %v4525
    %4527 = vmatprep.subr.mxu0 0.0
    %v4528 = vand.u32 %v198, 4294901760
    %4529 = vmatpush2.msra.mxu0 %v4528
    %4530 = vmatprep.subr.mxu0 0.0
    %v4531 = vand.u32 %v197, 4294901760
    %4532 = vmatpush2.msra.mxu0 %v4531
    %4533 = vmatprep.subr.mxu0 0.0
    %v4534 = vand.u32 %v196, 4294901760
    %4535 = vmatpush2.msra.mxu0 %v4534
    %4536 = vmatprep.subr.mxu0 0.0
    %v4537 = vand.u32 %v195, 4294901760
    %4538 = vmatpush2.msra.mxu0 %v4537
    %4539 = vmatprep.subr.mxu0 0.0
    %v4540 = vand.u32 %v194, 4294901760
    %4541 = vmatpush2.msra.mxu0 %v4540
    %4542 = vmatprep.subr.mxu0 0.0
    %v4543 = vand.u32 %v193, 4294901760
    %4544 = vmatpush2.msra.mxu0 %v4543
    %4545 = vmatprep.subr.mxu0 0.0
    %v4546 = vand.u32 %v192, 4294901760
    %4547 = vmatpush2.msra.mxu0 %v4546
    %4548 = vmatprep.subr.mxu0 0.0
    %v4549 = vand.u32 %v191, 4294901760
    %4550 = vmatpush2.msra.mxu0 %v4549
    %4551 = vmatprep.subr.mxu0 0.0
    %v4552 = vand.u32 %v190, 4294901760
    %4553 = vmatpush2.msra.mxu0 %v4552
    %4554 = vmatprep.subr.mxu0 0.0
    %v4555 = vand.u32 %v189, 4294901760
    %4556 = vmatpush2.msra.mxu0 %v4555
    %4557 = vmatprep.subr.mxu0 0.0
    %v4558 = vand.u32 %v188, 4294901760
    %4559 = vmatpush2.msra.mxu0 %v4558
    %v4560 = vand.u32 %v247, 4294901760
    %4561 = vmatprep.mubr.f32.mxu0 %v4560
    %v4562 = vand.u32 %v243, 4294901760
    %4563 = vmatmul.mubr.f32.gmra.mxu0 %v4562
    %v4564 = vpop.f32.mrf.mxu0
    %v4565 = vadd.f32 %v4461, %v4564
    %v4566 = vpop.f32.mrf.mxu0
    %4567 = vdwg.mxu0
    %4568 = vst [vmem:[#allocation8] sm:$0x1] %v4565
    // Predicated region
    $region22: #{tpu_custom_call.1} parent=1 // pred_check
      _
    $region23: #{tpu_custom_call.1} parent=1 // pred_check_branch
      %4570 = sbr.rel (0) target = $region25
    $region24: #{tpu_custom_call.1} parent=1 // pred_region
      %s4572 = ssub.s32 16, 16
      %4573 = vsyncadd [#allocation5], %s4572
      %s4575 = sshll.u32 [#allocation8], 4
      %s4576 = int_to_ptr.vmem [resolvable:$true] %s4575
      %4578 = dma.vmem_to_hbm [thread:$0]  %s4576, 16, %s3, [#allocation5]
    $region25: #{tpu_custom_call.1} parent=1 // pred_fallthru
      _
    // Predicated region
    $region26: #{tpu_custom_call.1} parent=1 // pred_check
      _
    $region27: #{tpu_custom_call.1} parent=1 // pred_check_branch
      %4580 = sbr.rel (0) target = $region29
    $region28: #{tpu_custom_call.1} parent=1 // pred_region
      %4581 = dma.done [#allocation5], 16
    $region29: #{tpu_custom_call.1} parent=1 // pred_fallthru
      _
    %4582 = vsyncpa [#allocation4], 1
    %4583 = vsyncpa [#allocation7], 1
    %4584 = vsyncpa [#allocation5], 1

</llo_original>
